<compile_context>
chip_gen: v5e
topology: v5e:2x2
jax: 0.10.0
libtpu: 0.0.40
codegen_flags: <defaults>
</compile_context>

<pallas_src>
import functools

import jax
import jax.numpy as jnp
from jax.experimental import pallas as pl
from jax.experimental.pallas import tpu as pltpu

N_LAYERS = 3
WIDTH = 128
IN_DIM = 6      # cat([trained(3), posterior(3)])
OUT_DIM = 3


def _round_up(x, m):
    return ((x + m - 1) // m) * m


def _mixer_kernel(x_ref,
                  w0_ref, b0_ref, w1_ref, b1_ref, w2_ref, b2_ref,
                  wo_t_ref, bo_ref,
                  out_ref):
    # x: bf16 [6, tile_n]  (features on sublanes, rays on lanes)
    x = x_ref[...]

    # layer 0 (MXU): [128,6] @ [6,tn] -> f32 [128,tn]; bias+relu in f32,
    # single cast to bf16 at layer end (v5e-safe epilogue).
    h = jnp.dot(w0_ref[...], x, preferred_element_type=jnp.float32)
    h = jnp.maximum(h + b0_ref[...], 0.0).astype(jnp.bfloat16)

    # layer 1 (MXU): [128,128] @ [128,tn]
    h = jnp.dot(w1_ref[...], h, preferred_element_type=jnp.float32)
    h = jnp.maximum(h + b1_ref[...], 0.0).astype(jnp.bfloat16)

    # layer 2 (MXU): [128,128] @ [128,tn] -- keep result in f32: it feeds the
    # VPU/XLU out_linear below, so no bf16 cast is needed.
    h = jnp.dot(w2_ref[...], h, preferred_element_type=jnp.float32)
    h = jnp.maximum(h + b2_ref[...], 0.0)                     # f32 [128, tn]

    # out_linear (M=3) off the MXU: per output channel, lane-broadcast the
    # [128,1] weight column (VPU mul) and reduce across sublanes (XLU).
    wo_t = wo_t_ref[...]                                      # f32 [128, 3]
    rows = [
        jnp.sum(wo_t[:, j:j + 1] * h, axis=0, keepdims=True)  # [1, tn]
        for j in range(OUT_DIM)
    ]
    out = jnp.concatenate(rows, axis=0) + bo_ref[...]         # [3, tn]

    out_ref[...] = out.astype(out_ref.dtype)


@functools.partial(jax.jit, static_argnames=("tile_n",))
def mixer_forward(trained, posterior, params, *, tile_n=2048):
    """trained: [N, 3], posterior: [N, 3] -> [N, 3].

    Weights are torch-native [out, in]; biases are [out, 1].
    """
    N = trained.shape[0]
    (w0, b0), (w1, b1), (w2, b2), (wo, bo) = params

    # Clamp tile for small N (stay a multiple of 256 for MXU lane chunks) so
    # padded/wasted compute doesn't dominate when N < tile_n.
    tile = max(256, min(int(tile_n), _round_up(N, 256)))
    n_pad = (-N) % tile
    n_padded = N + n_pad

    # Concat / pad / transpose once in XLA, in bf16 (halves HBM traffic),
    # rays end up on the 128-wide lane axis.
    x = jnp.concatenate([trained.astype(jnp.bfloat16),
                         posterior.astype(jnp.bfloat16)], axis=-1)   # [N, 6]
    if n_pad:
        x = jnp.pad(x, ((0, n_pad), (0, 0)))
    xt = x.T                                                         # [6, Np]

    bf16 = lambda w: w.astype(jnp.bfloat16)
    wo_t = wo.T.astype(jnp.float32)                                  # [128, 3]
    full = lambda arr: pl.BlockSpec(arr.shape, lambda i: (0, 0))

    flops = 2 * n_padded * (IN_DIM * WIDTH + WIDTH * WIDTH * 2 + WIDTH * OUT_DIM)
    bytes_accessed = (
        n_padded * (IN_DIM * 2 + OUT_DIM * 4)           # bf16 in, f32 out
        + (IN_DIM * WIDTH + 2 * WIDTH * WIDTH) * 2      # bf16 weights
        + (WIDTH * OUT_DIM + 3 * WIDTH + OUT_DIM) * 4)  # f32 wo_t + biases

    grid = (n_padded // tile,)
    out_t = pl.pallas_call(
        _mixer_kernel,
        out_shape=jax.ShapeDtypeStruct((OUT_DIM, n_padded), jnp.float32),
        grid_spec=pltpu.PrefetchScalarGridSpec(
            num_scalar_prefetch=0,
            grid=grid,
            in_specs=[
                pl.BlockSpec((IN_DIM, tile), lambda i: (0, i)),   # x
                full(w0), full(b0),                               # layer 0
                full(w1), full(b1),                               # layer 1
                full(w2), full(b2),                               # layer 2
                full(wo_t), full(bo),                             # out_linear
            ],
            out_specs=pl.BlockSpec((OUT_DIM, tile), lambda i: (0, i)),
        ),
        compiler_params=pltpu.CompilerParams(
            dimension_semantics=("parallel",),
            vmem_limit_bytes=32 * 1024 * 1024),
        cost_estimate=pl.CostEstimate(flops=flops,
                                      transcendentals=0,
                                      bytes_accessed=bytes_accessed),
    )(xt, bf16(w0), b0, bf16(w1), b1, bf16(w2), b2, wo_t, bo)

    return out_t.T[:N]                                               # [N, 3]


def init_params(key):
    """Deterministic synthetic params matching nn.Linear ([out, in] weights)."""
    dims = [(IN_DIM, WIDTH), (WIDTH, WIDTH), (WIDTH, WIDTH), (WIDTH, OUT_DIM)]
    params = []
    for i, (din, dout) in enumerate(dims):
        kw, kb = jax.random.split(jax.random.fold_in(key, i))
        scale = 1.0 / jnp.sqrt(din)
        w = jax.random.uniform(kw, (dout, din), jnp.float32, -scale, scale)
        b = jax.random.uniform(kb, (dout, 1), jnp.float32, -scale, scale)
        params.append((w, b))
    return params


def mixer_ref(trained, posterior, params):
    """Pure-JAX f32 reference (matches the PyTorch module semantics)."""
    h = jnp.concatenate([trained, posterior], axis=-1)
    for w, b in params[:-1]:
        h = jnp.maximum(h @ w.T + b[:, 0], 0.0)
    wo, bo = params[-1]
    return h @ wo.T + bo[:, 0]


if __name__ == "__main__":
    key = jax.random.PRNGKey(0)
    k1, k2, kp = jax.random.split(key, 3)

    N = 777  # deliberately not a multiple of the tile to exercise the pad path
    trained = jax.random.normal(k1, (N, 3), jnp.float32)
    posterior = jax.random.normal(k2, (N, 3), jnp.float32)
    params = init_params(kp)
    ref = mixer_ref(trained, posterior, params)

    # Default (large, clamped) tile -> single-step grid.
    out = jax.block_until_ready(mixer_forward(trained, posterior, params))
    assert out.shape == (N, OUT_DIM)
    # bf16 inputs + bf16 MXU matmuls (f32 accumulation) -> relaxed tolerance.
    assert jnp.allclose(out, ref, atol=5e-2, rtol=5e-2), "mismatch (default tile)"

    # Small tile -> multi-step grid, exercises the pipelined path.
    out_small = jax.block_until_ready(
        mixer_forward(trained, posterior, params, tile_n=256))
    assert jnp.allclose(out_small, ref, atol=5e-2, rtol=5e-2), "mismatch (tile 256)"

    print("KERNEL_OK")
</pallas_src>

<mosaic_0001>
module attributes {stable_mosaic.version = 11 : i64} {
  func.func @_mixer_kernel(%arg0: i32, %arg1: memref<6x1024xbf16, #tpu.memory_space<vmem>>, %arg2: memref<128x6xbf16, #tpu.memory_space<vmem>>, %arg3: memref<128x1xf32, #tpu.memory_space<vmem>>, %arg4: memref<128x128xbf16, #tpu.memory_space<vmem>>, %arg5: memref<128x1xf32, #tpu.memory_space<vmem>>, %arg6: memref<128x128xbf16, #tpu.memory_space<vmem>>, %arg7: memref<128x1xf32, #tpu.memory_space<vmem>>, %arg8: memref<128x3xf32, #tpu.memory_space<vmem>>, %arg9: memref<3x1xf32, #tpu.memory_space<vmem>>, %arg10: memref<3x1024xf32, #tpu.memory_space<vmem>>) attributes {dimension_semantics = [#tpu.dimension_semantics<parallel>], iteration_bounds = array<i64: 1>, scalar_prefetch = 0 : i64, scratch_operands = 0 : i64, tpu.core_type = #tpu.core_type<tc>, window_params = [{transform_indices = @transform_0, window_bounds = array<i64: 6, 1024>}, {pipeline_mode = #tpu.pipeline_mode<synchronous>, transform_indices = @transform_1, window_bounds = array<i64: 128, 6>}, {pipeline_mode = #tpu.pipeline_mode<synchronous>, transform_indices = @transform_2, window_bounds = array<i64: 128, 1>}, {pipeline_mode = #tpu.pipeline_mode<synchronous>, transform_indices = @transform_3, window_bounds = array<i64: 128, 128>}, {pipeline_mode = #tpu.pipeline_mode<synchronous>, transform_indices = @transform_4, window_bounds = array<i64: 128, 1>}, {pipeline_mode = #tpu.pipeline_mode<synchronous>, transform_indices = @transform_5, window_bounds = array<i64: 128, 128>}, {pipeline_mode = #tpu.pipeline_mode<synchronous>, transform_indices = @transform_6, window_bounds = array<i64: 128, 1>}, {pipeline_mode = #tpu.pipeline_mode<synchronous>, transform_indices = @transform_7, window_bounds = array<i64: 128, 3>}, {pipeline_mode = #tpu.pipeline_mode<synchronous>, transform_indices = @transform_8, window_bounds = array<i64: 3, 1>}, {transform_indices = @transform_9, window_bounds = array<i64: 3, 1024>}]} {
    %c0 = arith.constant 0 : index
    %c0_0 = arith.constant 0 : index
    %0 = vector.load %arg1[%c0, %c0_0] : memref<6x1024xbf16, #tpu.memory_space<vmem>>, vector<6x1024xbf16>
    %c0_1 = arith.constant 0 : index
    %c0_2 = arith.constant 0 : index
    %1 = vector.load %arg2[%c0_1, %c0_2] : memref<128x6xbf16, #tpu.memory_space<vmem>>, vector<128x6xbf16>
    %cst = arith.constant dense<0.000000e+00> : vector<128x1024xf32>
    %2 = tpu.matmul %1, %0, %cst {dimension_numbers = #tpu.dot_dimension_numbers<[1], [0], [0], [1], [0, 0, 1, 1], [], []>} : vector<128x6xbf16>, vector<6x1024xbf16>, vector<128x1024xf32> -> vector<128x1024xf32>
    %c0_3 = arith.constant 0 : index
    %c0_4 = arith.constant 0 : index
    %3 = vector.load %arg3[%c0_3, %c0_4] : memref<128x1xf32, #tpu.memory_space<vmem>>, vector<128x1xf32>
    %4 = vector.broadcast %3 : vector<128x1xf32> to vector<128x1024xf32>
    %5 = arith.addf %2, %4 : vector<128x1024xf32>
    %cst_5 = arith.constant 0.000000e+00 : f32
    %6 = vector.broadcast %cst_5 : f32 to vector<128x1024xf32>
    %7 = arith.maximumf %5, %6 : vector<128x1024xf32>
    %8 = arith.truncf %7 : vector<128x1024xf32> to vector<128x1024xbf16>
    %c0_6 = arith.constant 0 : index
    %c0_7 = arith.constant 0 : index
    %9 = vector.load %arg4[%c0_6, %c0_7] : memref<128x128xbf16, #tpu.memory_space<vmem>>, vector<128x128xbf16>
    %cst_8 = arith.constant dense<0.000000e+00> : vector<128x1024xf32>
    %10 = tpu.matmul %9, %8, %cst_8 {dimension_numbers = #tpu.dot_dimension_numbers<[1], [0], [0], [1], [0, 0, 1, 1], [], []>} : vector<128x128xbf16>, vector<128x1024xbf16>, vector<128x1024xf32> -> vector<128x1024xf32>
    %c0_9 = arith.constant 0 : index
    %c0_10 = arith.constant 0 : index
    %11 = vector.load %arg5[%c0_9, %c0_10] : memref<128x1xf32, #tpu.memory_space<vmem>>, vector<128x1xf32>
    %12 = vector.broadcast %11 : vector<128x1xf32> to vector<128x1024xf32>
    %13 = arith.addf %10, %12 : vector<128x1024xf32>
    %cst_11 = arith.constant 0.000000e+00 : f32
    %14 = vector.broadcast %cst_11 : f32 to vector<128x1024xf32>
    %15 = arith.maximumf %13, %14 : vector<128x1024xf32>
    %16 = arith.truncf %15 : vector<128x1024xf32> to vector<128x1024xbf16>
    %c0_12 = arith.constant 0 : index
    %c0_13 = arith.constant 0 : index
    %17 = vector.load %arg6[%c0_12, %c0_13] : memref<128x128xbf16, #tpu.memory_space<vmem>>, vector<128x128xbf16>
    %cst_14 = arith.constant dense<0.000000e+00> : vector<128x1024xf32>
    %18 = tpu.matmul %17, %16, %cst_14 {dimension_numbers = #tpu.dot_dimension_numbers<[1], [0], [0], [1], [0, 0, 1, 1], [], []>} : vector<128x128xbf16>, vector<128x1024xbf16>, vector<128x1024xf32> -> vector<128x1024xf32>
    %c0_15 = arith.constant 0 : index
    %c0_16 = arith.constant 0 : index
    %19 = vector.load %arg7[%c0_15, %c0_16] : memref<128x1xf32, #tpu.memory_space<vmem>>, vector<128x1xf32>
    %20 = vector.broadcast %19 : vector<128x1xf32> to vector<128x1024xf32>
    %21 = arith.addf %18, %20 : vector<128x1024xf32>
    %cst_17 = arith.constant 0.000000e+00 : f32
    %22 = vector.broadcast %cst_17 : f32 to vector<128x1024xf32>
    %23 = arith.maximumf %21, %22 : vector<128x1024xf32>
    %c0_18 = arith.constant 0 : index
    %c0_19 = arith.constant 0 : index
    %24 = vector.load %arg8[%c0_18, %c0_19] : memref<128x3xf32, #tpu.memory_space<vmem>>, vector<128x3xf32>
    %25 = vector.extract_strided_slice %24 {offsets = [0, 0], sizes = [128, 1], strides = [1, 1]} : vector<128x3xf32> to vector<128x1xf32>
    %26 = vector.broadcast %25 : vector<128x1xf32> to vector<128x1024xf32>
    %27 = arith.mulf %26, %23 : vector<128x1024xf32>
    %cst_20 = arith.constant dense<0.000000e+00> : vector<1024xf32>
    %28 = vector.multi_reduction <add>, %27, %cst_20 [0] : vector<128x1024xf32> to vector<1024xf32>
    %29 = vector.shape_cast %28 : vector<1024xf32> to vector<1x1024xf32>
    %30 = vector.extract_strided_slice %24 {offsets = [0, 1], sizes = [128, 1], strides = [1, 1]} : vector<128x3xf32> to vector<128x1xf32>
    %31 = vector.broadcast %30 : vector<128x1xf32> to vector<128x1024xf32>
    %32 = arith.mulf %31, %23 : vector<128x1024xf32>
    %cst_21 = arith.constant dense<0.000000e+00> : vector<1024xf32>
    %33 = vector.multi_reduction <add>, %32, %cst_21 [0] : vector<128x1024xf32> to vector<1024xf32>
    %34 = vector.shape_cast %33 : vector<1024xf32> to vector<1x1024xf32>
    %35 = vector.extract_strided_slice %24 {offsets = [0, 2], sizes = [128, 1], strides = [1, 1]} : vector<128x3xf32> to vector<128x1xf32>
    %36 = vector.broadcast %35 : vector<128x1xf32> to vector<128x1024xf32>
    %37 = arith.mulf %36, %23 : vector<128x1024xf32>
    %cst_22 = arith.constant dense<0.000000e+00> : vector<1024xf32>
    %38 = vector.multi_reduction <add>, %37, %cst_22 [0] : vector<128x1024xf32> to vector<1024xf32>
    %39 = vector.shape_cast %38 : vector<1024xf32> to vector<1x1024xf32>
    %40 = tpu.concatenate %29, %34, %39 in 0 : vector<1x1024xf32>, vector<1x1024xf32>, vector<1x1024xf32> -> vector<3x1024xf32>
    %c0_23 = arith.constant 0 : index
    %c0_24 = arith.constant 0 : index
    %41 = vector.load %arg9[%c0_23, %c0_24] : memref<3x1xf32, #tpu.memory_space<vmem>>, vector<3x1xf32>
    %42 = vector.broadcast %41 : vector<3x1xf32> to vector<3x1024xf32>
    %43 = arith.addf %40, %42 : vector<3x1024xf32>
    %c0_25 = arith.constant 0 : index
    %c0_26 = arith.constant 0 : index
    %44 = vector.load %arg10[%c0_25, %c0_26] : memref<3x1024xf32, #tpu.memory_space<vmem>>, vector<3x1024xf32>
    tpu.vector_store %arg10[%c0_25, %c0_26], %43 {strides = array<i32>} : memref<3x1024xf32, #tpu.memory_space<vmem>>, vector<3x1024xf32>,
    return
  }
  func.func @transform_0(%arg0: i32) -> (i32, i32) {
    %c0_i32 = arith.constant 0 : i32
    %c0_i32_0 = arith.constant 0 : i32
    return %c0_i32, %arg0 : i32, i32
  }
  func.func @transform_1(%arg0: i32) -> (i32, i32) {
    %c0_i32 = arith.constant 0 : i32
    %c0_i32_0 = arith.constant 0 : i32
    %c0_i32_1 = arith.constant 0 : i32
    return %c0_i32, %c0_i32_0 : i32, i32
  }
  func.func @transform_2(%arg0: i32) -> (i32, i32) {
    %c0_i32 = arith.constant 0 : i32
    %c0_i32_0 = arith.constant 0 : i32
    %c0_i32_1 = arith.constant 0 : i32
    return %c0_i32, %c0_i32_0 : i32, i32
  }
  func.func @transform_3(%arg0: i32) -> (i32, i32) {
    %c0_i32 = arith.constant 0 : i32
    %c0_i32_0 = arith.constant 0 : i32
    %c0_i32_1 = arith.constant 0 : i32
    return %c0_i32, %c0_i32_0 : i32, i32
  }
  func.func @transform_4(%arg0: i32) -> (i32, i32) {
    %c0_i32 = arith.constant 0 : i32
    %c0_i32_0 = arith.constant 0 : i32
    %c0_i32_1 = arith.constant 0 : i32
    return %c0_i32, %c0_i32_0 : i32, i32
  }
  func.func @transform_5(%arg0: i32) -> (i32, i32) {
    %c0_i32 = arith.constant 0 : i32
    %c0_i32_0 = arith.constant 0 : i32
    %c0_i32_1 = arith.constant 0 : i32
    return %c0_i32, %c0_i32_0 : i32, i32
  }
  func.func @transform_6(%arg0: i32) -> (i32, i32) {
    %c0_i32 = arith.constant 0 : i32
    %c0_i32_0 = arith.constant 0 : i32
    %c0_i32_1 = arith.constant 0 : i32
    return %c0_i32, %c0_i32_0 : i32, i32
  }
  func.func @transform_7(%arg0: i32) -> (i32, i32) {
    %c0_i32 = arith.constant 0 : i32
    %c0_i32_0 = arith.constant 0 : i32
    %c0_i32_1 = arith.constant 0 : i32
    return %c0_i32, %c0_i32_0 : i32, i32
  }
  func.func @transform_8(%arg0: i32) -> (i32, i32) {
    %c0_i32 = arith.constant 0 : i32
    %c0_i32_0 = arith.constant 0 : i32
    %c0_i32_1 = arith.constant 0 : i32
    return %c0_i32, %c0_i32_0 : i32, i32
  }
  func.func @transform_9(%arg0: i32) -> (i32, i32) {
    %c0_i32 = arith.constant 0 : i32
    %c0_i32_0 = arith.constant 0 : i32
    return %c0_i32, %arg0 : i32, i32
  }
}

</mosaic_0001>

<llo_original>
// kernel: mixer_forward.1
$region0: #{mixer_forward.1}
  #allocation0 [shape = 'u32[]', space=smem, size = 0x4, offset = 0x4, fixed_abs, tag = 'smem constant byte address 0x4 - core index']
  #allocation1 [shape = 'u32[72,128]{1,0:T(1,128)}', space=vmem, size = 0x9000, scoped, tag = 'internal scratch']
  %s0 = inlined_call_operand.vmem [shape: bf16[6,1024], index: 0, kind: input, shape index: {}]
  %s1 = inlined_call_operand.vmem [shape: bf16[128,6], index: 1, kind: input, shape index: {}]
  %s2 = inlined_call_operand.vmem [shape: f32[128,1], index: 2, kind: input, shape index: {}]
  %s3 = inlined_call_operand.vmem [shape: bf16[128,128], index: 3, kind: input, shape index: {}]
  %s4 = inlined_call_operand.vmem [shape: f32[128,1], index: 4, kind: input, shape index: {}]
  %s5 = inlined_call_operand.vmem [shape: bf16[128,128], index: 5, kind: input, shape index: {}]
  %s6 = inlined_call_operand.vmem [shape: f32[128,1], index: 6, kind: input, shape index: {}]
  %s7 = inlined_call_operand.vmem [shape: f32[128,3], index: 7, kind: input, shape index: {}]
  %s8 = inlined_call_operand.vmem [shape: f32[3,1], index: 8, kind: input, shape index: {}]
  %s9 = inlined_call_operand.vmem [shape: f32[3,1024], index: 9, kind: output, shape index: {}]
  %s10 = sld [smem:[#allocation0]]
  $region46: #{mixer_forward.1} parent=0
    _
  %s12 = ssub.s32 1, %s10
  %s13 = scalar_select 0, %s12, %s10
  // Predicated region
  $region2: #{mixer_forward.1} parent=0 // pred_check
    _
  $region3: #{mixer_forward.1} parent=0 // pred_check_branch
    %15 = sbr.rel (0) target = $region5
  $region4: #{mixer_forward.1} parent=0 // pred_region
    _
  $region5: #{mixer_forward.1} parent=0 // pred_fallthru
    _
  // Predicated region
  $region6: #{mixer_forward.1} parent=0 // pred_check
    _
  $region7: #{mixer_forward.1} parent=0 // pred_check_branch
    %17 = sbr.rel (0) target = $region9
  $region8: #{mixer_forward.1} parent=0 // pred_region
    _
  $region9: #{mixer_forward.1} parent=0 // pred_fallthru
    _
  // Predicated region
  $region10: #{mixer_forward.1} parent=0 // pred_check
    _
  $region11: #{mixer_forward.1} parent=0 // pred_check_branch
    %19 = sbr.rel (0) target = $region13
  $region12: #{mixer_forward.1} parent=0 // pred_region
    _
  $region13: #{mixer_forward.1} parent=0 // pred_fallthru
    _
  // Predicated region
  $region14: #{mixer_forward.1} parent=0 // pred_check
    _
  $region15: #{mixer_forward.1} parent=0 // pred_check_branch
    %21 = sbr.rel (0) target = $region17
  $region16: #{mixer_forward.1} parent=0 // pred_region
    _
  $region17: #{mixer_forward.1} parent=0 // pred_fallthru
    _
  // Predicated region
  $region18: #{mixer_forward.1} parent=0 // pred_check
    _
  $region19: #{mixer_forward.1} parent=0 // pred_check_branch
    %23 = sbr.rel (0) target = $region21
  $region20: #{mixer_forward.1} parent=0 // pred_region
    _
  $region21: #{mixer_forward.1} parent=0 // pred_fallthru
    _
  // Predicated region
  $region22: #{mixer_forward.1} parent=0 // pred_check
    _
  $region23: #{mixer_forward.1} parent=0 // pred_check_branch
    %25 = sbr.rel (0) target = $region25
  $region24: #{mixer_forward.1} parent=0 // pred_region
    _
  $region25: #{mixer_forward.1} parent=0 // pred_fallthru
    _
  // Predicated region
  $region26: #{mixer_forward.1} parent=0 // pred_check
    _
  $region27: #{mixer_forward.1} parent=0 // pred_check_branch
    %27 = sbr.rel (0) target = $region29
  $region28: #{mixer_forward.1} parent=0 // pred_region
    _
  $region29: #{mixer_forward.1} parent=0 // pred_fallthru
    _
  // Predicated region
  $region30: #{mixer_forward.1} parent=0 // pred_check
    _
  $region31: #{mixer_forward.1} parent=0 // pred_check_branch
    %29 = sbr.rel (0) target = $region33
  $region32: #{mixer_forward.1} parent=0 // pred_region
    _
  $region33: #{mixer_forward.1} parent=0 // pred_fallthru
    _
  // Predicated region
  $region34: #{mixer_forward.1} parent=0 // pred_check
    _
  $region35: #{mixer_forward.1} parent=0 // pred_check_branch
    %31 = sbr.rel (0) target = $region37
  $region36: #{mixer_forward.1} parent=0 // pred_region
    _
  $region37: #{mixer_forward.1} parent=0 // pred_fallthru
    _
  %v33 = vld [vmem:[%s0] sm:$0x77]
  %v34 = vld [vmem:[%s0 + $0x8] sm:$0x77]
  %v35 = vld [vmem:[%s0 + $0x10] sm:$0x77]
  %v36 = vld [vmem:[%s0 + $0x18] sm:$0x77]
  %v37 = vld [vmem:[%s1] sm:$0xf]
  %v38 = vld [vmem:[%s1 + $0x4] sm:$0xf]
  %v39 = vld [vmem:[%s1 + $0x8] sm:$0xf]
  %v40 = vld [vmem:[%s1 + $0xc] sm:$0xf]
  %v41 = vld [vmem:[%s1 + $0x10] sm:$0xf]
  %v42 = vld [vmem:[%s1 + $0x14] sm:$0xf]
  %v43 = vld [vmem:[%s1 + $0x18] sm:$0xf]
  %v44 = vld [vmem:[%s1 + $0x1c] sm:$0xf]
  %v45 = vld [vmem:[%s1 + $0x20] sm:$0xf]
  %v46 = vld [vmem:[%s1 + $0x24] sm:$0xf]
  %v47 = vld [vmem:[%s1 + $0x28] sm:$0xf]
  %v48 = vld [vmem:[%s1 + $0x2c] sm:$0xf]
  %v49 = vld [vmem:[%s1 + $0x30] sm:$0xf]
  %v50 = vld [vmem:[%s1 + $0x34] sm:$0xf]
  %v51 = vld [vmem:[%s1 + $0x38] sm:$0xf]
  %v52 = vld [vmem:[%s1 + $0x3c] sm:$0xf]
  %v53 = vld [vmem:[%s2] sm:$0xff]
  %v54 = vld [vmem:[%s2 + $0x8] sm:$0xff]
  %v55 = vld [vmem:[%s2 + $0x10] sm:$0xff]
  %v56 = vld [vmem:[%s2 + $0x18] sm:$0xff]
  %v57 = vld [vmem:[%s2 + $0x20] sm:$0xff]
  %v58 = vld [vmem:[%s2 + $0x28] sm:$0xff]
  %v59 = vld [vmem:[%s2 + $0x30] sm:$0xff]
  %v60 = vld [vmem:[%s2 + $0x38] sm:$0xff]
  %v61 = vld [vmem:[%s2 + $0x40] sm:$0xff]
  %v62 = vld [vmem:[%s2 + $0x48] sm:$0xff]
  %v63 = vld [vmem:[%s2 + $0x50] sm:$0xff]
  %v64 = vld [vmem:[%s2 + $0x58] sm:$0xff]
  %v65 = vld [vmem:[%s2 + $0x60] sm:$0xff]
  %v66 = vld [vmem:[%s2 + $0x68] sm:$0xff]
  %v67 = vld [vmem:[%s2 + $0x70] sm:$0xff]
  %v68 = vld [vmem:[%s2 + $0x78] sm:$0xff]
  %70 = vset.pattern.permute.xlu0 0
  %71 = vperm.xlu0 %70, %v53
  %v72 = vpop.permute.xlu0 %71
  %75 = vset.pattern.permute.xlu0 0
  %76 = vperm.xlu0 %75, %v54
  %v77 = vpop.permute.xlu0 %76
  %80 = vset.pattern.permute.xlu0 0
  %81 = vperm.xlu0 %80, %v55
  %v82 = vpop.permute.xlu0 %81
  %85 = vset.pattern.permute.xlu0 0
  %86 = vperm.xlu0 %85, %v56
  %v87 = vpop.permute.xlu0 %86
  %90 = vset.pattern.permute.xlu0 0
  %91 = vperm.xlu0 %90, %v57
  %v92 = vpop.permute.xlu0 %91
  %95 = vset.pattern.permute.xlu0 0
  %96 = vperm.xlu0 %95, %v58
  %v97 = vpop.permute.xlu0 %96
  %100 = vset.pattern.permute.xlu0 0
  %101 = vperm.xlu0 %100, %v59
  %v102 = vpop.permute.xlu0 %101
  %105 = vset.pattern.permute.xlu0 0
  %106 = vperm.xlu0 %105, %v60
  %v107 = vpop.permute.xlu0 %106
  %110 = vset.pattern.permute.xlu0 0
  %111 = vperm.xlu0 %110, %v61
  %v112 = vpop.permute.xlu0 %111
  %115 = vset.pattern.permute.xlu0 0
  %116 = vperm.xlu0 %115, %v62
  %v117 = vpop.permute.xlu0 %116
  %120 = vset.pattern.permute.xlu0 0
  %121 = vperm.xlu0 %120, %v63
  %v122 = vpop.permute.xlu0 %121
  %125 = vset.pattern.permute.xlu0 0
  %126 = vperm.xlu0 %125, %v64
  %v127 = vpop.permute.xlu0 %126
  %130 = vset.pattern.permute.xlu0 0
  %131 = vperm.xlu0 %130, %v65
  %v132 = vpop.permute.xlu0 %131
  %135 = vset.pattern.permute.xlu0 0
  %136 = vperm.xlu0 %135, %v66
  %v137 = vpop.permute.xlu0 %136
  %140 = vset.pattern.permute.xlu0 0
  %141 = vperm.xlu0 %140, %v67
  %v142 = vpop.permute.xlu0 %141
  %145 = vset.pattern.permute.xlu0 0
  %146 = vperm.xlu0 %145, %v68
  %v147 = vpop.permute.xlu0 %146
  %v165 = vunpack.c.l.b16 %v37
  %v166 = vunpack.c.l.b16 %v38
  %v167 = vunpack.c.l.b16 %v39
  %v168 = vunpack.c.l.b16 %v40
  %v169 = vunpack.c.l.b16 %v41
  %v170 = vunpack.c.l.b16 %v42
  %v171 = vunpack.c.l.b16 %v43
  %v172 = vunpack.c.l.b16 %v44
  %v173 = vunpack.c.l.b16 %v45
  %v174 = vunpack.c.l.b16 %v46
  %v175 = vunpack.c.l.b16 %v47
  %v176 = vunpack.c.l.b16 %v48
  %v177 = vunpack.c.l.b16 %v49
  %v178 = vunpack.c.l.b16 %v50
  %v179 = vunpack.c.l.b16 %v51
  %v180 = vunpack.c.l.b16 %v52
  %v181 = vpack.c.b16 %v166, %v165
  %v182 = vpack.c.b16 %v168, %v167
  %v183 = vpack.c.b16 %v170, %v169
  %v184 = vpack.c.b16 %v172, %v171
  %v185 = vpack.c.b16 %v174, %v173
  %v186 = vpack.c.b16 %v176, %v175
  %v187 = vpack.c.b16 %v178, %v177
  %v188 = vpack.c.b16 %v180, %v179
  %v193 = vunpack.c.l.b16 %v33
  %v194 = vunpack.c.h.b16 %v33
  %v195 = vunpack.c.l.b16 %v34
  %v196 = vunpack.c.h.b16 %v34
  %v197 = vunpack.c.l.b16 %v35
  %v198 = vunpack.c.h.b16 %v35
  %v199 = vunpack.c.l.b16 %v36
  %v200 = vunpack.c.h.b16 %v36
  %v201 = vpack.c.b16 %v193, %v193
  %v202 = vpack.c.b16 %v194, %v194
  %v203 = vpack.c.b16 %v195, %v195
  %v204 = vpack.c.b16 %v196, %v196
  %v205 = vpack.c.b16 %v197, %v197
  %v206 = vpack.c.b16 %v198, %v198
  %v207 = vpack.c.b16 %v199, %v199
  %v208 = vpack.c.b16 %v200, %v200
  %vm209 = vcmask 48128
  %v211 = vsel %vm209, %v181, 0
  %v214 = vsel %vm209, %v182, 0
  %v217 = vsel %vm209, %v183, 0
  %v220 = vsel %vm209, %v184, 0
  %v223 = vsel %vm209, %v185, 0
  %v226 = vsel %vm209, %v186, 0
  %v229 = vsel %vm209, %v187, 0
  %v232 = vsel %vm209, %v188, 0
  %vm234 = vcmask 1042432
  %v236 = vsel %vm234, %v201, 0
  %v239 = vsel %vm234, %v202, 0
  %v242 = vsel %vm234, %v203, 0
  %v245 = vsel %vm234, %v204, 0
  %v248 = vsel %vm234, %v205, 0
  %v251 = vsel %vm234, %v206, 0
  %v254 = vsel %vm234, %v207, 0
  %v257 = vsel %vm234, %v208, 0
  %259 = vmatpush.bf16.msra.mxu0 0
  %260 = vmatpush.bf16.msra.mxu0 0
  %261 = vmatpush.bf16.msra.mxu0 0
  %262 = vmatpush.bf16.msra.mxu0 0
  %263 = vmatpush.bf16.msra.mxu0 0
  %264 = vmatpush.bf16.msra.mxu0 0
  %265 = vmatpush.bf16.msra.mxu0 0
  %266 = vmatpush.bf16.msra.mxu0 %v236
  %267 = vmatmul.bf16.gmra.mxu0 %v211
  %v268 = vpop.f32.mrf.mxu0
  %v269 = vadd.f32 %v72, %v268
  %v270 = vpop.f32.mrf.mxu0
  %v271 = vadd.f32 %v77, %v270
  %272 = vmatmul.bf16.gmra.mxu0 %v214
  %v273 = vpop.f32.mrf.mxu0
  %v274 = vadd.f32 %v82, %v273
  %v275 = vpop.f32.mrf.mxu0
  %v276 = vadd.f32 %v87, %v275
  %277 = vmatmul.bf16.gmra.mxu0 %v217
  %v278 = vpop.f32.mrf.mxu0
  %v279 = vadd.f32 %v92, %v278
  %v280 = vpop.f32.mrf.mxu0
  %v281 = vadd.f32 %v97, %v280
  %282 = vmatmul.bf16.gmra.mxu0 %v220
  %v283 = vpop.f32.mrf.mxu0
  %v284 = vadd.f32 %v102, %v283
  %v285 = vpop.f32.mrf.mxu0
  %v286 = vadd.f32 %v107, %v285
  %287 = vmatmul.bf16.gmra.mxu0 %v223
  %v288 = vpop.f32.mrf.mxu0
  %v289 = vadd.f32 %v112, %v288
  %v290 = vpop.f32.mrf.mxu0
  %v291 = vadd.f32 %v117, %v290
  %292 = vmatmul.bf16.gmra.mxu0 %v226
  %v293 = vpop.f32.mrf.mxu0
  %v294 = vadd.f32 %v122, %v293
  %v295 = vpop.f32.mrf.mxu0
  %v296 = vadd.f32 %v127, %v295
  %297 = vmatmul.bf16.gmra.mxu0 %v229
  %v298 = vpop.f32.mrf.mxu0
  %v299 = vadd.f32 %v132, %v298
  %v300 = vpop.f32.mrf.mxu0
  %v301 = vadd.f32 %v137, %v300
  %302 = vmatmul.bf16.gmra.mxu0 %v232
  %v303 = vpop.f32.mrf.mxu0
  %v304 = vadd.f32 %v142, %v303
  %v305 = vpop.f32.mrf.mxu0
  %v306 = vadd.f32 %v147, %v305
  %307 = vdwg.mxu0
  %308 = vmatpush.bf16.msra.mxu0 0
  %309 = vmatpush.bf16.msra.mxu0 0
  %310 = vmatpush.bf16.msra.mxu0 0
  %311 = vmatpush.bf16.msra.mxu0 0
  %312 = vmatpush.bf16.msra.mxu0 0
  %313 = vmatpush.bf16.msra.mxu0 0
  %314 = vmatpush.bf16.msra.mxu0 0
  %315 = vmatpush.bf16.msra.mxu0 %v239
  %316 = vmatmul.bf16.gmra.mxu0 %v211
  %v317 = vpop.f32.mrf.mxu0
  %v318 = vadd.f32 %v72, %v317
  %v319 = vpop.f32.mrf.mxu0
  %v320 = vadd.f32 %v77, %v319
  %321 = vmatmul.bf16.gmra.mxu0 %v214
  %v322 = vpop.f32.mrf.mxu0
  %v323 = vadd.f32 %v82, %v322
  %v324 = vpop.f32.mrf.mxu0
  %v325 = vadd.f32 %v87, %v324
  %326 = vmatmul.bf16.gmra.mxu0 %v217
  %v327 = vpop.f32.mrf.mxu0
  %v328 = vadd.f32 %v92, %v327
  %v329 = vpop.f32.mrf.mxu0
  %v330 = vadd.f32 %v97, %v329
  %331 = vmatmul.bf16.gmra.mxu0 %v220
  %v332 = vpop.f32.mrf.mxu0
  %v333 = vadd.f32 %v102, %v332
  %v334 = vpop.f32.mrf.mxu0
  %v335 = vadd.f32 %v107, %v334
  %336 = vmatmul.bf16.gmra.mxu0 %v223
  %v337 = vpop.f32.mrf.mxu0
  %v338 = vadd.f32 %v112, %v337
  %v339 = vpop.f32.mrf.mxu0
  %v340 = vadd.f32 %v117, %v339
  %341 = vmatmul.bf16.gmra.mxu0 %v226
  %v342 = vpop.f32.mrf.mxu0
  %v343 = vadd.f32 %v122, %v342
  %v344 = vpop.f32.mrf.mxu0
  %v345 = vadd.f32 %v127, %v344
  %346 = vmatmul.bf16.gmra.mxu0 %v229
  %v347 = vpop.f32.mrf.mxu0
  %v348 = vadd.f32 %v132, %v347
  %v349 = vpop.f32.mrf.mxu0
  %v350 = vadd.f32 %v137, %v349
  %351 = vmatmul.bf16.gmra.mxu0 %v232
  %v352 = vpop.f32.mrf.mxu0
  %v353 = vadd.f32 %v142, %v352
  %v354 = vpop.f32.mrf.mxu0
  %v355 = vadd.f32 %v147, %v354
  %356 = vdwg.mxu0
  %357 = vmatpush.bf16.msra.mxu0 0
  %358 = vmatpush.bf16.msra.mxu0 0
  %359 = vmatpush.bf16.msra.mxu0 0
  %360 = vmatpush.bf16.msra.mxu0 0
  %361 = vmatpush.bf16.msra.mxu0 0
  %362 = vmatpush.bf16.msra.mxu0 0
  %363 = vmatpush.bf16.msra.mxu0 0
  %364 = vmatpush.bf16.msra.mxu0 %v242
  %365 = vmatmul.bf16.gmra.mxu0 %v211
  %v366 = vpop.f32.mrf.mxu0
  %v367 = vadd.f32 %v72, %v366
  %v368 = vpop.f32.mrf.mxu0
  %v369 = vadd.f32 %v77, %v368
  %370 = vmatmul.bf16.gmra.mxu0 %v214
  %v371 = vpop.f32.mrf.mxu0
  %v372 = vadd.f32 %v82, %v371
  %v373 = vpop.f32.mrf.mxu0
  %v374 = vadd.f32 %v87, %v373
  %375 = vmatmul.bf16.gmra.mxu0 %v217
  %v376 = vpop.f32.mrf.mxu0
  %v377 = vadd.f32 %v92, %v376
  %v378 = vpop.f32.mrf.mxu0
  %v379 = vadd.f32 %v97, %v378
  %380 = vmatmul.bf16.gmra.mxu0 %v220
  %v381 = vpop.f32.mrf.mxu0
  %v382 = vadd.f32 %v102, %v381
  %v383 = vpop.f32.mrf.mxu0
  %v384 = vadd.f32 %v107, %v383
  %385 = vmatmul.bf16.gmra.mxu0 %v223
  %v386 = vpop.f32.mrf.mxu0
  %v387 = vadd.f32 %v112, %v386
  %v388 = vpop.f32.mrf.mxu0
  %v389 = vadd.f32 %v117, %v388
  %390 = vmatmul.bf16.gmra.mxu0 %v226
  %v391 = vpop.f32.mrf.mxu0
  %v392 = vadd.f32 %v122, %v391
  %v393 = vpop.f32.mrf.mxu0
  %v394 = vadd.f32 %v127, %v393
  %395 = vmatmul.bf16.gmra.mxu0 %v229
  %v396 = vpop.f32.mrf.mxu0
  %v397 = vadd.f32 %v132, %v396
  %v398 = vpop.f32.mrf.mxu0
  %v399 = vadd.f32 %v137, %v398
  %400 = vmatmul.bf16.gmra.mxu0 %v232
  %v401 = vpop.f32.mrf.mxu0
  %v402 = vadd.f32 %v142, %v401
  %v403 = vpop.f32.mrf.mxu0
  %v404 = vadd.f32 %v147, %v403
  %405 = vdwg.mxu0
  %406 = vmatpush.bf16.msra.mxu0 0
  %407 = vmatpush.bf16.msra.mxu0 0
  %408 = vmatpush.bf16.msra.mxu0 0
  %409 = vmatpush.bf16.msra.mxu0 0
  %410 = vmatpush.bf16.msra.mxu0 0
  %411 = vmatpush.bf16.msra.mxu0 0
  %412 = vmatpush.bf16.msra.mxu0 0
  %413 = vmatpush.bf16.msra.mxu0 %v245
  %414 = vmatmul.bf16.gmra.mxu0 %v211
  %v415 = vpop.f32.mrf.mxu0
  %v416 = vadd.f32 %v72, %v415
  %v417 = vpop.f32.mrf.mxu0
  %v418 = vadd.f32 %v77, %v417
  %419 = vmatmul.bf16.gmra.mxu0 %v214
  %v420 = vpop.f32.mrf.mxu0
  %v421 = vadd.f32 %v82, %v420
  %v422 = vpop.f32.mrf.mxu0
  %v423 = vadd.f32 %v87, %v422
  %424 = vmatmul.bf16.gmra.mxu0 %v217
  %v425 = vpop.f32.mrf.mxu0
  %v426 = vadd.f32 %v92, %v425
  %v427 = vpop.f32.mrf.mxu0
  %v428 = vadd.f32 %v97, %v427
  %429 = vmatmul.bf16.gmra.mxu0 %v220
  %v430 = vpop.f32.mrf.mxu0
  %v431 = vadd.f32 %v102, %v430
  %v432 = vpop.f32.mrf.mxu0
  %v433 = vadd.f32 %v107, %v432
  %434 = vmatmul.bf16.gmra.mxu0 %v223
  %v435 = vpop.f32.mrf.mxu0
  %v436 = vadd.f32 %v112, %v435
  %v437 = vpop.f32.mrf.mxu0
  %v438 = vadd.f32 %v117, %v437
  %439 = vmatmul.bf16.gmra.mxu0 %v226
  %v440 = vpop.f32.mrf.mxu0
  %v441 = vadd.f32 %v122, %v440
  %v442 = vpop.f32.mrf.mxu0
  %v443 = vadd.f32 %v127, %v442
  %444 = vmatmul.bf16.gmra.mxu0 %v229
  %v445 = vpop.f32.mrf.mxu0
  %v446 = vadd.f32 %v132, %v445
  %v447 = vpop.f32.mrf.mxu0
  %v448 = vadd.f32 %v137, %v447
  %449 = vmatmul.bf16.gmra.mxu0 %v232
  %v450 = vpop.f32.mrf.mxu0
  %v451 = vadd.f32 %v142, %v450
  %v452 = vpop.f32.mrf.mxu0
  %v453 = vadd.f32 %v147, %v452
  %454 = vdwg.mxu0
  %455 = vmatpush.bf16.msra.mxu0 0
  %456 = vmatpush.bf16.msra.mxu0 0
  %457 = vmatpush.bf16.msra.mxu0 0
  %458 = vmatpush.bf16.msra.mxu0 0
  %459 = vmatpush.bf16.msra.mxu0 0
  %460 = vmatpush.bf16.msra.mxu0 0
  %461 = vmatpush.bf16.msra.mxu0 0
  %462 = vmatpush.bf16.msra.mxu0 %v248
  %463 = vmatmul.bf16.gmra.mxu0 %v211
  %v464 = vpop.f32.mrf.mxu0
  %v465 = vadd.f32 %v72, %v464
  %v466 = vpop.f32.mrf.mxu0
  %v467 = vadd.f32 %v77, %v466
  %468 = vmatmul.bf16.gmra.mxu0 %v214
  %v469 = vpop.f32.mrf.mxu0
  %v470 = vadd.f32 %v82, %v469
  %v471 = vpop.f32.mrf.mxu0
  %v472 = vadd.f32 %v87, %v471
  %473 = vmatmul.bf16.gmra.mxu0 %v217
  %v474 = vpop.f32.mrf.mxu0
  %v475 = vadd.f32 %v92, %v474
  %v476 = vpop.f32.mrf.mxu0
  %v477 = vadd.f32 %v97, %v476
  %478 = vmatmul.bf16.gmra.mxu0 %v220
  %v479 = vpop.f32.mrf.mxu0
  %v480 = vadd.f32 %v102, %v479
  %v481 = vpop.f32.mrf.mxu0
  %v482 = vadd.f32 %v107, %v481
  %483 = vmatmul.bf16.gmra.mxu0 %v223
  %v484 = vpop.f32.mrf.mxu0
  %v485 = vadd.f32 %v112, %v484
  %v486 = vpop.f32.mrf.mxu0
  %v487 = vadd.f32 %v117, %v486
  %488 = vmatmul.bf16.gmra.mxu0 %v226
  %v489 = vpop.f32.mrf.mxu0
  %v490 = vadd.f32 %v122, %v489
  %v491 = vpop.f32.mrf.mxu0
  %v492 = vadd.f32 %v127, %v491
  %493 = vmatmul.bf16.gmra.mxu0 %v229
  %v494 = vpop.f32.mrf.mxu0
  %v495 = vadd.f32 %v132, %v494
  %v496 = vpop.f32.mrf.mxu0
  %v497 = vadd.f32 %v137, %v496
  %498 = vmatmul.bf16.gmra.mxu0 %v232
  %v499 = vpop.f32.mrf.mxu0
  %v500 = vadd.f32 %v142, %v499
  %v501 = vpop.f32.mrf.mxu0
  %v502 = vadd.f32 %v147, %v501
  %503 = vdwg.mxu0
  %504 = vmatpush.bf16.msra.mxu0 0
  %505 = vmatpush.bf16.msra.mxu0 0
  %506 = vmatpush.bf16.msra.mxu0 0
  %507 = vmatpush.bf16.msra.mxu0 0
  %508 = vmatpush.bf16.msra.mxu0 0
  %509 = vmatpush.bf16.msra.mxu0 0
  %510 = vmatpush.bf16.msra.mxu0 0
  %511 = vmatpush.bf16.msra.mxu0 %v251
  %512 = vmatmul.bf16.gmra.mxu0 %v211
  %v513 = vpop.f32.mrf.mxu0
  %v514 = vadd.f32 %v72, %v513
  %v515 = vpop.f32.mrf.mxu0
  %v516 = vadd.f32 %v77, %v515
  %517 = vmatmul.bf16.gmra.mxu0 %v214
  %v518 = vpop.f32.mrf.mxu0
  %v519 = vadd.f32 %v82, %v518
  %v520 = vpop.f32.mrf.mxu0
  %v521 = vadd.f32 %v87, %v520
  %522 = vmatmul.bf16.gmra.mxu0 %v217
  %v523 = vpop.f32.mrf.mxu0
  %v524 = vadd.f32 %v92, %v523
  %v525 = vpop.f32.mrf.mxu0
  %v526 = vadd.f32 %v97, %v525
  %527 = vmatmul.bf16.gmra.mxu0 %v220
  %v528 = vpop.f32.mrf.mxu0
  %v529 = vadd.f32 %v102, %v528
  %v530 = vpop.f32.mrf.mxu0
  %v531 = vadd.f32 %v107, %v530
  %532 = vmatmul.bf16.gmra.mxu0 %v223
  %v533 = vpop.f32.mrf.mxu0
  %v534 = vadd.f32 %v112, %v533
  %v535 = vpop.f32.mrf.mxu0
  %v536 = vadd.f32 %v117, %v535
  %537 = vmatmul.bf16.gmra.mxu0 %v226
  %v538 = vpop.f32.mrf.mxu0
  %v539 = vadd.f32 %v122, %v538
  %v540 = vpop.f32.mrf.mxu0
  %v541 = vadd.f32 %v127, %v540
  %542 = vmatmul.bf16.gmra.mxu0 %v229
  %v543 = vpop.f32.mrf.mxu0
  %v544 = vadd.f32 %v132, %v543
  %v545 = vpop.f32.mrf.mxu0
  %v546 = vadd.f32 %v137, %v545
  %547 = vmatmul.bf16.gmra.mxu0 %v232
  %v548 = vpop.f32.mrf.mxu0
  %v549 = vadd.f32 %v142, %v548
  %v550 = vpop.f32.mrf.mxu0
  %v551 = vadd.f32 %v147, %v550
  %552 = vdwg.mxu0
  %553 = vmatpush.bf16.msra.mxu0 0
  %554 = vmatpush.bf16.msra.mxu0 0
  %555 = vmatpush.bf16.msra.mxu0 0
  %556 = vmatpush.bf16.msra.mxu0 0
  %557 = vmatpush.bf16.msra.mxu0 0
  %558 = vmatpush.bf16.msra.mxu0 0
  %559 = vmatpush.bf16.msra.mxu0 0
  %560 = vmatpush.bf16.msra.mxu0 %v254
  %561 = vmatmul.bf16.gmra.mxu0 %v211
  %v562 = vpop.f32.mrf.mxu0
  %v563 = vadd.f32 %v72, %v562
  %v564 = vpop.f32.mrf.mxu0
  %v565 = vadd.f32 %v77, %v564
  %566 = vmatmul.bf16.gmra.mxu0 %v214
  %v567 = vpop.f32.mrf.mxu0
  %v568 = vadd.f32 %v82, %v567
  %v569 = vpop.f32.mrf.mxu0
  %v570 = vadd.f32 %v87, %v569
  %571 = vmatmul.bf16.gmra.mxu0 %v217
  %v572 = vpop.f32.mrf.mxu0
  %v573 = vadd.f32 %v92, %v572
  %v574 = vpop.f32.mrf.mxu0
  %v575 = vadd.f32 %v97, %v574
  %576 = vmatmul.bf16.gmra.mxu0 %v220
  %v577 = vpop.f32.mrf.mxu0
  %v578 = vadd.f32 %v102, %v577
  %v579 = vpop.f32.mrf.mxu0
  %v580 = vadd.f32 %v107, %v579
  %581 = vmatmul.bf16.gmra.mxu0 %v223
  %v582 = vpop.f32.mrf.mxu0
  %v583 = vadd.f32 %v112, %v582
  %v584 = vpop.f32.mrf.mxu0
  %v585 = vadd.f32 %v117, %v584
  %586 = vmatmul.bf16.gmra.mxu0 %v226
  %v587 = vpop.f32.mrf.mxu0
  %v588 = vadd.f32 %v122, %v587
  %v589 = vpop.f32.mrf.mxu0
  %v590 = vadd.f32 %v127, %v589
  %591 = vmatmul.bf16.gmra.mxu0 %v229
  %v592 = vpop.f32.mrf.mxu0
  %v593 = vadd.f32 %v132, %v592
  %v594 = vpop.f32.mrf.mxu0
  %v595 = vadd.f32 %v137, %v594
  %596 = vmatmul.bf16.gmra.mxu0 %v232
  %v597 = vpop.f32.mrf.mxu0
  %v598 = vadd.f32 %v142, %v597
  %v599 = vpop.f32.mrf.mxu0
  %v600 = vadd.f32 %v147, %v599
  %601 = vdwg.mxu0
  %602 = vmatpush.bf16.msra.mxu0 0
  %603 = vmatpush.bf16.msra.mxu0 0
  %604 = vmatpush.bf16.msra.mxu0 0
  %605 = vmatpush.bf16.msra.mxu0 0
  %606 = vmatpush.bf16.msra.mxu0 0
  %607 = vmatpush.bf16.msra.mxu0 0
  %608 = vmatpush.bf16.msra.mxu0 0
  %609 = vmatpush.bf16.msra.mxu0 %v257
  %610 = vmatmul.bf16.gmra.mxu0 %v211
  %v611 = vpop.f32.mrf.mxu0
  %v612 = vadd.f32 %v72, %v611
  %v613 = vpop.f32.mrf.mxu0
  %v614 = vadd.f32 %v77, %v613
  %615 = vmatmul.bf16.gmra.mxu0 %v214
  %v616 = vpop.f32.mrf.mxu0
  %v617 = vadd.f32 %v82, %v616
  %v618 = vpop.f32.mrf.mxu0
  %v619 = vadd.f32 %v87, %v618
  %620 = vmatmul.bf16.gmra.mxu0 %v217
  %v621 = vpop.f32.mrf.mxu0
  %v622 = vadd.f32 %v92, %v621
  %v623 = vpop.f32.mrf.mxu0
  %v624 = vadd.f32 %v97, %v623
  %625 = vmatmul.bf16.gmra.mxu0 %v220
  %v626 = vpop.f32.mrf.mxu0
  %v627 = vadd.f32 %v102, %v626
  %v628 = vpop.f32.mrf.mxu0
  %v629 = vadd.f32 %v107, %v628
  %630 = vmatmul.bf16.gmra.mxu0 %v223
  %v631 = vpop.f32.mrf.mxu0
  %v632 = vadd.f32 %v112, %v631
  %v633 = vpop.f32.mrf.mxu0
  %v634 = vadd.f32 %v117, %v633
  %635 = vmatmul.bf16.gmra.mxu0 %v226
  %v636 = vpop.f32.mrf.mxu0
  %v637 = vadd.f32 %v122, %v636
  %v638 = vpop.f32.mrf.mxu0
  %v639 = vadd.f32 %v127, %v638
  %640 = vmatmul.bf16.gmra.mxu0 %v229
  %v641 = vpop.f32.mrf.mxu0
  %v642 = vadd.f32 %v132, %v641
  %v643 = vpop.f32.mrf.mxu0
  %v644 = vadd.f32 %v137, %v643
  %645 = vmatmul.bf16.gmra.mxu0 %v232
  %v646 = vpop.f32.mrf.mxu0
  %v647 = vadd.f32 %v142, %v646
  %v648 = vpop.f32.mrf.mxu0
  %v649 = vadd.f32 %v147, %v648
  %650 = vdwg.mxu0
  %v651 = vmax.f32 %v269, 0.0
  %v652 = vmax.f32 %v318, 0.0
  %v653 = vmax.f32 %v367, 0.0
  %v654 = vmax.f32 %v416, 0.0
  %v655 = vmax.f32 %v465, 0.0
  %v656 = vmax.f32 %v514, 0.0
  %v657 = vmax.f32 %v563, 0.0
  %v658 = vmax.f32 %v612, 0.0
  %v659 = vmax.f32 %v271, 0.0
  %v660 = vmax.f32 %v320, 0.0
  %v661 = vmax.f32 %v369, 0.0
  %v662 = vmax.f32 %v418, 0.0
  %v663 = vmax.f32 %v467, 0.0
  %v664 = vmax.f32 %v516, 0.0
  %v665 = vmax.f32 %v565, 0.0
  %v666 = vmax.f32 %v614, 0.0
  %v667 = vmax.f32 %v274, 0.0
  %v668 = vmax.f32 %v323, 0.0
  %v669 = vmax.f32 %v372, 0.0
  %v670 = vmax.f32 %v421, 0.0
  %v671 = vmax.f32 %v470, 0.0
  %v672 = vmax.f32 %v519, 0.0
  %v673 = vmax.f32 %v568, 0.0
  %v674 = vmax.f32 %v617, 0.0
  %v675 = vmax.f32 %v276, 0.0
  %v676 = vmax.f32 %v325, 0.0
  %v677 = vmax.f32 %v374, 0.0
  %v678 = vmax.f32 %v423, 0.0
  %v679 = vmax.f32 %v472, 0.0
  %v680 = vmax.f32 %v521, 0.0
  %v681 = vmax.f32 %v570, 0.0
  %v682 = vmax.f32 %v619, 0.0
  %v683 = vmax.f32 %v279, 0.0
  %v684 = vmax.f32 %v328, 0.0
  %v685 = vmax.f32 %v377, 0.0
  %v686 = vmax.f32 %v426, 0.0
  %v687 = vmax.f32 %v475, 0.0
  %v688 = vmax.f32 %v524, 0.0
  %v689 = vmax.f32 %v573, 0.0
  %v690 = vmax.f32 %v622, 0.0
  %v691 = vmax.f32 %v281, 0.0
  %v692 = vmax.f32 %v330, 0.0
  %v693 = vmax.f32 %v379, 0.0
  %v694 = vmax.f32 %v428, 0.0
  %v695 = vmax.f32 %v477, 0.0
  %v696 = vmax.f32 %v526, 0.0
  %v697 = vmax.f32 %v575, 0.0
  %v698 = vmax.f32 %v624, 0.0
  %v699 = vmax.f32 %v284, 0.0
  %v700 = vmax.f32 %v333, 0.0
  %v701 = vmax.f32 %v382, 0.0
  %v702 = vmax.f32 %v431, 0.0
  %v703 = vmax.f32 %v480, 0.0
  %v704 = vmax.f32 %v529, 0.0
  %v705 = vmax.f32 %v578, 0.0
  %v706 = vmax.f32 %v627, 0.0
  %v707 = vmax.f32 %v286, 0.0
  %v708 = vmax.f32 %v335, 0.0
  %v709 = vmax.f32 %v384, 0.0
  %v710 = vmax.f32 %v433, 0.0
  %v711 = vmax.f32 %v482, 0.0
  %v712 = vmax.f32 %v531, 0.0
  %v713 = vmax.f32 %v580, 0.0
  %v714 = vmax.f32 %v629, 0.0
  %v715 = vmax.f32 %v289, 0.0
  %v716 = vmax.f32 %v338, 0.0
  %v717 = vmax.f32 %v387, 0.0
  %v718 = vmax.f32 %v436, 0.0
  %v719 = vmax.f32 %v485, 0.0
  %v720 = vmax.f32 %v534, 0.0
  %v721 = vmax.f32 %v583, 0.0
  %v722 = vmax.f32 %v632, 0.0
  %v723 = vmax.f32 %v291, 0.0
  %v724 = vmax.f32 %v340, 0.0
  %v725 = vmax.f32 %v389, 0.0
  %v726 = vmax.f32 %v438, 0.0
  %v727 = vmax.f32 %v487, 0.0
  %v728 = vmax.f32 %v536, 0.0
  %v729 = vmax.f32 %v585, 0.0
  %v730 = vmax.f32 %v634, 0.0
  %v731 = vmax.f32 %v294, 0.0
  %v732 = vmax.f32 %v343, 0.0
  %v733 = vmax.f32 %v392, 0.0
  %v734 = vmax.f32 %v441, 0.0
  %v735 = vmax.f32 %v490, 0.0
  %v736 = vmax.f32 %v539, 0.0
  %v737 = vmax.f32 %v588, 0.0
  %v738 = vmax.f32 %v637, 0.0
  %v739 = vmax.f32 %v296, 0.0
  %v740 = vmax.f32 %v345, 0.0
  %v741 = vmax.f32 %v394, 0.0
  %v742 = vmax.f32 %v443, 0.0
  %v743 = vmax.f32 %v492, 0.0
  %v744 = vmax.f32 %v541, 0.0
  %v745 = vmax.f32 %v590, 0.0
  %v746 = vmax.f32 %v639, 0.0
  %v747 = vmax.f32 %v299, 0.0
  %v748 = vmax.f32 %v348, 0.0
  %v749 = vmax.f32 %v397, 0.0
  %v750 = vmax.f32 %v446, 0.0
  %v751 = vmax.f32 %v495, 0.0
  %v752 = vmax.f32 %v544, 0.0
  %v753 = vmax.f32 %v593, 0.0
  %v754 = vmax.f32 %v642, 0.0
  %v755 = vmax.f32 %v301, 0.0
  %v756 = vmax.f32 %v350, 0.0
  %v757 = vmax.f32 %v399, 0.0
  %v758 = vmax.f32 %v448, 0.0
  %v759 = vmax.f32 %v497, 0.0
  %v760 = vmax.f32 %v546, 0.0
  %v761 = vmax.f32 %v595, 0.0
  %v762 = vmax.f32 %v644, 0.0
  %v763 = vmax.f32 %v304, 0.0
  %v764 = vmax.f32 %v353, 0.0
  %v765 = vmax.f32 %v402, 0.0
  %v766 = vmax.f32 %v451, 0.0
  %v767 = vmax.f32 %v500, 0.0
  %v768 = vmax.f32 %v549, 0.0
  %v769 = vmax.f32 %v598, 0.0
  %v770 = vmax.f32 %v647, 0.0
  %v771 = vmax.f32 %v306, 0.0
  %v772 = vmax.f32 %v355, 0.0
  %v773 = vmax.f32 %v404, 0.0
  %v774 = vmax.f32 %v453, 0.0
  %v775 = vmax.f32 %v502, 0.0
  %v776 = vmax.f32 %v551, 0.0
  %v777 = vmax.f32 %v600, 0.0
  %v778 = vmax.f32 %v649, 0.0
  %v779 = vpack.c.bf16 %v659, %v651
  %v780 = vpack.c.bf16 %v660, %v652
  %v781 = vpack.c.bf16 %v661, %v653
  %v782 = vpack.c.bf16 %v662, %v654
  %v783 = vpack.c.bf16 %v663, %v655
  %v784 = vpack.c.bf16 %v664, %v656
  %v785 = vpack.c.bf16 %v665, %v657
  %v786 = vpack.c.bf16 %v666, %v658
  %v787 = vpack.c.bf16 %v675, %v667
  %v788 = vpack.c.bf16 %v676, %v668
  %v789 = vpack.c.bf16 %v677, %v669
  %v790 = vpack.c.bf16 %v678, %v670
  %v791 = vpack.c.bf16 %v679, %v671
  %v792 = vpack.c.bf16 %v680, %v672
  %v793 = vpack.c.bf16 %v681, %v673
  %v794 = vpack.c.bf16 %v682, %v674
  %v795 = vpack.c.bf16 %v691, %v683
  %v796 = vpack.c.bf16 %v692, %v684
  %v797 = vpack.c.bf16 %v693, %v685
  %v798 = vpack.c.bf16 %v694, %v686
  %v799 = vpack.c.bf16 %v695, %v687
  %v800 = vpack.c.bf16 %v696, %v688
  %v801 = vpack.c.bf16 %v697, %v689
  %v802 = vpack.c.bf16 %v698, %v690
  %v803 = vpack.c.bf16 %v707, %v699
  %v804 = vpack.c.bf16 %v708, %v700
  %v805 = vpack.c.bf16 %v709, %v701
  %v806 = vpack.c.bf16 %v710, %v702
  %v807 = vpack.c.bf16 %v711, %v703
  %v808 = vpack.c.bf16 %v712, %v704
  %v809 = vpack.c.bf16 %v713, %v705
  %v810 = vpack.c.bf16 %v714, %v706
  %v811 = vpack.c.bf16 %v723, %v715
  %v812 = vpack.c.bf16 %v724, %v716
  %v813 = vpack.c.bf16 %v725, %v717
  %v814 = vpack.c.bf16 %v726, %v718
  %v815 = vpack.c.bf16 %v727, %v719
  %v816 = vpack.c.bf16 %v728, %v720
  %v817 = vpack.c.bf16 %v729, %v721
  %v818 = vpack.c.bf16 %v730, %v722
  %v819 = vpack.c.bf16 %v739, %v731
  %v820 = vpack.c.bf16 %v740, %v732
  %v821 = vpack.c.bf16 %v741, %v733
  %v822 = vpack.c.bf16 %v742, %v734
  %v823 = vpack.c.bf16 %v743, %v735
  %v824 = vpack.c.bf16 %v744, %v736
  %v825 = vpack.c.bf16 %v745, %v737
  %v826 = vpack.c.bf16 %v746, %v738
  %v827 = vpack.c.bf16 %v755, %v747
  %v828 = vpack.c.bf16 %v756, %v748
  %v829 = vpack.c.bf16 %v757, %v749
  %v830 = vpack.c.bf16 %v758, %v750
  %v831 = vpack.c.bf16 %v759, %v751
  %v832 = vpack.c.bf16 %v760, %v752
  %v833 = vpack.c.bf16 %v761, %v753
  %v834 = vpack.c.bf16 %v762, %v754
  %v835 = vpack.c.bf16 %v771, %v763
  %v836 = vpack.c.bf16 %v772, %v764
  %v837 = vpack.c.bf16 %v773, %v765
  %v838 = vpack.c.bf16 %v774, %v766
  %v839 = vpack.c.bf16 %v775, %v767
  %v840 = vpack.c.bf16 %v776, %v768
  %v841 = vpack.c.bf16 %v777, %v769
  %v842 = vpack.c.bf16 %v778, %v770
  %v843 = vld [vmem:[%s3] sm:$0xf]
  %v844 = vld [vmem:[%s3 + $0x4] sm:$0xf]
  %v845 = vld [vmem:[%s3 + $0x8] sm:$0xf]
  %v846 = vld [vmem:[%s3 + $0xc] sm:$0xf]
  %v847 = vld [vmem:[%s3 + $0x10] sm:$0xf]
  %v848 = vld [vmem:[%s3 + $0x14] sm:$0xf]
  %v849 = vld [vmem:[%s3 + $0x18] sm:$0xf]
  %v850 = vld [vmem:[%s3 + $0x1c] sm:$0xf]
  %v851 = vld [vmem:[%s3 + $0x20] sm:$0xf]
  %v852 = vld [vmem:[%s3 + $0x24] sm:$0xf]
  %v853 = vld [vmem:[%s3 + $0x28] sm:$0xf]
  %v854 = vld [vmem:[%s3 + $0x2c] sm:$0xf]
  %v855 = vld [vmem:[%s3 + $0x30] sm:$0xf]
  %v856 = vld [vmem:[%s3 + $0x34] sm:$0xf]
  %v857 = vld [vmem:[%s3 + $0x38] sm:$0xf]
  %v858 = vld [vmem:[%s3 + $0x3c] sm:$0xf]
  %v859 = vld [vmem:[%s4] sm:$0xff]
  %v860 = vld [vmem:[%s4 + $0x8] sm:$0xff]
  %v861 = vld [vmem:[%s4 + $0x10] sm:$0xff]
  %v862 = vld [vmem:[%s4 + $0x18] sm:$0xff]
  %v863 = vld [vmem:[%s4 + $0x20] sm:$0xff]
  %v864 = vld [vmem:[%s4 + $0x28] sm:$0xff]
  %v865 = vld [vmem:[%s4 + $0x30] sm:$0xff]
  %v866 = vld [vmem:[%s4 + $0x38] sm:$0xff]
  %v867 = vld [vmem:[%s4 + $0x40] sm:$0xff]
  %v868 = vld [vmem:[%s4 + $0x48] sm:$0xff]
  %v869 = vld [vmem:[%s4 + $0x50] sm:$0xff]
  %v870 = vld [vmem:[%s4 + $0x58] sm:$0xff]
  %v871 = vld [vmem:[%s4 + $0x60] sm:$0xff]
  %v872 = vld [vmem:[%s4 + $0x68] sm:$0xff]
  %v873 = vld [vmem:[%s4 + $0x70] sm:$0xff]
  %v874 = vld [vmem:[%s4 + $0x78] sm:$0xff]
  %876 = vset.pattern.permute.xlu0 0
  %877 = vperm.xlu0 %876, %v859
  %v878 = vpop.permute.xlu0 %877
  %881 = vset.pattern.permute.xlu0 0
  %882 = vperm.xlu0 %881, %v860
  %v883 = vpop.permute.xlu0 %882
  %886 = vset.pattern.permute.xlu0 0
  %887 = vperm.xlu0 %886, %v861
  %v888 = vpop.permute.xlu0 %887
  %891 = vset.pattern.permute.xlu0 0
  %892 = vperm.xlu0 %891, %v862
  %v893 = vpop.permute.xlu0 %892
  %896 = vset.pattern.permute.xlu0 0
  %897 = vperm.xlu0 %896, %v863
  %v898 = vpop.permute.xlu0 %897
  %901 = vset.pattern.permute.xlu0 0
  %902 = vperm.xlu0 %901, %v864
  %v903 = vpop.permute.xlu0 %902
  %906 = vset.pattern.permute.xlu0 0
  %907 = vperm.xlu0 %906, %v865
  %v908 = vpop.permute.xlu0 %907
  %911 = vset.pattern.permute.xlu0 0
  %912 = vperm.xlu0 %911, %v866
  %v913 = vpop.permute.xlu0 %912
  %916 = vset.pattern.permute.xlu0 0
  %917 = vperm.xlu0 %916, %v867
  %v918 = vpop.permute.xlu0 %917
  %921 = vset.pattern.permute.xlu0 0
  %922 = vperm.xlu0 %921, %v868
  %v923 = vpop.permute.xlu0 %922
  %926 = vset.pattern.permute.xlu0 0
  %927 = vperm.xlu0 %926, %v869
  %v928 = vpop.permute.xlu0 %927
  %931 = vset.pattern.permute.xlu0 0
  %932 = vperm.xlu0 %931, %v870
  %v933 = vpop.permute.xlu0 %932
  %936 = vset.pattern.permute.xlu0 0
  %937 = vperm.xlu0 %936, %v871
  %v938 = vpop.permute.xlu0 %937
  %941 = vset.pattern.permute.xlu0 0
  %942 = vperm.xlu0 %941, %v872
  %v943 = vpop.permute.xlu0 %942
  %946 = vset.pattern.permute.xlu0 0
  %947 = vperm.xlu0 %946, %v873
  %v948 = vpop.permute.xlu0 %947
  %951 = vset.pattern.permute.xlu0 0
  %952 = vperm.xlu0 %951, %v874
  %v953 = vpop.permute.xlu0 %952
  %v971 = vunpack.c.l.b16 %v843
  %v972 = vunpack.c.l.b16 %v844
  %v973 = vunpack.c.l.b16 %v845
  %v974 = vunpack.c.l.b16 %v846
  %v975 = vunpack.c.l.b16 %v847
  %v976 = vunpack.c.l.b16 %v848
  %v977 = vunpack.c.l.b16 %v849
  %v978 = vunpack.c.l.b16 %v850
  %v979 = vunpack.c.l.b16 %v851
  %v980 = vunpack.c.l.b16 %v852
  %v981 = vunpack.c.l.b16 %v853
  %v982 = vunpack.c.l.b16 %v854
  %v983 = vunpack.c.l.b16 %v855
  %v984 = vunpack.c.l.b16 %v856
  %v985 = vunpack.c.l.b16 %v857
  %v986 = vunpack.c.l.b16 %v858
  %v987 = vpack.c.b16 %v972, %v971
  %v988 = vpack.c.b16 %v974, %v973
  %v989 = vpack.c.b16 %v976, %v975
  %v990 = vpack.c.b16 %v978, %v977
  %v991 = vpack.c.b16 %v980, %v979
  %v992 = vpack.c.b16 %v982, %v981
  %v993 = vpack.c.b16 %v984, %v983
  %v994 = vpack.c.b16 %v986, %v985
  %1003 = vmatpush.bf16.msra.mxu0 %v835
  %1004 = vmatpush.bf16.msra.mxu0 %v827
  %1005 = vmatpush.bf16.msra.mxu0 %v819
  %1006 = vmatpush.bf16.msra.mxu0 %v811
  %1007 = vmatpush.bf16.msra.mxu0 %v803
  %1008 = vmatpush.bf16.msra.mxu0 %v795
  %1009 = vmatpush.bf16.msra.mxu0 %v787
  %1010 = vmatpush.bf16.msra.mxu0 %v779
  %1011 = vmatmul.bf16.gmra.mxu0 %v987
  %v1012 = vpop.f32.mrf.mxu0
  %v1013 = vadd.f32 %v878, %v1012
  %v1014 = vpop.f32.mrf.mxu0
  %v1015 = vadd.f32 %v883, %v1014
  %1016 = vmatmul.bf16.gmra.mxu0 %v988
  %v1017 = vpop.f32.mrf.mxu0
  %v1018 = vadd.f32 %v888, %v1017
  %v1019 = vpop.f32.mrf.mxu0
  %v1020 = vadd.f32 %v893, %v1019
  %1021 = vmatmul.bf16.gmra.mxu0 %v989
  %v1022 = vpop.f32.mrf.mxu0
  %v1023 = vadd.f32 %v898, %v1022
  %v1024 = vpop.f32.mrf.mxu0
  %v1025 = vadd.f32 %v903, %v1024
  %1026 = vmatmul.bf16.gmra.mxu0 %v990
  %v1027 = vpop.f32.mrf.mxu0
  %v1028 = vadd.f32 %v908, %v1027
  %v1029 = vpop.f32.mrf.mxu0
  %v1030 = vadd.f32 %v913, %v1029
  %1031 = vmatmul.bf16.gmra.mxu0 %v991
  %v1032 = vpop.f32.mrf.mxu0
  %v1033 = vadd.f32 %v918, %v1032
  %v1034 = vpop.f32.mrf.mxu0
  %v1035 = vadd.f32 %v923, %v1034
  %1036 = vmatmul.bf16.gmra.mxu0 %v992
  %v1037 = vpop.f32.mrf.mxu0
  %v1038 = vadd.f32 %v928, %v1037
  %v1039 = vpop.f32.mrf.mxu0
  %v1040 = vadd.f32 %v933, %v1039
  %1041 = vmatmul.bf16.gmra.mxu0 %v993
  %v1042 = vpop.f32.mrf.mxu0
  %v1043 = vadd.f32 %v938, %v1042
  %v1044 = vpop.f32.mrf.mxu0
  %v1045 = vadd.f32 %v943, %v1044
  %1046 = vmatmul.bf16.gmra.mxu0 %v994
  %v1047 = vpop.f32.mrf.mxu0
  %v1048 = vadd.f32 %v948, %v1047
  %v1049 = vpop.f32.mrf.mxu0
  %v1050 = vadd.f32 %v953, %v1049
  %1051 = vdwg.mxu0
  %1052 = vmatpush.bf16.msra.mxu0 %v836
  %1053 = vmatpush.bf16.msra.mxu0 %v828
  %1054 = vmatpush.bf16.msra.mxu0 %v820
  %1055 = vmatpush.bf16.msra.mxu0 %v812
  %1056 = vmatpush.bf16.msra.mxu0 %v804
  %1057 = vmatpush.bf16.msra.mxu0 %v796
  %1058 = vmatpush.bf16.msra.mxu0 %v788
  %1059 = vmatpush.bf16.msra.mxu0 %v780
  %1060 = vmatmul.bf16.gmra.mxu0 %v987
  %v1061 = vpop.f32.mrf.mxu0
  %v1062 = vadd.f32 %v878, %v1061
  %v1063 = vpop.f32.mrf.mxu0
  %v1064 = vadd.f32 %v883, %v1063
  %1065 = vmatmul.bf16.gmra.mxu0 %v988
  %v1066 = vpop.f32.mrf.mxu0
  %v1067 = vadd.f32 %v888, %v1066
  %v1068 = vpop.f32.mrf.mxu0
  %v1069 = vadd.f32 %v893, %v1068
  %1070 = vmatmul.bf16.gmra.mxu0 %v989
  %v1071 = vpop.f32.mrf.mxu0
  %v1072 = vadd.f32 %v898, %v1071
  %v1073 = vpop.f32.mrf.mxu0
  %v1074 = vadd.f32 %v903, %v1073
  %1075 = vmatmul.bf16.gmra.mxu0 %v990
  %v1076 = vpop.f32.mrf.mxu0
  %v1077 = vadd.f32 %v908, %v1076
  %v1078 = vpop.f32.mrf.mxu0
  %v1079 = vadd.f32 %v913, %v1078
  %1080 = vmatmul.bf16.gmra.mxu0 %v991
  %v1081 = vpop.f32.mrf.mxu0
  %v1082 = vadd.f32 %v918, %v1081
  %v1083 = vpop.f32.mrf.mxu0
  %v1084 = vadd.f32 %v923, %v1083
  %1085 = vmatmul.bf16.gmra.mxu0 %v992
  %v1086 = vpop.f32.mrf.mxu0
  %v1087 = vadd.f32 %v928, %v1086
  %v1088 = vpop.f32.mrf.mxu0
  %v1089 = vadd.f32 %v933, %v1088
  %1090 = vmatmul.bf16.gmra.mxu0 %v993
  %v1091 = vpop.f32.mrf.mxu0
  %v1092 = vadd.f32 %v938, %v1091
  %v1093 = vpop.f32.mrf.mxu0
  %v1094 = vadd.f32 %v943, %v1093
  %1095 = vmatmul.bf16.gmra.mxu0 %v994
  %v1096 = vpop.f32.mrf.mxu0
  %v1097 = vadd.f32 %v948, %v1096
  %v1098 = vpop.f32.mrf.mxu0
  %v1099 = vadd.f32 %v953, %v1098
  %1100 = vdwg.mxu0
  %1101 = vmatpush.bf16.msra.mxu0 %v837
  %1102 = vmatpush.bf16.msra.mxu0 %v829
  %1103 = vmatpush.bf16.msra.mxu0 %v821
  %1104 = vmatpush.bf16.msra.mxu0 %v813
  %1105 = vmatpush.bf16.msra.mxu0 %v805
  %1106 = vmatpush.bf16.msra.mxu0 %v797
  %1107 = vmatpush.bf16.msra.mxu0 %v789
  %1108 = vmatpush.bf16.msra.mxu0 %v781
  %1109 = vmatmul.bf16.gmra.mxu0 %v987
  %v1110 = vpop.f32.mrf.mxu0
  %v1111 = vadd.f32 %v878, %v1110
  %v1112 = vpop.f32.mrf.mxu0
  %v1113 = vadd.f32 %v883, %v1112
  %1114 = vmatmul.bf16.gmra.mxu0 %v988
  %v1115 = vpop.f32.mrf.mxu0
  %v1116 = vadd.f32 %v888, %v1115
  %v1117 = vpop.f32.mrf.mxu0
  %v1118 = vadd.f32 %v893, %v1117
  %1119 = vmatmul.bf16.gmra.mxu0 %v989
  %v1120 = vpop.f32.mrf.mxu0
  %v1121 = vadd.f32 %v898, %v1120
  %v1122 = vpop.f32.mrf.mxu0
  %v1123 = vadd.f32 %v903, %v1122
  %1124 = vmatmul.bf16.gmra.mxu0 %v990
  %v1125 = vpop.f32.mrf.mxu0
  %v1126 = vadd.f32 %v908, %v1125
  %v1127 = vpop.f32.mrf.mxu0
  %v1128 = vadd.f32 %v913, %v1127
  %1129 = vmatmul.bf16.gmra.mxu0 %v991
  %v1130 = vpop.f32.mrf.mxu0
  %v1131 = vadd.f32 %v918, %v1130
  %v1132 = vpop.f32.mrf.mxu0
  %v1133 = vadd.f32 %v923, %v1132
  %1134 = vmatmul.bf16.gmra.mxu0 %v992
  %v1135 = vpop.f32.mrf.mxu0
  %v1136 = vadd.f32 %v928, %v1135
  %v1137 = vpop.f32.mrf.mxu0
  %v1138 = vadd.f32 %v933, %v1137
  %1139 = vmatmul.bf16.gmra.mxu0 %v993
  %v1140 = vpop.f32.mrf.mxu0
  %v1141 = vadd.f32 %v938, %v1140
  %v1142 = vpop.f32.mrf.mxu0
  %v1143 = vadd.f32 %v943, %v1142
  %1144 = vmatmul.bf16.gmra.mxu0 %v994
  %v1145 = vpop.f32.mrf.mxu0
  %v1146 = vadd.f32 %v948, %v1145
  %v1147 = vpop.f32.mrf.mxu0
  %v1148 = vadd.f32 %v953, %v1147
  %1149 = vdwg.mxu0
  %1150 = vmatpush.bf16.msra.mxu0 %v838
  %1151 = vmatpush.bf16.msra.mxu0 %v830
  %1152 = vmatpush.bf16.msra.mxu0 %v822
  %1153 = vmatpush.bf16.msra.mxu0 %v814
  %1154 = vmatpush.bf16.msra.mxu0 %v806
  %1155 = vmatpush.bf16.msra.mxu0 %v798
  %1156 = vmatpush.bf16.msra.mxu0 %v790
  %1157 = vmatpush.bf16.msra.mxu0 %v782
  %1158 = vmatmul.bf16.gmra.mxu0 %v987
  %v1159 = vpop.f32.mrf.mxu0
  %v1160 = vadd.f32 %v878, %v1159
  %v1161 = vpop.f32.mrf.mxu0
  %v1162 = vadd.f32 %v883, %v1161
  %1163 = vmatmul.bf16.gmra.mxu0 %v988
  %v1164 = vpop.f32.mrf.mxu0
  %v1165 = vadd.f32 %v888, %v1164
  %v1166 = vpop.f32.mrf.mxu0
  %v1167 = vadd.f32 %v893, %v1166
  %1168 = vmatmul.bf16.gmra.mxu0 %v989
  %v1169 = vpop.f32.mrf.mxu0
  %v1170 = vadd.f32 %v898, %v1169
  %v1171 = vpop.f32.mrf.mxu0
  %v1172 = vadd.f32 %v903, %v1171
  %1173 = vmatmul.bf16.gmra.mxu0 %v990
  %v1174 = vpop.f32.mrf.mxu0
  %v1175 = vadd.f32 %v908, %v1174
  %v1176 = vpop.f32.mrf.mxu0
  %v1177 = vadd.f32 %v913, %v1176
  %1178 = vmatmul.bf16.gmra.mxu0 %v991
  %v1179 = vpop.f32.mrf.mxu0
  %v1180 = vadd.f32 %v918, %v1179
  %v1181 = vpop.f32.mrf.mxu0
  %v1182 = vadd.f32 %v923, %v1181
  %1183 = vmatmul.bf16.gmra.mxu0 %v992
  %v1184 = vpop.f32.mrf.mxu0
  %v1185 = vadd.f32 %v928, %v1184
  %v1186 = vpop.f32.mrf.mxu0
  %v1187 = vadd.f32 %v933, %v1186
  %1188 = vmatmul.bf16.gmra.mxu0 %v993
  %v1189 = vpop.f32.mrf.mxu0
  %v1190 = vadd.f32 %v938, %v1189
  %v1191 = vpop.f32.mrf.mxu0
  %v1192 = vadd.f32 %v943, %v1191
  %1193 = vmatmul.bf16.gmra.mxu0 %v994
  %v1194 = vpop.f32.mrf.mxu0
  %v1195 = vadd.f32 %v948, %v1194
  %v1196 = vpop.f32.mrf.mxu0
  %v1197 = vadd.f32 %v953, %v1196
  %1198 = vdwg.mxu0
  %1199 = vmatpush.bf16.msra.mxu0 %v839
  %1200 = vmatpush.bf16.msra.mxu0 %v831
  %1201 = vmatpush.bf16.msra.mxu0 %v823
  %1202 = vmatpush.bf16.msra.mxu0 %v815
  %1203 = vmatpush.bf16.msra.mxu0 %v807
  %1204 = vmatpush.bf16.msra.mxu0 %v799
  %1205 = vmatpush.bf16.msra.mxu0 %v791
  %1206 = vmatpush.bf16.msra.mxu0 %v783
  %1207 = vmatmul.bf16.gmra.mxu0 %v987
  %v1208 = vpop.f32.mrf.mxu0
  %v1209 = vadd.f32 %v878, %v1208
  %v1210 = vpop.f32.mrf.mxu0
  %v1211 = vadd.f32 %v883, %v1210
  %1212 = vmatmul.bf16.gmra.mxu0 %v988
  %v1213 = vpop.f32.mrf.mxu0
  %v1214 = vadd.f32 %v888, %v1213
  %v1215 = vpop.f32.mrf.mxu0
  %v1216 = vadd.f32 %v893, %v1215
  %1217 = vmatmul.bf16.gmra.mxu0 %v989
  %v1218 = vpop.f32.mrf.mxu0
  %v1219 = vadd.f32 %v898, %v1218
  %v1220 = vpop.f32.mrf.mxu0
  %v1221 = vadd.f32 %v903, %v1220
  %1222 = vmatmul.bf16.gmra.mxu0 %v990
  %v1223 = vpop.f32.mrf.mxu0
  %v1224 = vadd.f32 %v908, %v1223
  %v1225 = vpop.f32.mrf.mxu0
  %v1226 = vadd.f32 %v913, %v1225
  %1227 = vmatmul.bf16.gmra.mxu0 %v991
  %v1228 = vpop.f32.mrf.mxu0
  %v1229 = vadd.f32 %v918, %v1228
  %v1230 = vpop.f32.mrf.mxu0
  %v1231 = vadd.f32 %v923, %v1230
  %1232 = vmatmul.bf16.gmra.mxu0 %v992
  %v1233 = vpop.f32.mrf.mxu0
  %v1234 = vadd.f32 %v928, %v1233
  %v1235 = vpop.f32.mrf.mxu0
  %v1236 = vadd.f32 %v933, %v1235
  %1237 = vmatmul.bf16.gmra.mxu0 %v993
  %v1238 = vpop.f32.mrf.mxu0
  %v1239 = vadd.f32 %v938, %v1238
  %v1240 = vpop.f32.mrf.mxu0
  %v1241 = vadd.f32 %v943, %v1240
  %1242 = vmatmul.bf16.gmra.mxu0 %v994
  %v1243 = vpop.f32.mrf.mxu0
  %v1244 = vadd.f32 %v948, %v1243
  %v1245 = vpop.f32.mrf.mxu0
  %v1246 = vadd.f32 %v953, %v1245
  %1247 = vdwg.mxu0
  %1248 = vmatpush.bf16.msra.mxu0 %v840
  %1249 = vmatpush.bf16.msra.mxu0 %v832
  %1250 = vmatpush.bf16.msra.mxu0 %v824
  %1251 = vmatpush.bf16.msra.mxu0 %v816
  %1252 = vmatpush.bf16.msra.mxu0 %v808
  %1253 = vmatpush.bf16.msra.mxu0 %v800
  %1254 = vmatpush.bf16.msra.mxu0 %v792
  %1255 = vmatpush.bf16.msra.mxu0 %v784
  %1256 = vmatmul.bf16.gmra.mxu0 %v987
  %v1257 = vpop.f32.mrf.mxu0
  %v1258 = vadd.f32 %v878, %v1257
  %v1259 = vpop.f32.mrf.mxu0
  %v1260 = vadd.f32 %v883, %v1259
  %1261 = vmatmul.bf16.gmra.mxu0 %v988
  %v1262 = vpop.f32.mrf.mxu0
  %v1263 = vadd.f32 %v888, %v1262
  %v1264 = vpop.f32.mrf.mxu0
  %v1265 = vadd.f32 %v893, %v1264
  %1266 = vmatmul.bf16.gmra.mxu0 %v989
  %v1267 = vpop.f32.mrf.mxu0
  %v1268 = vadd.f32 %v898, %v1267
  %v1269 = vpop.f32.mrf.mxu0
  %v1270 = vadd.f32 %v903, %v1269
  %1271 = vmatmul.bf16.gmra.mxu0 %v990
  %v1272 = vpop.f32.mrf.mxu0
  %v1273 = vadd.f32 %v908, %v1272
  %v1274 = vpop.f32.mrf.mxu0
  %v1275 = vadd.f32 %v913, %v1274
  %1276 = vmatmul.bf16.gmra.mxu0 %v991
  %v1277 = vpop.f32.mrf.mxu0
  %v1278 = vadd.f32 %v918, %v1277
  %v1279 = vpop.f32.mrf.mxu0
  %v1280 = vadd.f32 %v923, %v1279
  %1281 = vmatmul.bf16.gmra.mxu0 %v992
  %v1282 = vpop.f32.mrf.mxu0
  %v1283 = vadd.f32 %v928, %v1282
  %v1284 = vpop.f32.mrf.mxu0
  %v1285 = vadd.f32 %v933, %v1284
  %1286 = vmatmul.bf16.gmra.mxu0 %v993
  %v1287 = vpop.f32.mrf.mxu0
  %v1288 = vadd.f32 %v938, %v1287
  %v1289 = vpop.f32.mrf.mxu0
  %v1290 = vadd.f32 %v943, %v1289
  %1291 = vmatmul.bf16.gmra.mxu0 %v994
  %v1292 = vpop.f32.mrf.mxu0
  %v1293 = vadd.f32 %v948, %v1292
  %v1294 = vpop.f32.mrf.mxu0
  %v1295 = vadd.f32 %v953, %v1294
  %1296 = vdwg.mxu0
  %1297 = vmatpush.bf16.msra.mxu0 %v841
  %1298 = vmatpush.bf16.msra.mxu0 %v833
  %1299 = vmatpush.bf16.msra.mxu0 %v825
  %1300 = vmatpush.bf16.msra.mxu0 %v817
  %1301 = vmatpush.bf16.msra.mxu0 %v809
  %1302 = vmatpush.bf16.msra.mxu0 %v801
  %1303 = vmatpush.bf16.msra.mxu0 %v793
  %1304 = vmatpush.bf16.msra.mxu0 %v785
  %1305 = vmatmul.bf16.gmra.mxu0 %v987
  %v1306 = vpop.f32.mrf.mxu0
  %v1307 = vadd.f32 %v878, %v1306
  %v1308 = vpop.f32.mrf.mxu0
  %v1309 = vadd.f32 %v883, %v1308
  %1310 = vmatmul.bf16.gmra.mxu0 %v988
  %v1311 = vpop.f32.mrf.mxu0
  %v1312 = vadd.f32 %v888, %v1311
  %v1313 = vpop.f32.mrf.mxu0
  %v1314 = vadd.f32 %v893, %v1313
  %1315 = vmatmul.bf16.gmra.mxu0 %v989
  %v1316 = vpop.f32.mrf.mxu0
  %v1317 = vadd.f32 %v898, %v1316
  %v1318 = vpop.f32.mrf.mxu0
  %v1319 = vadd.f32 %v903, %v1318
  %1320 = vmatmul.bf16.gmra.mxu0 %v990
  %v1321 = vpop.f32.mrf.mxu0
  %v1322 = vadd.f32 %v908, %v1321
  %v1323 = vpop.f32.mrf.mxu0
  %v1324 = vadd.f32 %v913, %v1323
  %1325 = vmatmul.bf16.gmra.mxu0 %v991
  %v1326 = vpop.f32.mrf.mxu0
  %v1327 = vadd.f32 %v918, %v1326
  %v1328 = vpop.f32.mrf.mxu0
  %v1329 = vadd.f32 %v923, %v1328
  %1330 = vmatmul.bf16.gmra.mxu0 %v992
  %v1331 = vpop.f32.mrf.mxu0
  %v1332 = vadd.f32 %v928, %v1331
  %v1333 = vpop.f32.mrf.mxu0
  %v1334 = vadd.f32 %v933, %v1333
  %1335 = vmatmul.bf16.gmra.mxu0 %v993
  %v1336 = vpop.f32.mrf.mxu0
  %v1337 = vadd.f32 %v938, %v1336
  %v1338 = vpop.f32.mrf.mxu0
  %v1339 = vadd.f32 %v943, %v1338
  %1340 = vmatmul.bf16.gmra.mxu0 %v994
  %v1341 = vpop.f32.mrf.mxu0
  %v1342 = vadd.f32 %v948, %v1341
  %v1343 = vpop.f32.mrf.mxu0
  %v1344 = vadd.f32 %v953, %v1343
  %1345 = vdwg.mxu0
  %1346 = vmatpush.bf16.msra.mxu0 %v842
  %1347 = vmatpush.bf16.msra.mxu0 %v834
  %1348 = vmatpush.bf16.msra.mxu0 %v826
  %1349 = vmatpush.bf16.msra.mxu0 %v818
  %1350 = vmatpush.bf16.msra.mxu0 %v810
  %1351 = vmatpush.bf16.msra.mxu0 %v802
  %1352 = vmatpush.bf16.msra.mxu0 %v794
  %1353 = vmatpush.bf16.msra.mxu0 %v786
  %1354 = vmatmul.bf16.gmra.mxu0 %v987
  %v1355 = vpop.f32.mrf.mxu0
  %v1356 = vadd.f32 %v878, %v1355
  %v1357 = vpop.f32.mrf.mxu0
  %v1358 = vadd.f32 %v883, %v1357
  %1359 = vmatmul.bf16.gmra.mxu0 %v988
  %v1360 = vpop.f32.mrf.mxu0
  %v1361 = vadd.f32 %v888, %v1360
  %v1362 = vpop.f32.mrf.mxu0
  %v1363 = vadd.f32 %v893, %v1362
  %1364 = vmatmul.bf16.gmra.mxu0 %v989
  %v1365 = vpop.f32.mrf.mxu0
  %v1366 = vadd.f32 %v898, %v1365
  %v1367 = vpop.f32.mrf.mxu0
  %v1368 = vadd.f32 %v903, %v1367
  %1369 = vmatmul.bf16.gmra.mxu0 %v990
  %v1370 = vpop.f32.mrf.mxu0
  %v1371 = vadd.f32 %v908, %v1370
  %v1372 = vpop.f32.mrf.mxu0
  %v1373 = vadd.f32 %v913, %v1372
  %1374 = vmatmul.bf16.gmra.mxu0 %v991
  %v1375 = vpop.f32.mrf.mxu0
  %v1376 = vadd.f32 %v918, %v1375
  %v1377 = vpop.f32.mrf.mxu0
  %v1378 = vadd.f32 %v923, %v1377
  %1379 = vmatmul.bf16.gmra.mxu0 %v992
  %v1380 = vpop.f32.mrf.mxu0
  %v1381 = vadd.f32 %v928, %v1380
  %v1382 = vpop.f32.mrf.mxu0
  %v1383 = vadd.f32 %v933, %v1382
  %1384 = vmatmul.bf16.gmra.mxu0 %v993
  %v1385 = vpop.f32.mrf.mxu0
  %v1386 = vadd.f32 %v938, %v1385
  %v1387 = vpop.f32.mrf.mxu0
  %v1388 = vadd.f32 %v943, %v1387
  %1389 = vmatmul.bf16.gmra.mxu0 %v994
  %v1390 = vpop.f32.mrf.mxu0
  %v1391 = vadd.f32 %v948, %v1390
  %v1392 = vpop.f32.mrf.mxu0
  %v1393 = vadd.f32 %v953, %v1392
  %1394 = vdwg.mxu0
  %v1395 = vmax.f32 %v1013, 0.0
  %v1396 = vmax.f32 %v1062, 0.0
  %v1397 = vmax.f32 %v1111, 0.0
  %v1398 = vmax.f32 %v1160, 0.0
  %v1399 = vmax.f32 %v1209, 0.0
  %v1400 = vmax.f32 %v1258, 0.0
  %v1401 = vmax.f32 %v1307, 0.0
  %v1402 = vmax.f32 %v1356, 0.0
  %v1403 = vmax.f32 %v1015, 0.0
  %v1404 = vmax.f32 %v1064, 0.0
  %v1405 = vmax.f32 %v1113, 0.0
  %v1406 = vmax.f32 %v1162, 0.0
  %v1407 = vmax.f32 %v1211, 0.0
  %v1408 = vmax.f32 %v1260, 0.0
  %v1409 = vmax.f32 %v1309, 0.0
  %v1410 = vmax.f32 %v1358, 0.0
  %v1411 = vmax.f32 %v1018, 0.0
  %v1412 = vmax.f32 %v1067, 0.0
  %v1413 = vmax.f32 %v1116, 0.0
  %v1414 = vmax.f32 %v1165, 0.0
  %v1415 = vmax.f32 %v1214, 0.0
  %v1416 = vmax.f32 %v1263, 0.0
  %v1417 = vmax.f32 %v1312, 0.0
  %v1418 = vmax.f32 %v1361, 0.0
  %v1419 = vmax.f32 %v1020, 0.0
  %v1420 = vmax.f32 %v1069, 0.0
  %v1421 = vmax.f32 %v1118, 0.0
  %v1422 = vmax.f32 %v1167, 0.0
  %v1423 = vmax.f32 %v1216, 0.0
  %v1424 = vmax.f32 %v1265, 0.0
  %v1425 = vmax.f32 %v1314, 0.0
  %v1426 = vmax.f32 %v1363, 0.0
  %v1427 = vmax.f32 %v1023, 0.0
  %v1428 = vmax.f32 %v1072, 0.0
  %v1429 = vmax.f32 %v1121, 0.0
  %v1430 = vmax.f32 %v1170, 0.0
  %v1431 = vmax.f32 %v1219, 0.0
  %v1432 = vmax.f32 %v1268, 0.0
  %v1433 = vmax.f32 %v1317, 0.0
  %v1434 = vmax.f32 %v1366, 0.0
  %v1435 = vmax.f32 %v1025, 0.0
  %v1436 = vmax.f32 %v1074, 0.0
  %v1437 = vmax.f32 %v1123, 0.0
  %v1438 = vmax.f32 %v1172, 0.0
  %v1439 = vmax.f32 %v1221, 0.0
  %v1440 = vmax.f32 %v1270, 0.0
  %v1441 = vmax.f32 %v1319, 0.0
  %v1442 = vmax.f32 %v1368, 0.0
  %v1443 = vmax.f32 %v1028, 0.0
  %v1444 = vmax.f32 %v1077, 0.0
  %v1445 = vmax.f32 %v1126, 0.0
  %v1446 = vmax.f32 %v1175, 0.0
  %v1447 = vmax.f32 %v1224, 0.0
  %v1448 = vmax.f32 %v1273, 0.0
  %v1449 = vmax.f32 %v1322, 0.0
  %v1450 = vmax.f32 %v1371, 0.0
  %v1451 = vmax.f32 %v1030, 0.0
  %v1452 = vmax.f32 %v1079, 0.0
  %v1453 = vmax.f32 %v1128, 0.0
  %v1454 = vmax.f32 %v1177, 0.0
  %v1455 = vmax.f32 %v1226, 0.0
  %v1456 = vmax.f32 %v1275, 0.0
  %v1457 = vmax.f32 %v1324, 0.0
  %v1458 = vmax.f32 %v1373, 0.0
  %v1459 = vmax.f32 %v1033, 0.0
  %v1460 = vmax.f32 %v1082, 0.0
  %v1461 = vmax.f32 %v1131, 0.0
  %v1462 = vmax.f32 %v1180, 0.0
  %v1463 = vmax.f32 %v1229, 0.0
  %v1464 = vmax.f32 %v1278, 0.0
  %v1465 = vmax.f32 %v1327, 0.0
  %v1466 = vmax.f32 %v1376, 0.0
  %v1467 = vmax.f32 %v1035, 0.0
  %v1468 = vmax.f32 %v1084, 0.0
  %v1469 = vmax.f32 %v1133, 0.0
  %v1470 = vmax.f32 %v1182, 0.0
  %v1471 = vmax.f32 %v1231, 0.0
  %v1472 = vmax.f32 %v1280, 0.0
  %v1473 = vmax.f32 %v1329, 0.0
  %v1474 = vmax.f32 %v1378, 0.0
  %v1475 = vmax.f32 %v1038, 0.0
  %v1476 = vmax.f32 %v1087, 0.0
  %v1477 = vmax.f32 %v1136, 0.0
  %v1478 = vmax.f32 %v1185, 0.0
  %v1479 = vmax.f32 %v1234, 0.0
  %v1480 = vmax.f32 %v1283, 0.0
  %v1481 = vmax.f32 %v1332, 0.0
  %v1482 = vmax.f32 %v1381, 0.0
  %v1483 = vmax.f32 %v1040, 0.0
  %v1484 = vmax.f32 %v1089, 0.0
  %v1485 = vmax.f32 %v1138, 0.0
  %v1486 = vmax.f32 %v1187, 0.0
  %v1487 = vmax.f32 %v1236, 0.0
  %v1488 = vmax.f32 %v1285, 0.0
  %v1489 = vmax.f32 %v1334, 0.0
  %v1490 = vmax.f32 %v1383, 0.0
  %v1491 = vmax.f32 %v1043, 0.0
  %v1492 = vmax.f32 %v1092, 0.0
  %v1493 = vmax.f32 %v1141, 0.0
  %v1494 = vmax.f32 %v1190, 0.0
  %v1495 = vmax.f32 %v1239, 0.0
  %v1496 = vmax.f32 %v1288, 0.0
  %v1497 = vmax.f32 %v1337, 0.0
  %v1498 = vmax.f32 %v1386, 0.0
  %v1499 = vmax.f32 %v1045, 0.0
  %v1500 = vmax.f32 %v1094, 0.0
  %v1501 = vmax.f32 %v1143, 0.0
  %v1502 = vmax.f32 %v1192, 0.0
  %v1503 = vmax.f32 %v1241, 0.0
  %v1504 = vmax.f32 %v1290, 0.0
  %v1505 = vmax.f32 %v1339, 0.0
  %v1506 = vmax.f32 %v1388, 0.0
  %v1507 = vmax.f32 %v1048, 0.0
  %v1508 = vmax.f32 %v1097, 0.0
  %v1509 = vmax.f32 %v1146, 0.0
  %v1510 = vmax.f32 %v1195, 0.0
  %v1511 = vmax.f32 %v1244, 0.0
  %v1512 = vmax.f32 %v1293, 0.0
  %v1513 = vmax.f32 %v1342, 0.0
  %v1514 = vmax.f32 %v1391, 0.0
  %v1515 = vmax.f32 %v1050, 0.0
  %v1516 = vmax.f32 %v1099, 0.0
  %v1517 = vmax.f32 %v1148, 0.0
  %v1518 = vmax.f32 %v1197, 0.0
  %v1519 = vmax.f32 %v1246, 0.0
  %v1520 = vmax.f32 %v1295, 0.0
  %v1521 = vmax.f32 %v1344, 0.0
  %v1522 = vmax.f32 %v1393, 0.0
  %v1523 = vpack.c.bf16 %v1403, %v1395
  %v1524 = vpack.c.bf16 %v1404, %v1396
  %v1525 = vpack.c.bf16 %v1405, %v1397
  %v1526 = vpack.c.bf16 %v1406, %v1398
  %v1527 = vpack.c.bf16 %v1407, %v1399
  %v1528 = vpack.c.bf16 %v1408, %v1400
  %v1529 = vpack.c.bf16 %v1409, %v1401
  %v1530 = vpack.c.bf16 %v1410, %v1402
  %v1531 = vpack.c.bf16 %v1419, %v1411
  %v1532 = vpack.c.bf16 %v1420, %v1412
  %v1533 = vpack.c.bf16 %v1421, %v1413
  %v1534 = vpack.c.bf16 %v1422, %v1414
  %v1535 = vpack.c.bf16 %v1423, %v1415
  %v1536 = vpack.c.bf16 %v1424, %v1416
  %v1537 = vpack.c.bf16 %v1425, %v1417
  %v1538 = vpack.c.bf16 %v1426, %v1418
  %v1539 = vpack.c.bf16 %v1435, %v1427
  %v1540 = vpack.c.bf16 %v1436, %v1428
  %v1541 = vpack.c.bf16 %v1437, %v1429
  %v1542 = vpack.c.bf16 %v1438, %v1430
  %v1543 = vpack.c.bf16 %v1439, %v1431
  %v1544 = vpack.c.bf16 %v1440, %v1432
  %v1545 = vpack.c.bf16 %v1441, %v1433
  %v1546 = vpack.c.bf16 %v1442, %v1434
  %v1547 = vpack.c.bf16 %v1451, %v1443
  %v1548 = vpack.c.bf16 %v1452, %v1444
  %v1549 = vpack.c.bf16 %v1453, %v1445
  %v1550 = vpack.c.bf16 %v1454, %v1446
  %v1551 = vpack.c.bf16 %v1455, %v1447
  %v1552 = vpack.c.bf16 %v1456, %v1448
  %v1553 = vpack.c.bf16 %v1457, %v1449
  %v1554 = vpack.c.bf16 %v1458, %v1450
  %v1555 = vpack.c.bf16 %v1467, %v1459
  %v1556 = vpack.c.bf16 %v1468, %v1460
  %v1557 = vpack.c.bf16 %v1469, %v1461
  %v1558 = vpack.c.bf16 %v1470, %v1462
  %v1559 = vpack.c.bf16 %v1471, %v1463
  %v1560 = vpack.c.bf16 %v1472, %v1464
  %v1561 = vpack.c.bf16 %v1473, %v1465
  %v1562 = vpack.c.bf16 %v1474, %v1466
  %v1563 = vpack.c.bf16 %v1483, %v1475
  %v1564 = vpack.c.bf16 %v1484, %v1476
  %v1565 = vpack.c.bf16 %v1485, %v1477
  %v1566 = vpack.c.bf16 %v1486, %v1478
  %v1567 = vpack.c.bf16 %v1487, %v1479
  %v1568 = vpack.c.bf16 %v1488, %v1480
  %v1569 = vpack.c.bf16 %v1489, %v1481
  %v1570 = vpack.c.bf16 %v1490, %v1482
  %v1571 = vpack.c.bf16 %v1499, %v1491
  %v1572 = vpack.c.bf16 %v1500, %v1492
  %v1573 = vpack.c.bf16 %v1501, %v1493
  %v1574 = vpack.c.bf16 %v1502, %v1494
  %v1575 = vpack.c.bf16 %v1503, %v1495
  %v1576 = vpack.c.bf16 %v1504, %v1496
  %v1577 = vpack.c.bf16 %v1505, %v1497
  %v1578 = vpack.c.bf16 %v1506, %v1498
  %v1579 = vpack.c.bf16 %v1515, %v1507
  %v1580 = vpack.c.bf16 %v1516, %v1508
  %v1581 = vpack.c.bf16 %v1517, %v1509
  %v1582 = vpack.c.bf16 %v1518, %v1510
  %v1583 = vpack.c.bf16 %v1519, %v1511
  %v1584 = vpack.c.bf16 %v1520, %v1512
  %v1585 = vpack.c.bf16 %v1521, %v1513
  %v1586 = vpack.c.bf16 %v1522, %v1514
  %v1587 = vld [vmem:[%s5] sm:$0xf]
  %v1588 = vld [vmem:[%s5 + $0x4] sm:$0xf]
  %v1589 = vld [vmem:[%s5 + $0x8] sm:$0xf]
  %v1590 = vld [vmem:[%s5 + $0xc] sm:$0xf]
  %v1591 = vld [vmem:[%s5 + $0x10] sm:$0xf]
  %v1592 = vld [vmem:[%s5 + $0x14] sm:$0xf]
  %v1593 = vld [vmem:[%s5 + $0x18] sm:$0xf]
  %v1594 = vld [vmem:[%s5 + $0x1c] sm:$0xf]
  %v1595 = vld [vmem:[%s5 + $0x20] sm:$0xf]
  %v1596 = vld [vmem:[%s5 + $0x24] sm:$0xf]
  %v1597 = vld [vmem:[%s5 + $0x28] sm:$0xf]
  %v1598 = vld [vmem:[%s5 + $0x2c] sm:$0xf]
  %v1599 = vld [vmem:[%s5 + $0x30] sm:$0xf]
  %v1600 = vld [vmem:[%s5 + $0x34] sm:$0xf]
  %v1601 = vld [vmem:[%s5 + $0x38] sm:$0xf]
  %v1602 = vld [vmem:[%s5 + $0x3c] sm:$0xf]
  %v1603 = vld [vmem:[%s6] sm:$0xff]
  %v1604 = vld [vmem:[%s6 + $0x8] sm:$0xff]
  %v1605 = vld [vmem:[%s6 + $0x10] sm:$0xff]
  %v1606 = vld [vmem:[%s6 + $0x18] sm:$0xff]
  %v1607 = vld [vmem:[%s6 + $0x20] sm:$0xff]
  %v1608 = vld [vmem:[%s6 + $0x28] sm:$0xff]
  %v1609 = vld [vmem:[%s6 + $0x30] sm:$0xff]
  %v1610 = vld [vmem:[%s6 + $0x38] sm:$0xff]
  %v1611 = vld [vmem:[%s6 + $0x40] sm:$0xff]
  %v1612 = vld [vmem:[%s6 + $0x48] sm:$0xff]
  %v1613 = vld [vmem:[%s6 + $0x50] sm:$0xff]
  %v1614 = vld [vmem:[%s6 + $0x58] sm:$0xff]
  %v1615 = vld [vmem:[%s6 + $0x60] sm:$0xff]
  %v1616 = vld [vmem:[%s6 + $0x68] sm:$0xff]
  %v1617 = vld [vmem:[%s6 + $0x70] sm:$0xff]
  %v1618 = vld [vmem:[%s6 + $0x78] sm:$0xff]
  %1620 = vset.pattern.permute.xlu0 0
  %1621 = vperm.xlu0 %1620, %v1603
  %v1622 = vpop.permute.xlu0 %1621
  %1625 = vset.pattern.permute.xlu0 0
  %1626 = vperm.xlu0 %1625, %v1604
  %v1627 = vpop.permute.xlu0 %1626
  %1630 = vset.pattern.permute.xlu0 0
  %1631 = vperm.xlu0 %1630, %v1605
  %v1632 = vpop.permute.xlu0 %1631
  %1635 = vset.pattern.permute.xlu0 0
  %1636 = vperm.xlu0 %1635, %v1606
  %v1637 = vpop.permute.xlu0 %1636
  %1640 = vset.pattern.permute.xlu0 0
  %1641 = vperm.xlu0 %1640, %v1607
  %v1642 = vpop.permute.xlu0 %1641
  %1645 = vset.pattern.permute.xlu0 0
  %1646 = vperm.xlu0 %1645, %v1608
  %v1647 = vpop.permute.xlu0 %1646
  %1650 = vset.pattern.permute.xlu0 0
  %1651 = vperm.xlu0 %1650, %v1609
  %v1652 = vpop.permute.xlu0 %1651
  %1655 = vset.pattern.permute.xlu0 0
  %1656 = vperm.xlu0 %1655, %v1610
  %v1657 = vpop.permute.xlu0 %1656
  %1660 = vset.pattern.permute.xlu0 0
  %1661 = vperm.xlu0 %1660, %v1611
  %v1662 = vpop.permute.xlu0 %1661
  %1665 = vset.pattern.permute.xlu0 0
  %1666 = vperm.xlu0 %1665, %v1612
  %v1667 = vpop.permute.xlu0 %1666
  %1670 = vset.pattern.permute.xlu0 0
  %1671 = vperm.xlu0 %1670, %v1613
  %v1672 = vpop.permute.xlu0 %1671
  %1675 = vset.pattern.permute.xlu0 0
  %1676 = vperm.xlu0 %1675, %v1614
  %v1677 = vpop.permute.xlu0 %1676
  %1680 = vset.pattern.permute.xlu0 0
  %1681 = vperm.xlu0 %1680, %v1615
  %v1682 = vpop.permute.xlu0 %1681
  %1685 = vset.pattern.permute.xlu0 0
  %1686 = vperm.xlu0 %1685, %v1616
  %v1687 = vpop.permute.xlu0 %1686
  %1690 = vset.pattern.permute.xlu0 0
  %1691 = vperm.xlu0 %1690, %v1617
  %v1692 = vpop.permute.xlu0 %1691
  %1695 = vset.pattern.permute.xlu0 0
  %1696 = vperm.xlu0 %1695, %v1618
  %v1697 = vpop.permute.xlu0 %1696
  %v1715 = vunpack.c.l.b16 %v1587
  %v1716 = vunpack.c.l.b16 %v1588
  %v1717 = vunpack.c.l.b16 %v1589
  %v1718 = vunpack.c.l.b16 %v1590
  %v1719 = vunpack.c.l.b16 %v1591
  %v1720 = vunpack.c.l.b16 %v1592
  %v1721 = vunpack.c.l.b16 %v1593
  %v1722 = vunpack.c.l.b16 %v1594
  %v1723 = vunpack.c.l.b16 %v1595
  %v1724 = vunpack.c.l.b16 %v1596
  %v1725 = vunpack.c.l.b16 %v1597
  %v1726 = vunpack.c.l.b16 %v1598
  %v1727 = vunpack.c.l.b16 %v1599
  %v1728 = vunpack.c.l.b16 %v1600
  %v1729 = vunpack.c.l.b16 %v1601
  %v1730 = vunpack.c.l.b16 %v1602
  %v1731 = vpack.c.b16 %v1716, %v1715
  %v1732 = vpack.c.b16 %v1718, %v1717
  %v1733 = vpack.c.b16 %v1720, %v1719
  %v1734 = vpack.c.b16 %v1722, %v1721
  %v1735 = vpack.c.b16 %v1724, %v1723
  %v1736 = vpack.c.b16 %v1726, %v1725
  %v1737 = vpack.c.b16 %v1728, %v1727
  %v1738 = vpack.c.b16 %v1730, %v1729
  %1747 = vmatpush.bf16.msra.mxu0 %v1579
  %1748 = vmatpush.bf16.msra.mxu0 %v1571
  %1749 = vmatpush.bf16.msra.mxu0 %v1563
  %1750 = vmatpush.bf16.msra.mxu0 %v1555
  %1751 = vmatpush.bf16.msra.mxu0 %v1547
  %1752 = vmatpush.bf16.msra.mxu0 %v1539
  %1753 = vmatpush.bf16.msra.mxu0 %v1531
  %1754 = vmatpush.bf16.msra.mxu0 %v1523
  %1755 = vmatmul.bf16.gmra.mxu0 %v1731
  %v1756 = vpop.f32.mrf.mxu0
  %v1757 = vadd.f32 %v1622, %v1756
  %v1758 = vpop.f32.mrf.mxu0
  %v1759 = vadd.f32 %v1627, %v1758
  %1760 = vmatmul.bf16.gmra.mxu0 %v1732
  %v1761 = vpop.f32.mrf.mxu0
  %v1762 = vadd.f32 %v1632, %v1761
  %v1763 = vpop.f32.mrf.mxu0
  %v1764 = vadd.f32 %v1637, %v1763
  %1765 = vmatmul.bf16.gmra.mxu0 %v1733
  %v1766 = vpop.f32.mrf.mxu0
  %v1767 = vadd.f32 %v1642, %v1766
  %v1768 = vpop.f32.mrf.mxu0
  %v1769 = vadd.f32 %v1647, %v1768
  %1770 = vmatmul.bf16.gmra.mxu0 %v1734
  %v1771 = vpop.f32.mrf.mxu0
  %v1772 = vadd.f32 %v1652, %v1771
  %v1773 = vpop.f32.mrf.mxu0
  %v1774 = vadd.f32 %v1657, %v1773
  %1775 = vmatmul.bf16.gmra.mxu0 %v1735
  %v1776 = vpop.f32.mrf.mxu0
  %v1777 = vadd.f32 %v1662, %v1776
  %v1778 = vpop.f32.mrf.mxu0
  %v1779 = vadd.f32 %v1667, %v1778
  %1780 = vmatmul.bf16.gmra.mxu0 %v1736
  %v1781 = vpop.f32.mrf.mxu0
  %v1782 = vadd.f32 %v1672, %v1781
  %v1783 = vpop.f32.mrf.mxu0
  %v1784 = vadd.f32 %v1677, %v1783
  %1785 = vmatmul.bf16.gmra.mxu0 %v1737
  %v1786 = vpop.f32.mrf.mxu0
  %v1787 = vadd.f32 %v1682, %v1786
  %v1788 = vpop.f32.mrf.mxu0
  %v1789 = vadd.f32 %v1687, %v1788
  %1790 = vmatmul.bf16.gmra.mxu0 %v1738
  %v1791 = vpop.f32.mrf.mxu0
  %v1792 = vadd.f32 %v1692, %v1791
  %v1793 = vpop.f32.mrf.mxu0
  %v1794 = vadd.f32 %v1697, %v1793
  %1795 = vdwg.mxu0
  %1796 = vmatpush.bf16.msra.mxu0 %v1580
  %1797 = vmatpush.bf16.msra.mxu0 %v1572
  %1798 = vmatpush.bf16.msra.mxu0 %v1564
  %1799 = vmatpush.bf16.msra.mxu0 %v1556
  %1800 = vmatpush.bf16.msra.mxu0 %v1548
  %1801 = vmatpush.bf16.msra.mxu0 %v1540
  %1802 = vmatpush.bf16.msra.mxu0 %v1532
  %1803 = vmatpush.bf16.msra.mxu0 %v1524
  %1804 = vmatmul.bf16.gmra.mxu0 %v1731
  %v1805 = vpop.f32.mrf.mxu0
  %v1806 = vadd.f32 %v1622, %v1805
  %v1807 = vpop.f32.mrf.mxu0
  %v1808 = vadd.f32 %v1627, %v1807
  %1809 = vmatmul.bf16.gmra.mxu0 %v1732
  %v1810 = vpop.f32.mrf.mxu0
  %v1811 = vadd.f32 %v1632, %v1810
  %v1812 = vpop.f32.mrf.mxu0
  %v1813 = vadd.f32 %v1637, %v1812
  %1814 = vmatmul.bf16.gmra.mxu0 %v1733
  %v1815 = vpop.f32.mrf.mxu0
  %v1816 = vadd.f32 %v1642, %v1815
  %v1817 = vpop.f32.mrf.mxu0
  %v1818 = vadd.f32 %v1647, %v1817
  %1819 = vmatmul.bf16.gmra.mxu0 %v1734
  %v1820 = vpop.f32.mrf.mxu0
  %v1821 = vadd.f32 %v1652, %v1820
  %v1822 = vpop.f32.mrf.mxu0
  %v1823 = vadd.f32 %v1657, %v1822
  %1824 = vmatmul.bf16.gmra.mxu0 %v1735
  %v1825 = vpop.f32.mrf.mxu0
  %v1826 = vadd.f32 %v1662, %v1825
  %v1827 = vpop.f32.mrf.mxu0
  %v1828 = vadd.f32 %v1667, %v1827
  %1829 = vmatmul.bf16.gmra.mxu0 %v1736
  %v1830 = vpop.f32.mrf.mxu0
  %v1831 = vadd.f32 %v1672, %v1830
  %v1832 = vpop.f32.mrf.mxu0
  %v1833 = vadd.f32 %v1677, %v1832
  %1834 = vmatmul.bf16.gmra.mxu0 %v1737
  %v1835 = vpop.f32.mrf.mxu0
  %v1836 = vadd.f32 %v1682, %v1835
  %v1837 = vpop.f32.mrf.mxu0
  %v1838 = vadd.f32 %v1687, %v1837
  %1839 = vmatmul.bf16.gmra.mxu0 %v1738
  %v1840 = vpop.f32.mrf.mxu0
  %v1841 = vadd.f32 %v1692, %v1840
  %v1842 = vpop.f32.mrf.mxu0
  %v1843 = vadd.f32 %v1697, %v1842
  %1844 = vdwg.mxu0
  %1845 = vmatpush.bf16.msra.mxu0 %v1581
  %1846 = vmatpush.bf16.msra.mxu0 %v1573
  %1847 = vmatpush.bf16.msra.mxu0 %v1565
  %1848 = vmatpush.bf16.msra.mxu0 %v1557
  %1849 = vmatpush.bf16.msra.mxu0 %v1549
  %1850 = vmatpush.bf16.msra.mxu0 %v1541
  %1851 = vmatpush.bf16.msra.mxu0 %v1533
  %1852 = vmatpush.bf16.msra.mxu0 %v1525
  %1853 = vmatmul.bf16.gmra.mxu0 %v1731
  %v1854 = vpop.f32.mrf.mxu0
  %v1855 = vadd.f32 %v1622, %v1854
  %v1856 = vpop.f32.mrf.mxu0
  %v1857 = vadd.f32 %v1627, %v1856
  %1858 = vmatmul.bf16.gmra.mxu0 %v1732
  %v1859 = vpop.f32.mrf.mxu0
  %v1860 = vadd.f32 %v1632, %v1859
  %v1861 = vpop.f32.mrf.mxu0
  %v1862 = vadd.f32 %v1637, %v1861
  %1863 = vmatmul.bf16.gmra.mxu0 %v1733
  %v1864 = vpop.f32.mrf.mxu0
  %v1865 = vadd.f32 %v1642, %v1864
  %v1866 = vpop.f32.mrf.mxu0
  %v1867 = vadd.f32 %v1647, %v1866
  %1868 = vmatmul.bf16.gmra.mxu0 %v1734
  %v1869 = vpop.f32.mrf.mxu0
  %v1870 = vadd.f32 %v1652, %v1869
  %v1871 = vpop.f32.mrf.mxu0
  %v1872 = vadd.f32 %v1657, %v1871
  %1873 = vmatmul.bf16.gmra.mxu0 %v1735
  %v1874 = vpop.f32.mrf.mxu0
  %v1875 = vadd.f32 %v1662, %v1874
  %v1876 = vpop.f32.mrf.mxu0
  %v1877 = vadd.f32 %v1667, %v1876
  %1878 = vmatmul.bf16.gmra.mxu0 %v1736
  %v1879 = vpop.f32.mrf.mxu0
  %v1880 = vadd.f32 %v1672, %v1879
  %v1881 = vpop.f32.mrf.mxu0
  %v1882 = vadd.f32 %v1677, %v1881
  %1883 = vmatmul.bf16.gmra.mxu0 %v1737
  %v1884 = vpop.f32.mrf.mxu0
  %v1885 = vadd.f32 %v1682, %v1884
  %v1886 = vpop.f32.mrf.mxu0
  %v1887 = vadd.f32 %v1687, %v1886
  %1888 = vmatmul.bf16.gmra.mxu0 %v1738
  %v1889 = vpop.f32.mrf.mxu0
  %v1890 = vadd.f32 %v1692, %v1889
  %v1891 = vpop.f32.mrf.mxu0
  %v1892 = vadd.f32 %v1697, %v1891
  %1893 = vdwg.mxu0
  %1894 = vmatpush.bf16.msra.mxu0 %v1582
  %1895 = vmatpush.bf16.msra.mxu0 %v1574
  %1896 = vmatpush.bf16.msra.mxu0 %v1566
  %1897 = vmatpush.bf16.msra.mxu0 %v1558
  %1898 = vmatpush.bf16.msra.mxu0 %v1550
  %1899 = vmatpush.bf16.msra.mxu0 %v1542
  %1900 = vmatpush.bf16.msra.mxu0 %v1534
  %1901 = vmatpush.bf16.msra.mxu0 %v1526
  %1902 = vmatmul.bf16.gmra.mxu0 %v1731
  %v1903 = vpop.f32.mrf.mxu0
  %v1904 = vadd.f32 %v1622, %v1903
  %v1905 = vpop.f32.mrf.mxu0
  %v1906 = vadd.f32 %v1627, %v1905
  %1907 = vmatmul.bf16.gmra.mxu0 %v1732
  %v1908 = vpop.f32.mrf.mxu0
  %v1909 = vadd.f32 %v1632, %v1908
  %v1910 = vpop.f32.mrf.mxu0
  %v1911 = vadd.f32 %v1637, %v1910
  %1912 = vmatmul.bf16.gmra.mxu0 %v1733
  %v1913 = vpop.f32.mrf.mxu0
  %v1914 = vadd.f32 %v1642, %v1913
  %v1915 = vpop.f32.mrf.mxu0
  %v1916 = vadd.f32 %v1647, %v1915
  %1917 = vmatmul.bf16.gmra.mxu0 %v1734
  %v1918 = vpop.f32.mrf.mxu0
  %v1919 = vadd.f32 %v1652, %v1918
  %v1920 = vpop.f32.mrf.mxu0
  %v1921 = vadd.f32 %v1657, %v1920
  %1922 = vmatmul.bf16.gmra.mxu0 %v1735
  %v1923 = vpop.f32.mrf.mxu0
  %v1924 = vadd.f32 %v1662, %v1923
  %v1925 = vpop.f32.mrf.mxu0
  %v1926 = vadd.f32 %v1667, %v1925
  %1927 = vmatmul.bf16.gmra.mxu0 %v1736
  %v1928 = vpop.f32.mrf.mxu0
  %v1929 = vadd.f32 %v1672, %v1928
  %v1930 = vpop.f32.mrf.mxu0
  %v1931 = vadd.f32 %v1677, %v1930
  %1932 = vmatmul.bf16.gmra.mxu0 %v1737
  %v1933 = vpop.f32.mrf.mxu0
  %v1934 = vadd.f32 %v1682, %v1933
  %v1935 = vpop.f32.mrf.mxu0
  %v1936 = vadd.f32 %v1687, %v1935
  %1937 = vmatmul.bf16.gmra.mxu0 %v1738
  %v1938 = vpop.f32.mrf.mxu0
  %v1939 = vadd.f32 %v1692, %v1938
  %v1940 = vpop.f32.mrf.mxu0
  %v1941 = vadd.f32 %v1697, %v1940
  %1942 = vdwg.mxu0
  %1943 = vmatpush.bf16.msra.mxu0 %v1583
  %1944 = vmatpush.bf16.msra.mxu0 %v1575
  %1945 = vmatpush.bf16.msra.mxu0 %v1567
  %1946 = vmatpush.bf16.msra.mxu0 %v1559
  %1947 = vmatpush.bf16.msra.mxu0 %v1551
  %1948 = vmatpush.bf16.msra.mxu0 %v1543
  %1949 = vmatpush.bf16.msra.mxu0 %v1535
  %1950 = vmatpush.bf16.msra.mxu0 %v1527
  %1951 = vmatmul.bf16.gmra.mxu0 %v1731
  %v1952 = vpop.f32.mrf.mxu0
  %v1953 = vadd.f32 %v1622, %v1952
  %v1954 = vpop.f32.mrf.mxu0
  %v1955 = vadd.f32 %v1627, %v1954
  %1956 = vmatmul.bf16.gmra.mxu0 %v1732
  %v1957 = vpop.f32.mrf.mxu0
  %v1958 = vadd.f32 %v1632, %v1957
  %v1959 = vpop.f32.mrf.mxu0
  %v1960 = vadd.f32 %v1637, %v1959
  %1961 = vmatmul.bf16.gmra.mxu0 %v1733
  %v1962 = vpop.f32.mrf.mxu0
  %v1963 = vadd.f32 %v1642, %v1962
  %v1964 = vpop.f32.mrf.mxu0
  %v1965 = vadd.f32 %v1647, %v1964
  %1966 = vmatmul.bf16.gmra.mxu0 %v1734
  %v1967 = vpop.f32.mrf.mxu0
  %v1968 = vadd.f32 %v1652, %v1967
  %v1969 = vpop.f32.mrf.mxu0
  %v1970 = vadd.f32 %v1657, %v1969
  %1971 = vmatmul.bf16.gmra.mxu0 %v1735
  %v1972 = vpop.f32.mrf.mxu0
  %v1973 = vadd.f32 %v1662, %v1972
  %v1974 = vpop.f32.mrf.mxu0
  %v1975 = vadd.f32 %v1667, %v1974
  %1976 = vmatmul.bf16.gmra.mxu0 %v1736
  %v1977 = vpop.f32.mrf.mxu0
  %v1978 = vadd.f32 %v1672, %v1977
  %v1979 = vpop.f32.mrf.mxu0
  %v1980 = vadd.f32 %v1677, %v1979
  %1981 = vmatmul.bf16.gmra.mxu0 %v1737
  %v1982 = vpop.f32.mrf.mxu0
  %v1983 = vadd.f32 %v1682, %v1982
  %v1984 = vpop.f32.mrf.mxu0
  %v1985 = vadd.f32 %v1687, %v1984
  %1986 = vmatmul.bf16.gmra.mxu0 %v1738
  %v1987 = vpop.f32.mrf.mxu0
  %v1988 = vadd.f32 %v1692, %v1987
  %v1989 = vpop.f32.mrf.mxu0
  %v1990 = vadd.f32 %v1697, %v1989
  %1991 = vdwg.mxu0
  %1992 = vmatpush.bf16.msra.mxu0 %v1584
  %1993 = vmatpush.bf16.msra.mxu0 %v1576
  %1994 = vmatpush.bf16.msra.mxu0 %v1568
  %1995 = vmatpush.bf16.msra.mxu0 %v1560
  %1996 = vmatpush.bf16.msra.mxu0 %v1552
  %1997 = vmatpush.bf16.msra.mxu0 %v1544
  %1998 = vmatpush.bf16.msra.mxu0 %v1536
  %1999 = vmatpush.bf16.msra.mxu0 %v1528
  %2000 = vmatmul.bf16.gmra.mxu0 %v1731
  %v2001 = vpop.f32.mrf.mxu0
  %v2002 = vadd.f32 %v1622, %v2001
  %v2003 = vpop.f32.mrf.mxu0
  %v2004 = vadd.f32 %v1627, %v2003
  %2005 = vmatmul.bf16.gmra.mxu0 %v1732
  %v2006 = vpop.f32.mrf.mxu0
  %v2007 = vadd.f32 %v1632, %v2006
  %v2008 = vpop.f32.mrf.mxu0
  %v2009 = vadd.f32 %v1637, %v2008
  %2010 = vmatmul.bf16.gmra.mxu0 %v1733
  %v2011 = vpop.f32.mrf.mxu0
  %v2012 = vadd.f32 %v1642, %v2011
  %v2013 = vpop.f32.mrf.mxu0
  %v2014 = vadd.f32 %v1647, %v2013
  %2015 = vmatmul.bf16.gmra.mxu0 %v1734
  %v2016 = vpop.f32.mrf.mxu0
  %v2017 = vadd.f32 %v1652, %v2016
  %v2018 = vpop.f32.mrf.mxu0
  %v2019 = vadd.f32 %v1657, %v2018
  %2020 = vmatmul.bf16.gmra.mxu0 %v1735
  %v2021 = vpop.f32.mrf.mxu0
  %v2022 = vadd.f32 %v1662, %v2021
  %v2023 = vpop.f32.mrf.mxu0
  %v2024 = vadd.f32 %v1667, %v2023
  %2025 = vmatmul.bf16.gmra.mxu0 %v1736
  %v2026 = vpop.f32.mrf.mxu0
  %v2027 = vadd.f32 %v1672, %v2026
  %v2028 = vpop.f32.mrf.mxu0
  %v2029 = vadd.f32 %v1677, %v2028
  %2030 = vmatmul.bf16.gmra.mxu0 %v1737
  %v2031 = vpop.f32.mrf.mxu0
  %v2032 = vadd.f32 %v1682, %v2031
  %v2033 = vpop.f32.mrf.mxu0
  %v2034 = vadd.f32 %v1687, %v2033
  %2035 = vmatmul.bf16.gmra.mxu0 %v1738
  %v2036 = vpop.f32.mrf.mxu0
  %v2037 = vadd.f32 %v1692, %v2036
  %v2038 = vpop.f32.mrf.mxu0
  %v2039 = vadd.f32 %v1697, %v2038
  %2040 = vdwg.mxu0
  %2041 = vmatpush.bf16.msra.mxu0 %v1585
  %2042 = vmatpush.bf16.msra.mxu0 %v1577
  %2043 = vmatpush.bf16.msra.mxu0 %v1569
  %2044 = vmatpush.bf16.msra.mxu0 %v1561
  %2045 = vmatpush.bf16.msra.mxu0 %v1553
  %2046 = vmatpush.bf16.msra.mxu0 %v1545
  %2047 = vmatpush.bf16.msra.mxu0 %v1537
  %2048 = vmatpush.bf16.msra.mxu0 %v1529
  %2049 = vmatmul.bf16.gmra.mxu0 %v1731
  %v2050 = vpop.f32.mrf.mxu0
  %v2051 = vadd.f32 %v1622, %v2050
  %v2052 = vpop.f32.mrf.mxu0
  %v2053 = vadd.f32 %v1627, %v2052
  %2054 = vmatmul.bf16.gmra.mxu0 %v1732
  %v2055 = vpop.f32.mrf.mxu0
  %v2056 = vadd.f32 %v1632, %v2055
  %v2057 = vpop.f32.mrf.mxu0
  %v2058 = vadd.f32 %v1637, %v2057
  %2059 = vmatmul.bf16.gmra.mxu0 %v1733
  %v2060 = vpop.f32.mrf.mxu0
  %v2061 = vadd.f32 %v1642, %v2060
  %v2062 = vpop.f32.mrf.mxu0
  %v2063 = vadd.f32 %v1647, %v2062
  %2064 = vmatmul.bf16.gmra.mxu0 %v1734
  %v2065 = vpop.f32.mrf.mxu0
  %v2066 = vadd.f32 %v1652, %v2065
  %v2067 = vpop.f32.mrf.mxu0
  %v2068 = vadd.f32 %v1657, %v2067
  %2069 = vmatmul.bf16.gmra.mxu0 %v1735
  %v2070 = vpop.f32.mrf.mxu0
  %v2071 = vadd.f32 %v1662, %v2070
  %v2072 = vpop.f32.mrf.mxu0
  %v2073 = vadd.f32 %v1667, %v2072
  %2074 = vmatmul.bf16.gmra.mxu0 %v1736
  %v2075 = vpop.f32.mrf.mxu0
  %v2076 = vadd.f32 %v1672, %v2075
  %v2077 = vpop.f32.mrf.mxu0
  %v2078 = vadd.f32 %v1677, %v2077
  %2079 = vmatmul.bf16.gmra.mxu0 %v1737
  %v2080 = vpop.f32.mrf.mxu0
  %v2081 = vadd.f32 %v1682, %v2080
  %v2082 = vpop.f32.mrf.mxu0
  %v2083 = vadd.f32 %v1687, %v2082
  %2084 = vmatmul.bf16.gmra.mxu0 %v1738
  %v2085 = vpop.f32.mrf.mxu0
  %v2086 = vadd.f32 %v1692, %v2085
  %v2087 = vpop.f32.mrf.mxu0
  %v2088 = vadd.f32 %v1697, %v2087
  %2089 = vdwg.mxu0
  %2090 = vmatpush.bf16.msra.mxu0 %v1586
  %2091 = vmatpush.bf16.msra.mxu0 %v1578
  %2092 = vmatpush.bf16.msra.mxu0 %v1570
  %2093 = vmatpush.bf16.msra.mxu0 %v1562
  %2094 = vmatpush.bf16.msra.mxu0 %v1554
  %2095 = vmatpush.bf16.msra.mxu0 %v1546
  %2096 = vmatpush.bf16.msra.mxu0 %v1538
  %2097 = vmatpush.bf16.msra.mxu0 %v1530
  %2098 = vmatmul.bf16.gmra.mxu0 %v1731
  %v2099 = vpop.f32.mrf.mxu0
  %v2100 = vadd.f32 %v1622, %v2099
  %v2101 = vpop.f32.mrf.mxu0
  %v2102 = vadd.f32 %v1627, %v2101
  %2103 = vmatmul.bf16.gmra.mxu0 %v1732
  %v2104 = vpop.f32.mrf.mxu0
  %v2105 = vadd.f32 %v1632, %v2104
  %v2106 = vpop.f32.mrf.mxu0
  %v2107 = vadd.f32 %v1637, %v2106
  %2108 = vmatmul.bf16.gmra.mxu0 %v1733
  %v2109 = vpop.f32.mrf.mxu0
  %v2110 = vadd.f32 %v1642, %v2109
  %v2111 = vpop.f32.mrf.mxu0
  %v2112 = vadd.f32 %v1647, %v2111
  %2113 = vmatmul.bf16.gmra.mxu0 %v1734
  %v2114 = vpop.f32.mrf.mxu0
  %v2115 = vadd.f32 %v1652, %v2114
  %v2116 = vpop.f32.mrf.mxu0
  %v2117 = vadd.f32 %v1657, %v2116
  %2118 = vmatmul.bf16.gmra.mxu0 %v1735
  %v2119 = vpop.f32.mrf.mxu0
  %v2120 = vadd.f32 %v1662, %v2119
  %v2121 = vpop.f32.mrf.mxu0
  %v2122 = vadd.f32 %v1667, %v2121
  %2123 = vmatmul.bf16.gmra.mxu0 %v1736
  %v2124 = vpop.f32.mrf.mxu0
  %v2125 = vadd.f32 %v1672, %v2124
  %v2126 = vpop.f32.mrf.mxu0
  %v2127 = vadd.f32 %v1677, %v2126
  %2128 = vmatmul.bf16.gmra.mxu0 %v1737
  %v2129 = vpop.f32.mrf.mxu0
  %v2130 = vadd.f32 %v1682, %v2129
  %v2131 = vpop.f32.mrf.mxu0
  %v2132 = vadd.f32 %v1687, %v2131
  %2133 = vmatmul.bf16.gmra.mxu0 %v1738
  %v2134 = vpop.f32.mrf.mxu0
  %v2135 = vadd.f32 %v1692, %v2134
  %v2136 = vpop.f32.mrf.mxu0
  %v2137 = vadd.f32 %v1697, %v2136
  %2138 = vdwg.mxu0
  %v2139 = vmax.f32 %v1757, 0.0
  %v2140 = vmax.f32 %v1806, 0.0
  %v2141 = vmax.f32 %v1855, 0.0
  %v2142 = vmax.f32 %v1904, 0.0
  %v2143 = vmax.f32 %v1953, 0.0
  %v2144 = vmax.f32 %v2002, 0.0
  %v2145 = vmax.f32 %v2051, 0.0
  %v2146 = vmax.f32 %v2100, 0.0
  %v2147 = vmax.f32 %v1759, 0.0
  %v2148 = vmax.f32 %v1808, 0.0
  %v2149 = vmax.f32 %v1857, 0.0
  %v2150 = vmax.f32 %v1906, 0.0
  %v2151 = vmax.f32 %v1955, 0.0
  %v2152 = vmax.f32 %v2004, 0.0
  %v2153 = vmax.f32 %v2053, 0.0
  %v2154 = vmax.f32 %v2102, 0.0
  %v2155 = vmax.f32 %v1762, 0.0
  %v2156 = vmax.f32 %v1811, 0.0
  %v2157 = vmax.f32 %v1860, 0.0
  %v2158 = vmax.f32 %v1909, 0.0
  %v2159 = vmax.f32 %v1958, 0.0
  %v2160 = vmax.f32 %v2007, 0.0
  %v2161 = vmax.f32 %v2056, 0.0
  %v2162 = vmax.f32 %v2105, 0.0
  %v2163 = vmax.f32 %v1764, 0.0
  %v2164 = vmax.f32 %v1813, 0.0
  %v2165 = vmax.f32 %v1862, 0.0
  %v2166 = vmax.f32 %v1911, 0.0
  %v2167 = vmax.f32 %v1960, 0.0
  %v2168 = vmax.f32 %v2009, 0.0
  %v2169 = vmax.f32 %v2058, 0.0
  %v2170 = vmax.f32 %v2107, 0.0
  %v2171 = vmax.f32 %v1767, 0.0
  %v2172 = vmax.f32 %v1816, 0.0
  %v2173 = vmax.f32 %v1865, 0.0
  %v2174 = vmax.f32 %v1914, 0.0
  %v2175 = vmax.f32 %v1963, 0.0
  %v2176 = vmax.f32 %v2012, 0.0
  %v2177 = vmax.f32 %v2061, 0.0
  %v2178 = vmax.f32 %v2110, 0.0
  %v2179 = vmax.f32 %v1769, 0.0
  %v2180 = vmax.f32 %v1818, 0.0
  %v2181 = vmax.f32 %v1867, 0.0
  %v2182 = vmax.f32 %v1916, 0.0
  %v2183 = vmax.f32 %v1965, 0.0
  %v2184 = vmax.f32 %v2014, 0.0
  %v2185 = vmax.f32 %v2063, 0.0
  %v2186 = vmax.f32 %v2112, 0.0
  %v2187 = vmax.f32 %v1772, 0.0
  %v2188 = vmax.f32 %v1821, 0.0
  %v2189 = vmax.f32 %v1870, 0.0
  %v2190 = vmax.f32 %v1919, 0.0
  %v2191 = vmax.f32 %v1968, 0.0
  %v2192 = vmax.f32 %v2017, 0.0
  %v2193 = vmax.f32 %v2066, 0.0
  %v2194 = vmax.f32 %v2115, 0.0
  %v2195 = vmax.f32 %v1774, 0.0
  %v2196 = vmax.f32 %v1823, 0.0
  %v2197 = vmax.f32 %v1872, 0.0
  %v2198 = vmax.f32 %v1921, 0.0
  %v2199 = vmax.f32 %v1970, 0.0
  %v2200 = vmax.f32 %v2019, 0.0
  %v2201 = vmax.f32 %v2068, 0.0
  %v2202 = vmax.f32 %v2117, 0.0
  %v2203 = vmax.f32 %v1777, 0.0
  %v2204 = vmax.f32 %v1826, 0.0
  %v2205 = vmax.f32 %v1875, 0.0
  %v2206 = vmax.f32 %v1924, 0.0
  %v2207 = vmax.f32 %v1973, 0.0
  %v2208 = vmax.f32 %v2022, 0.0
  %v2209 = vmax.f32 %v2071, 0.0
  %v2210 = vmax.f32 %v2120, 0.0
  %v2211 = vmax.f32 %v1779, 0.0
  %v2212 = vmax.f32 %v1828, 0.0
  %v2213 = vmax.f32 %v1877, 0.0
  %v2214 = vmax.f32 %v1926, 0.0
  %v2215 = vmax.f32 %v1975, 0.0
  %v2216 = vmax.f32 %v2024, 0.0
  %v2217 = vmax.f32 %v2073, 0.0
  %v2218 = vmax.f32 %v2122, 0.0
  %v2219 = vmax.f32 %v1782, 0.0
  %v2220 = vmax.f32 %v1831, 0.0
  %v2221 = vmax.f32 %v1880, 0.0
  %v2222 = vmax.f32 %v1929, 0.0
  %v2223 = vmax.f32 %v1978, 0.0
  %v2224 = vmax.f32 %v2027, 0.0
  %v2225 = vmax.f32 %v2076, 0.0
  %v2226 = vmax.f32 %v2125, 0.0
  %v2227 = vmax.f32 %v1784, 0.0
  %v2228 = vmax.f32 %v1833, 0.0
  %v2229 = vmax.f32 %v1882, 0.0
  %v2230 = vmax.f32 %v1931, 0.0
  %v2231 = vmax.f32 %v1980, 0.0
  %v2232 = vmax.f32 %v2029, 0.0
  %v2233 = vmax.f32 %v2078, 0.0
  %v2234 = vmax.f32 %v2127, 0.0
  %v2235 = vmax.f32 %v1787, 0.0
  %v2236 = vmax.f32 %v1836, 0.0
  %v2237 = vmax.f32 %v1885, 0.0
  %v2238 = vmax.f32 %v1934, 0.0
  %v2239 = vmax.f32 %v1983, 0.0
  %v2240 = vmax.f32 %v2032, 0.0
  %v2241 = vmax.f32 %v2081, 0.0
  %v2242 = vmax.f32 %v2130, 0.0
  %v2243 = vmax.f32 %v1789, 0.0
  %v2244 = vmax.f32 %v1838, 0.0
  %v2245 = vmax.f32 %v1887, 0.0
  %v2246 = vmax.f32 %v1936, 0.0
  %v2247 = vmax.f32 %v1985, 0.0
  %v2248 = vmax.f32 %v2034, 0.0
  %v2249 = vmax.f32 %v2083, 0.0
  %v2250 = vmax.f32 %v2132, 0.0
  %v2251 = vmax.f32 %v1792, 0.0
  %v2252 = vmax.f32 %v1841, 0.0
  %v2253 = vmax.f32 %v1890, 0.0
  %v2254 = vmax.f32 %v1939, 0.0
  %v2255 = vmax.f32 %v1988, 0.0
  %v2256 = vmax.f32 %v2037, 0.0
  %v2257 = vmax.f32 %v2086, 0.0
  %v2258 = vmax.f32 %v2135, 0.0
  %v2259 = vmax.f32 %v1794, 0.0
  %v2260 = vmax.f32 %v1843, 0.0
  %v2261 = vmax.f32 %v1892, 0.0
  %v2262 = vmax.f32 %v1941, 0.0
  %v2263 = vmax.f32 %v1990, 0.0
  %v2264 = vmax.f32 %v2039, 0.0
  %v2265 = vmax.f32 %v2088, 0.0
  %v2266 = vmax.f32 %v2137, 0.0
  %v2267 = vld [vmem:[%s7] sm:$0xff]
  %v2268 = vld [vmem:[%s7 + $0x8] sm:$0xff]
  %v2269 = vld [vmem:[%s7 + $0x10] sm:$0xff]
  %v2270 = vld [vmem:[%s7 + $0x18] sm:$0xff]
  %v2271 = vld [vmem:[%s7 + $0x20] sm:$0xff]
  %v2272 = vld [vmem:[%s7 + $0x28] sm:$0xff]
  %v2273 = vld [vmem:[%s7 + $0x30] sm:$0xff]
  %v2274 = vld [vmem:[%s7 + $0x38] sm:$0xff]
  %v2275 = vld [vmem:[%s7 + $0x40] sm:$0xff]
  %v2276 = vld [vmem:[%s7 + $0x48] sm:$0xff]
  %v2277 = vld [vmem:[%s7 + $0x50] sm:$0xff]
  %v2278 = vld [vmem:[%s7 + $0x58] sm:$0xff]
  %v2279 = vld [vmem:[%s7 + $0x60] sm:$0xff]
  %v2280 = vld [vmem:[%s7 + $0x68] sm:$0xff]
  %v2281 = vld [vmem:[%s7 + $0x70] sm:$0xff]
  %v2282 = vld [vmem:[%s7 + $0x78] sm:$0xff]
  %2284 = vset.pattern.permute.xlu0 0
  %2285 = vperm.xlu0 %2284, %v2267
  %v2286 = vpop.permute.xlu0 %2285
  %2289 = vset.pattern.permute.xlu0 0
  %2290 = vperm.xlu0 %2289, %v2268
  %v2291 = vpop.permute.xlu0 %2290
  %2294 = vset.pattern.permute.xlu0 0
  %2295 = vperm.xlu0 %2294, %v2269
  %v2296 = vpop.permute.xlu0 %2295
  %2299 = vset.pattern.permute.xlu0 0
  %2300 = vperm.xlu0 %2299, %v2270
  %v2301 = vpop.permute.xlu0 %2300
  %2304 = vset.pattern.permute.xlu0 0
  %2305 = vperm.xlu0 %2304, %v2271
  %v2306 = vpop.permute.xlu0 %2305
  %2309 = vset.pattern.permute.xlu0 0
  %2310 = vperm.xlu0 %2309, %v2272
  %v2311 = vpop.permute.xlu0 %2310
  %2314 = vset.pattern.permute.xlu0 0
  %2315 = vperm.xlu0 %2314, %v2273
  %v2316 = vpop.permute.xlu0 %2315
  %2319 = vset.pattern.permute.xlu0 0
  %2320 = vperm.xlu0 %2319, %v2274
  %v2321 = vpop.permute.xlu0 %2320
  %2324 = vset.pattern.permute.xlu0 0
  %2325 = vperm.xlu0 %2324, %v2275
  %v2326 = vpop.permute.xlu0 %2325
  %2329 = vset.pattern.permute.xlu0 0
  %2330 = vperm.xlu0 %2329, %v2276
  %v2331 = vpop.permute.xlu0 %2330
  %2334 = vset.pattern.permute.xlu0 0
  %2335 = vperm.xlu0 %2334, %v2277
  %v2336 = vpop.permute.xlu0 %2335
  %2339 = vset.pattern.permute.xlu0 0
  %2340 = vperm.xlu0 %2339, %v2278
  %v2341 = vpop.permute.xlu0 %2340
  %2344 = vset.pattern.permute.xlu0 0
  %2345 = vperm.xlu0 %2344, %v2279
  %v2346 = vpop.permute.xlu0 %2345
  %2349 = vset.pattern.permute.xlu0 0
  %2350 = vperm.xlu0 %2349, %v2280
  %v2351 = vpop.permute.xlu0 %2350
  %2354 = vset.pattern.permute.xlu0 0
  %2355 = vperm.xlu0 %2354, %v2281
  %v2356 = vpop.permute.xlu0 %2355
  %2359 = vset.pattern.permute.xlu0 0
  %2360 = vperm.xlu0 %2359, %v2282
  %v2361 = vpop.permute.xlu0 %2360
  %v2363 = vmul.f32 %v2286, %v2139
  %v2364 = vmul.f32 %v2286, %v2140
  %v2365 = vmul.f32 %v2286, %v2141
  %v2366 = vmul.f32 %v2286, %v2142
  %v2367 = vmul.f32 %v2286, %v2143
  %v2368 = vmul.f32 %v2286, %v2144
  %v2369 = vmul.f32 %v2286, %v2145
  %v2370 = vmul.f32 %v2286, %v2146
  %v2371 = vmul.f32 %v2291, %v2147
  %v2372 = vmul.f32 %v2291, %v2148
  %v2373 = vmul.f32 %v2291, %v2149
  %v2374 = vmul.f32 %v2291, %v2150
  %v2375 = vmul.f32 %v2291, %v2151
  %v2376 = vmul.f32 %v2291, %v2152
  %v2377 = vmul.f32 %v2291, %v2153
  %v2378 = vmul.f32 %v2291, %v2154
  %v2379 = vmul.f32 %v2296, %v2155
  %v2380 = vmul.f32 %v2296, %v2156
  %v2381 = vmul.f32 %v2296, %v2157
  %v2382 = vmul.f32 %v2296, %v2158
  %v2383 = vmul.f32 %v2296, %v2159
  %v2384 = vmul.f32 %v2296, %v2160
  %v2385 = vmul.f32 %v2296, %v2161
  %v2386 = vmul.f32 %v2296, %v2162
  %v2387 = vmul.f32 %v2301, %v2163
  %v2388 = vmul.f32 %v2301, %v2164
  %v2389 = vmul.f32 %v2301, %v2165
  %v2390 = vmul.f32 %v2301, %v2166
  %v2391 = vmul.f32 %v2301, %v2167
  %v2392 = vmul.f32 %v2301, %v2168
  %v2393 = vmul.f32 %v2301, %v2169
  %v2394 = vmul.f32 %v2301, %v2170
  %v2395 = vmul.f32 %v2306, %v2171
  %v2396 = vmul.f32 %v2306, %v2172
  %v2397 = vmul.f32 %v2306, %v2173
  %v2398 = vmul.f32 %v2306, %v2174
  %v2399 = vmul.f32 %v2306, %v2175
  %v2400 = vmul.f32 %v2306, %v2176
  %v2401 = vmul.f32 %v2306, %v2177
  %v2402 = vmul.f32 %v2306, %v2178
  %v2403 = vmul.f32 %v2311, %v2179
  %v2404 = vmul.f32 %v2311, %v2180
  %v2405 = vmul.f32 %v2311, %v2181
  %v2406 = vmul.f32 %v2311, %v2182
  %v2407 = vmul.f32 %v2311, %v2183
  %v2408 = vmul.f32 %v2311, %v2184
  %v2409 = vmul.f32 %v2311, %v2185
  %v2410 = vmul.f32 %v2311, %v2186
  %v2411 = vmul.f32 %v2316, %v2187
  %v2412 = vmul.f32 %v2316, %v2188
  %v2413 = vmul.f32 %v2316, %v2189
  %v2414 = vmul.f32 %v2316, %v2190
  %v2415 = vmul.f32 %v2316, %v2191
  %v2416 = vmul.f32 %v2316, %v2192
  %v2417 = vmul.f32 %v2316, %v2193
  %v2418 = vmul.f32 %v2316, %v2194
  %v2419 = vmul.f32 %v2321, %v2195
  %v2420 = vmul.f32 %v2321, %v2196
  %v2421 = vmul.f32 %v2321, %v2197
  %v2422 = vmul.f32 %v2321, %v2198
  %v2423 = vmul.f32 %v2321, %v2199
  %v2424 = vmul.f32 %v2321, %v2200
  %v2425 = vmul.f32 %v2321, %v2201
  %v2426 = vmul.f32 %v2321, %v2202
  %v2427 = vmul.f32 %v2326, %v2203
  %v2428 = vmul.f32 %v2326, %v2204
  %v2429 = vmul.f32 %v2326, %v2205
  %v2430 = vmul.f32 %v2326, %v2206
  %v2431 = vmul.f32 %v2326, %v2207
  %v2432 = vmul.f32 %v2326, %v2208
  %v2433 = vmul.f32 %v2326, %v2209
  %v2434 = vmul.f32 %v2326, %v2210
  %v2435 = vmul.f32 %v2331, %v2211
  %v2436 = vmul.f32 %v2331, %v2212
  %v2437 = vmul.f32 %v2331, %v2213
  %v2438 = vmul.f32 %v2331, %v2214
  %v2439 = vmul.f32 %v2331, %v2215
  %v2440 = vmul.f32 %v2331, %v2216
  %v2441 = vmul.f32 %v2331, %v2217
  %v2442 = vmul.f32 %v2331, %v2218
  %v2443 = vmul.f32 %v2336, %v2219
  %v2444 = vmul.f32 %v2336, %v2220
  %v2445 = vmul.f32 %v2336, %v2221
  %v2446 = vmul.f32 %v2336, %v2222
  %v2447 = vmul.f32 %v2336, %v2223
  %v2448 = vmul.f32 %v2336, %v2224
  %v2449 = vmul.f32 %v2336, %v2225
  %v2450 = vmul.f32 %v2336, %v2226
  %v2451 = vmul.f32 %v2341, %v2227
  %v2452 = vmul.f32 %v2341, %v2228
  %v2453 = vmul.f32 %v2341, %v2229
  %v2454 = vmul.f32 %v2341, %v2230
  %v2455 = vmul.f32 %v2341, %v2231
  %v2456 = vmul.f32 %v2341, %v2232
  %v2457 = vmul.f32 %v2341, %v2233
  %v2458 = vmul.f32 %v2341, %v2234
  %v2459 = vmul.f32 %v2346, %v2235
  %v2460 = vmul.f32 %v2346, %v2236
  %v2461 = vmul.f32 %v2346, %v2237
  %v2462 = vmul.f32 %v2346, %v2238
  %v2463 = vmul.f32 %v2346, %v2239
  %v2464 = vmul.f32 %v2346, %v2240
  %v2465 = vmul.f32 %v2346, %v2241
  %v2466 = vmul.f32 %v2346, %v2242
  %v2467 = vmul.f32 %v2351, %v2243
  %v2468 = vmul.f32 %v2351, %v2244
  %v2469 = vmul.f32 %v2351, %v2245
  %v2470 = vmul.f32 %v2351, %v2246
  %v2471 = vmul.f32 %v2351, %v2247
  %v2472 = vmul.f32 %v2351, %v2248
  %v2473 = vmul.f32 %v2351, %v2249
  %v2474 = vmul.f32 %v2351, %v2250
  %v2475 = vmul.f32 %v2356, %v2251
  %v2476 = vmul.f32 %v2356, %v2252
  %v2477 = vmul.f32 %v2356, %v2253
  %v2478 = vmul.f32 %v2356, %v2254
  %v2479 = vmul.f32 %v2356, %v2255
  %v2480 = vmul.f32 %v2356, %v2256
  %v2481 = vmul.f32 %v2356, %v2257
  %v2482 = vmul.f32 %v2356, %v2258
  %v2483 = vmul.f32 %v2361, %v2259
  %v2484 = vmul.f32 %v2361, %v2260
  %v2485 = vmul.f32 %v2361, %v2261
  %v2486 = vmul.f32 %v2361, %v2262
  %v2487 = vmul.f32 %v2361, %v2263
  %v2488 = vmul.f32 %v2361, %v2264
  %v2489 = vmul.f32 %v2361, %v2265
  %v2490 = vmul.f32 %v2361, %v2266
  %v2491 = vadd.f32 %v2363, %v2371
  %v2492 = vadd.f32 %v2491, %v2379
  %v2493 = vadd.f32 %v2492, %v2387
  %v2494 = vadd.f32 %v2493, %v2395
  %v2495 = vadd.f32 %v2494, %v2403
  %v2496 = vadd.f32 %v2495, %v2411
  %v2497 = vadd.f32 %v2496, %v2419
  %v2498 = vadd.f32 %v2497, %v2427
  %v2499 = vadd.f32 %v2498, %v2435
  %v2500 = vadd.f32 %v2499, %v2443
  %v2501 = vadd.f32 %v2500, %v2451
  %v2502 = vadd.f32 %v2501, %v2459
  %v2503 = vadd.f32 %v2502, %v2467
  %v2504 = vadd.f32 %v2503, %v2475
  %v2505 = vadd.f32 %v2504, %v2483
  %v2506 = vrot.slane %v2505, 4
  %v2507 = vadd.f32 %v2505, %v2506
  %v2508 = vrot.slane %v2507, 2
  %v2509 = vadd.f32 %v2507, %v2508
  %v2510 = vrot.slane %v2509, 1
  %v2511 = vadd.f32 %v2509, %v2510
  %v2512 = vadd.f32 %v2364, %v2372
  %v2513 = vadd.f32 %v2512, %v2380
  %v2514 = vadd.f32 %v2513, %v2388
  %v2515 = vadd.f32 %v2514, %v2396
  %v2516 = vadd.f32 %v2515, %v2404
  %v2517 = vadd.f32 %v2516, %v2412
  %v2518 = vadd.f32 %v2517, %v2420
  %v2519 = vadd.f32 %v2518, %v2428
  %v2520 = vadd.f32 %v2519, %v2436
  %v2521 = vadd.f32 %v2520, %v2444
  %v2522 = vadd.f32 %v2521, %v2452
  %v2523 = vadd.f32 %v2522, %v2460
  %v2524 = vadd.f32 %v2523, %v2468
  %v2525 = vadd.f32 %v2524, %v2476
  %v2526 = vadd.f32 %v2525, %v2484
  %v2527 = vrot.slane %v2526, 4
  %v2528 = vadd.f32 %v2526, %v2527
  %v2529 = vrot.slane %v2528, 2
  %v2530 = vadd.f32 %v2528, %v2529
  %v2531 = vrot.slane %v2530, 1
  %v2532 = vadd.f32 %v2530, %v2531
  %v2533 = vadd.f32 %v2365, %v2373
  %v2534 = vadd.f32 %v2533, %v2381
  %v2535 = vadd.f32 %v2534, %v2389
  %v2536 = vadd.f32 %v2535, %v2397
  %v2537 = vadd.f32 %v2536, %v2405
  %v2538 = vadd.f32 %v2537, %v2413
  %v2539 = vadd.f32 %v2538, %v2421
  %v2540 = vadd.f32 %v2539, %v2429
  %v2541 = vadd.f32 %v2540, %v2437
  %v2542 = vadd.f32 %v2541, %v2445
  %v2543 = vadd.f32 %v2542, %v2453
  %v2544 = vadd.f32 %v2543, %v2461
  %v2545 = vadd.f32 %v2544, %v2469
  %v2546 = vadd.f32 %v2545, %v2477
  %v2547 = vadd.f32 %v2546, %v2485
  %v2548 = vrot.slane %v2547, 4
  %v2549 = vadd.f32 %v2547, %v2548
  %v2550 = vrot.slane %v2549, 2
  %v2551 = vadd.f32 %v2549, %v2550
  %v2552 = vrot.slane %v2551, 1
  %v2553 = vadd.f32 %v2551, %v2552
  %v2554 = vadd.f32 %v2366, %v2374
  %v2555 = vadd.f32 %v2554, %v2382
  %v2556 = vadd.f32 %v2555, %v2390
  %v2557 = vadd.f32 %v2556, %v2398
  %v2558 = vadd.f32 %v2557, %v2406
  %v2559 = vadd.f32 %v2558, %v2414
  %v2560 = vadd.f32 %v2559, %v2422
  %v2561 = vadd.f32 %v2560, %v2430
  %v2562 = vadd.f32 %v2561, %v2438
  %v2563 = vadd.f32 %v2562, %v2446
  %v2564 = vadd.f32 %v2563, %v2454
  %v2565 = vadd.f32 %v2564, %v2462
  %v2566 = vadd.f32 %v2565, %v2470
  %v2567 = vadd.f32 %v2566, %v2478
  %v2568 = vadd.f32 %v2567, %v2486
  %v2569 = vrot.slane %v2568, 4
  %v2570 = vadd.f32 %v2568, %v2569
  %v2571 = vrot.slane %v2570, 2
  %v2572 = vadd.f32 %v2570, %v2571
  %v2573 = vrot.slane %v2572, 1
  %v2574 = vadd.f32 %v2572, %v2573
  %v2575 = vadd.f32 %v2367, %v2375
  %v2576 = vadd.f32 %v2575, %v2383
  %v2577 = vadd.f32 %v2576, %v2391
  %v2578 = vadd.f32 %v2577, %v2399
  %v2579 = vadd.f32 %v2578, %v2407
  %v2580 = vadd.f32 %v2579, %v2415
  %v2581 = vadd.f32 %v2580, %v2423
  %v2582 = vadd.f32 %v2581, %v2431
  %v2583 = vadd.f32 %v2582, %v2439
  %v2584 = vadd.f32 %v2583, %v2447
  %v2585 = vadd.f32 %v2584, %v2455
  %v2586 = vadd.f32 %v2585, %v2463
  %v2587 = vadd.f32 %v2586, %v2471
  %v2588 = vadd.f32 %v2587, %v2479
  %v2589 = vadd.f32 %v2588, %v2487
  %v2590 = vrot.slane %v2589, 4
  %v2591 = vadd.f32 %v2589, %v2590
  %v2592 = vrot.slane %v2591, 2
  %v2593 = vadd.f32 %v2591, %v2592
  %v2594 = vrot.slane %v2593, 1
  %v2595 = vadd.f32 %v2593, %v2594
  %v2596 = vadd.f32 %v2368, %v2376
  %v2597 = vadd.f32 %v2596, %v2384
  %v2598 = vadd.f32 %v2597, %v2392
  %v2599 = vadd.f32 %v2598, %v2400
  %v2600 = vadd.f32 %v2599, %v2408
  %v2601 = vadd.f32 %v2600, %v2416
  %v2602 = vadd.f32 %v2601, %v2424
  %v2603 = vadd.f32 %v2602, %v2432
  %v2604 = vadd.f32 %v2603, %v2440
  %v2605 = vadd.f32 %v2604, %v2448
  %v2606 = vadd.f32 %v2605, %v2456
  %v2607 = vadd.f32 %v2606, %v2464
  %v2608 = vadd.f32 %v2607, %v2472
  %v2609 = vadd.f32 %v2608, %v2480
  %v2610 = vadd.f32 %v2609, %v2488
  %v2611 = vrot.slane %v2610, 4
  %v2612 = vadd.f32 %v2610, %v2611
  %v2613 = vrot.slane %v2612, 2
  %v2614 = vadd.f32 %v2612, %v2613
  %v2615 = vrot.slane %v2614, 1
  %v2616 = vadd.f32 %v2614, %v2615
  %v2617 = vadd.f32 %v2369, %v2377
  %v2618 = vadd.f32 %v2617, %v2385
  %v2619 = vadd.f32 %v2618, %v2393
  %v2620 = vadd.f32 %v2619, %v2401
  %v2621 = vadd.f32 %v2620, %v2409
  %v2622 = vadd.f32 %v2621, %v2417
  %v2623 = vadd.f32 %v2622, %v2425
  %v2624 = vadd.f32 %v2623, %v2433
  %v2625 = vadd.f32 %v2624, %v2441
  %v2626 = vadd.f32 %v2625, %v2449
  %v2627 = vadd.f32 %v2626, %v2457
  %v2628 = vadd.f32 %v2627, %v2465
  %v2629 = vadd.f32 %v2628, %v2473
  %v2630 = vadd.f32 %v2629, %v2481
  %v2631 = vadd.f32 %v2630, %v2489
  %v2632 = vrot.slane %v2631, 4
  %v2633 = vadd.f32 %v2631, %v2632
  %v2634 = vrot.slane %v2633, 2
  %v2635 = vadd.f32 %v2633, %v2634
  %v2636 = vrot.slane %v2635, 1
  %v2637 = vadd.f32 %v2635, %v2636
  %v2638 = vadd.f32 %v2370, %v2378
  %v2639 = vadd.f32 %v2638, %v2386
  %v2640 = vadd.f32 %v2639, %v2394
  %v2641 = vadd.f32 %v2640, %v2402
  %v2642 = vadd.f32 %v2641, %v2410
  %v2643 = vadd.f32 %v2642, %v2418
  %v2644 = vadd.f32 %v2643, %v2426
  %v2645 = vadd.f32 %v2644, %v2434
  %v2646 = vadd.f32 %v2645, %v2442
  %v2647 = vadd.f32 %v2646, %v2450
  %v2648 = vadd.f32 %v2647, %v2458
  %v2649 = vadd.f32 %v2648, %v2466
  %v2650 = vadd.f32 %v2649, %v2474
  %v2651 = vadd.f32 %v2650, %v2482
  %v2652 = vadd.f32 %v2651, %v2490
  %v2653 = vrot.slane %v2652, 4
  %v2654 = vadd.f32 %v2652, %v2653
  %v2655 = vrot.slane %v2654, 2
  %v2656 = vadd.f32 %v2654, %v2655
  %v2657 = vrot.slane %v2656, 1
  %v2658 = vadd.f32 %v2656, %v2657
  %2659 = vset.pattern.permute.xlu0 1
  %2660 = vperm.xlu0 %2659, %v2267
  %v2661 = vpop.permute.xlu0 %2660
  %2663 = vset.pattern.permute.xlu0 1
  %2664 = vperm.xlu0 %2663, %v2268
  %v2665 = vpop.permute.xlu0 %2664
  %2667 = vset.pattern.permute.xlu0 1
  %2668 = vperm.xlu0 %2667, %v2269
  %v2669 = vpop.permute.xlu0 %2668
  %2671 = vset.pattern.permute.xlu0 1
  %2672 = vperm.xlu0 %2671, %v2270
  %v2673 = vpop.permute.xlu0 %2672
  %2675 = vset.pattern.permute.xlu0 1
  %2676 = vperm.xlu0 %2675, %v2271
  %v2677 = vpop.permute.xlu0 %2676
  %2679 = vset.pattern.permute.xlu0 1
  %2680 = vperm.xlu0 %2679, %v2272
  %v2681 = vpop.permute.xlu0 %2680
  %2683 = vset.pattern.permute.xlu0 1
  %2684 = vperm.xlu0 %2683, %v2273
  %v2685 = vpop.permute.xlu0 %2684
  %2687 = vset.pattern.permute.xlu0 1
  %2688 = vperm.xlu0 %2687, %v2274
  %v2689 = vpop.permute.xlu0 %2688
  %2691 = vset.pattern.permute.xlu0 1
  %2692 = vperm.xlu0 %2691, %v2275
  %v2693 = vpop.permute.xlu0 %2692
  %2695 = vset.pattern.permute.xlu0 1
  %2696 = vperm.xlu0 %2695, %v2276
  %v2697 = vpop.permute.xlu0 %2696
  %2699 = vset.pattern.permute.xlu0 1
  %2700 = vperm.xlu0 %2699, %v2277
  %v2701 = vpop.permute.xlu0 %2700
  %2703 = vset.pattern.permute.xlu0 1
  %2704 = vperm.xlu0 %2703, %v2278
  %v2705 = vpop.permute.xlu0 %2704
  %2707 = vset.pattern.permute.xlu0 1
  %2708 = vperm.xlu0 %2707, %v2279
  %v2709 = vpop.permute.xlu0 %2708
  %2711 = vset.pattern.permute.xlu0 1
  %2712 = vperm.xlu0 %2711, %v2280
  %v2713 = vpop.permute.xlu0 %2712
  %2715 = vset.pattern.permute.xlu0 1
  %2716 = vperm.xlu0 %2715, %v2281
  %v2717 = vpop.permute.xlu0 %2716
  %2719 = vset.pattern.permute.xlu0 1
  %2720 = vperm.xlu0 %2719, %v2282
  %v2721 = vpop.permute.xlu0 %2720
  %v2723 = vmul.f32 %v2661, %v2139
  %v2724 = vmul.f32 %v2661, %v2140
  %v2725 = vmul.f32 %v2661, %v2141
  %v2726 = vmul.f32 %v2661, %v2142
  %v2727 = vmul.f32 %v2661, %v2143
  %v2728 = vmul.f32 %v2661, %v2144
  %v2729 = vmul.f32 %v2661, %v2145
  %v2730 = vmul.f32 %v2661, %v2146
  %v2731 = vmul.f32 %v2665, %v2147
  %v2732 = vmul.f32 %v2665, %v2148
  %v2733 = vmul.f32 %v2665, %v2149
  %v2734 = vmul.f32 %v2665, %v2150
  %v2735 = vmul.f32 %v2665, %v2151
  %v2736 = vmul.f32 %v2665, %v2152
  %v2737 = vmul.f32 %v2665, %v2153
  %v2738 = vmul.f32 %v2665, %v2154
  %v2739 = vmul.f32 %v2669, %v2155
  %v2740 = vmul.f32 %v2669, %v2156
  %v2741 = vmul.f32 %v2669, %v2157
  %v2742 = vmul.f32 %v2669, %v2158
  %v2743 = vmul.f32 %v2669, %v2159
  %v2744 = vmul.f32 %v2669, %v2160
  %v2745 = vmul.f32 %v2669, %v2161
  %v2746 = vmul.f32 %v2669, %v2162
  %v2747 = vmul.f32 %v2673, %v2163
  %v2748 = vmul.f32 %v2673, %v2164
  %v2749 = vmul.f32 %v2673, %v2165
  %v2750 = vmul.f32 %v2673, %v2166
  %v2751 = vmul.f32 %v2673, %v2167
  %v2752 = vmul.f32 %v2673, %v2168
  %v2753 = vmul.f32 %v2673, %v2169
  %v2754 = vmul.f32 %v2673, %v2170
  %v2755 = vmul.f32 %v2677, %v2171
  %v2756 = vmul.f32 %v2677, %v2172
  %v2757 = vmul.f32 %v2677, %v2173
  %v2758 = vmul.f32 %v2677, %v2174
  %v2759 = vmul.f32 %v2677, %v2175
  %v2760 = vmul.f32 %v2677, %v2176
  %v2761 = vmul.f32 %v2677, %v2177
  %v2762 = vmul.f32 %v2677, %v2178
  %v2763 = vmul.f32 %v2681, %v2179
  %v2764 = vmul.f32 %v2681, %v2180
  %v2765 = vmul.f32 %v2681, %v2181
  %v2766 = vmul.f32 %v2681, %v2182
  %v2767 = vmul.f32 %v2681, %v2183
  %v2768 = vmul.f32 %v2681, %v2184
  %v2769 = vmul.f32 %v2681, %v2185
  %v2770 = vmul.f32 %v2681, %v2186
  %v2771 = vmul.f32 %v2685, %v2187
  %v2772 = vmul.f32 %v2685, %v2188
  %v2773 = vmul.f32 %v2685, %v2189
  %v2774 = vmul.f32 %v2685, %v2190
  %v2775 = vmul.f32 %v2685, %v2191
  %v2776 = vmul.f32 %v2685, %v2192
  %v2777 = vmul.f32 %v2685, %v2193
  %v2778 = vmul.f32 %v2685, %v2194
  %v2779 = vmul.f32 %v2689, %v2195
  %v2780 = vmul.f32 %v2689, %v2196
  %v2781 = vmul.f32 %v2689, %v2197
  %v2782 = vmul.f32 %v2689, %v2198
  %v2783 = vmul.f32 %v2689, %v2199
  %v2784 = vmul.f32 %v2689, %v2200
  %v2785 = vmul.f32 %v2689, %v2201
  %v2786 = vmul.f32 %v2689, %v2202
  %v2787 = vmul.f32 %v2693, %v2203
  %v2788 = vmul.f32 %v2693, %v2204
  %v2789 = vmul.f32 %v2693, %v2205
  %v2790 = vmul.f32 %v2693, %v2206
  %v2791 = vmul.f32 %v2693, %v2207
  %v2792 = vmul.f32 %v2693, %v2208
  %v2793 = vmul.f32 %v2693, %v2209
  %v2794 = vmul.f32 %v2693, %v2210
  %v2795 = vmul.f32 %v2697, %v2211
  %v2796 = vmul.f32 %v2697, %v2212
  %v2797 = vmul.f32 %v2697, %v2213
  %v2798 = vmul.f32 %v2697, %v2214
  %v2799 = vmul.f32 %v2697, %v2215
  %v2800 = vmul.f32 %v2697, %v2216
  %v2801 = vmul.f32 %v2697, %v2217
  %v2802 = vmul.f32 %v2697, %v2218
  %v2803 = vmul.f32 %v2701, %v2219
  %v2804 = vmul.f32 %v2701, %v2220
  %v2805 = vmul.f32 %v2701, %v2221
  %v2806 = vmul.f32 %v2701, %v2222
  %v2807 = vmul.f32 %v2701, %v2223
  %v2808 = vmul.f32 %v2701, %v2224
  %v2809 = vmul.f32 %v2701, %v2225
  %v2810 = vmul.f32 %v2701, %v2226
  %v2811 = vmul.f32 %v2705, %v2227
  %v2812 = vmul.f32 %v2705, %v2228
  %v2813 = vmul.f32 %v2705, %v2229
  %v2814 = vmul.f32 %v2705, %v2230
  %v2815 = vmul.f32 %v2705, %v2231
  %v2816 = vmul.f32 %v2705, %v2232
  %v2817 = vmul.f32 %v2705, %v2233
  %v2818 = vmul.f32 %v2705, %v2234
  %v2819 = vmul.f32 %v2709, %v2235
  %v2820 = vmul.f32 %v2709, %v2236
  %v2821 = vmul.f32 %v2709, %v2237
  %v2822 = vmul.f32 %v2709, %v2238
  %v2823 = vmul.f32 %v2709, %v2239
  %v2824 = vmul.f32 %v2709, %v2240
  %v2825 = vmul.f32 %v2709, %v2241
  %v2826 = vmul.f32 %v2709, %v2242
  %v2827 = vmul.f32 %v2713, %v2243
  %v2828 = vmul.f32 %v2713, %v2244
  %v2829 = vmul.f32 %v2713, %v2245
  %v2830 = vmul.f32 %v2713, %v2246
  %v2831 = vmul.f32 %v2713, %v2247
  %v2832 = vmul.f32 %v2713, %v2248
  %v2833 = vmul.f32 %v2713, %v2249
  %v2834 = vmul.f32 %v2713, %v2250
  %v2835 = vmul.f32 %v2717, %v2251
  %v2836 = vmul.f32 %v2717, %v2252
  %v2837 = vmul.f32 %v2717, %v2253
  %v2838 = vmul.f32 %v2717, %v2254
  %v2839 = vmul.f32 %v2717, %v2255
  %v2840 = vmul.f32 %v2717, %v2256
  %v2841 = vmul.f32 %v2717, %v2257
  %v2842 = vmul.f32 %v2717, %v2258
  %v2843 = vmul.f32 %v2721, %v2259
  %v2844 = vmul.f32 %v2721, %v2260
  %v2845 = vmul.f32 %v2721, %v2261
  %v2846 = vmul.f32 %v2721, %v2262
  %v2847 = vmul.f32 %v2721, %v2263
  %v2848 = vmul.f32 %v2721, %v2264
  %v2849 = vmul.f32 %v2721, %v2265
  %v2850 = vmul.f32 %v2721, %v2266
  %v2851 = vadd.f32 %v2723, %v2731
  %v2852 = vadd.f32 %v2851, %v2739
  %v2853 = vadd.f32 %v2852, %v2747
  %v2854 = vadd.f32 %v2853, %v2755
  %v2855 = vadd.f32 %v2854, %v2763
  %v2856 = vadd.f32 %v2855, %v2771
  %v2857 = vadd.f32 %v2856, %v2779
  %v2858 = vadd.f32 %v2857, %v2787
  %v2859 = vadd.f32 %v2858, %v2795
  %v2860 = vadd.f32 %v2859, %v2803
  %v2861 = vadd.f32 %v2860, %v2811
  %v2862 = vadd.f32 %v2861, %v2819
  %v2863 = vadd.f32 %v2862, %v2827
  %v2864 = vadd.f32 %v2863, %v2835
  %v2865 = vadd.f32 %v2864, %v2843
  %v2866 = vrot.slane %v2865, 4
  %v2867 = vadd.f32 %v2865, %v2866
  %v2868 = vrot.slane %v2867, 2
  %v2869 = vadd.f32 %v2867, %v2868
  %v2870 = vrot.slane %v2869, 1
  %v2871 = vadd.f32 %v2869, %v2870
  %v2872 = vadd.f32 %v2724, %v2732
  %v2873 = vadd.f32 %v2872, %v2740
  %v2874 = vadd.f32 %v2873, %v2748
  %v2875 = vadd.f32 %v2874, %v2756
  %v2876 = vadd.f32 %v2875, %v2764
  %v2877 = vadd.f32 %v2876, %v2772
  %v2878 = vadd.f32 %v2877, %v2780
  %v2879 = vadd.f32 %v2878, %v2788
  %v2880 = vadd.f32 %v2879, %v2796
  %v2881 = vadd.f32 %v2880, %v2804
  %v2882 = vadd.f32 %v2881, %v2812
  %v2883 = vadd.f32 %v2882, %v2820
  %v2884 = vadd.f32 %v2883, %v2828
  %v2885 = vadd.f32 %v2884, %v2836
  %v2886 = vadd.f32 %v2885, %v2844
  %v2887 = vrot.slane %v2886, 4
  %v2888 = vadd.f32 %v2886, %v2887
  %v2889 = vrot.slane %v2888, 2
  %v2890 = vadd.f32 %v2888, %v2889
  %v2891 = vrot.slane %v2890, 1
  %v2892 = vadd.f32 %v2890, %v2891
  %v2893 = vadd.f32 %v2725, %v2733
  %v2894 = vadd.f32 %v2893, %v2741
  %v2895 = vadd.f32 %v2894, %v2749
  %v2896 = vadd.f32 %v2895, %v2757
  %v2897 = vadd.f32 %v2896, %v2765
  %v2898 = vadd.f32 %v2897, %v2773
  %v2899 = vadd.f32 %v2898, %v2781
  %v2900 = vadd.f32 %v2899, %v2789
  %v2901 = vadd.f32 %v2900, %v2797
  %v2902 = vadd.f32 %v2901, %v2805
  %v2903 = vadd.f32 %v2902, %v2813
  %v2904 = vadd.f32 %v2903, %v2821
  %v2905 = vadd.f32 %v2904, %v2829
  %v2906 = vadd.f32 %v2905, %v2837
  %v2907 = vadd.f32 %v2906, %v2845
  %v2908 = vrot.slane %v2907, 4
  %v2909 = vadd.f32 %v2907, %v2908
  %v2910 = vrot.slane %v2909, 2
  %v2911 = vadd.f32 %v2909, %v2910
  %v2912 = vrot.slane %v2911, 1
  %v2913 = vadd.f32 %v2911, %v2912
  %v2914 = vadd.f32 %v2726, %v2734
  %v2915 = vadd.f32 %v2914, %v2742
  %v2916 = vadd.f32 %v2915, %v2750
  %v2917 = vadd.f32 %v2916, %v2758
  %v2918 = vadd.f32 %v2917, %v2766
  %v2919 = vadd.f32 %v2918, %v2774
  %v2920 = vadd.f32 %v2919, %v2782
  %v2921 = vadd.f32 %v2920, %v2790
  %v2922 = vadd.f32 %v2921, %v2798
  %v2923 = vadd.f32 %v2922, %v2806
  %v2924 = vadd.f32 %v2923, %v2814
  %v2925 = vadd.f32 %v2924, %v2822
  %v2926 = vadd.f32 %v2925, %v2830
  %v2927 = vadd.f32 %v2926, %v2838
  %v2928 = vadd.f32 %v2927, %v2846
  %v2929 = vrot.slane %v2928, 4
  %v2930 = vadd.f32 %v2928, %v2929
  %v2931 = vrot.slane %v2930, 2
  %v2932 = vadd.f32 %v2930, %v2931
  %v2933 = vrot.slane %v2932, 1
  %v2934 = vadd.f32 %v2932, %v2933
  %v2935 = vadd.f32 %v2727, %v2735
  %v2936 = vadd.f32 %v2935, %v2743
  %v2937 = vadd.f32 %v2936, %v2751
  %v2938 = vadd.f32 %v2937, %v2759
  %v2939 = vadd.f32 %v2938, %v2767
  %v2940 = vadd.f32 %v2939, %v2775
  %v2941 = vadd.f32 %v2940, %v2783
  %v2942 = vadd.f32 %v2941, %v2791
  %v2943 = vadd.f32 %v2942, %v2799
  %v2944 = vadd.f32 %v2943, %v2807
  %v2945 = vadd.f32 %v2944, %v2815
  %v2946 = vadd.f32 %v2945, %v2823
  %v2947 = vadd.f32 %v2946, %v2831
  %v2948 = vadd.f32 %v2947, %v2839
  %v2949 = vadd.f32 %v2948, %v2847
  %v2950 = vrot.slane %v2949, 4
  %v2951 = vadd.f32 %v2949, %v2950
  %v2952 = vrot.slane %v2951, 2
  %v2953 = vadd.f32 %v2951, %v2952
  %v2954 = vrot.slane %v2953, 1
  %v2955 = vadd.f32 %v2953, %v2954
  %v2956 = vadd.f32 %v2728, %v2736
  %v2957 = vadd.f32 %v2956, %v2744
  %v2958 = vadd.f32 %v2957, %v2752
  %v2959 = vadd.f32 %v2958, %v2760
  %v2960 = vadd.f32 %v2959, %v2768
  %v2961 = vadd.f32 %v2960, %v2776
  %v2962 = vadd.f32 %v2961, %v2784
  %v2963 = vadd.f32 %v2962, %v2792
  %v2964 = vadd.f32 %v2963, %v2800
  %v2965 = vadd.f32 %v2964, %v2808
  %v2966 = vadd.f32 %v2965, %v2816
  %v2967 = vadd.f32 %v2966, %v2824
  %v2968 = vadd.f32 %v2967, %v2832
  %v2969 = vadd.f32 %v2968, %v2840
  %v2970 = vadd.f32 %v2969, %v2848
  %v2971 = vrot.slane %v2970, 4
  %v2972 = vadd.f32 %v2970, %v2971
  %v2973 = vrot.slane %v2972, 2
  %v2974 = vadd.f32 %v2972, %v2973
  %v2975 = vrot.slane %v2974, 1
  %v2976 = vadd.f32 %v2974, %v2975
  %v2977 = vadd.f32 %v2729, %v2737
  %v2978 = vadd.f32 %v2977, %v2745
  %v2979 = vadd.f32 %v2978, %v2753
  %v2980 = vadd.f32 %v2979, %v2761
  %v2981 = vadd.f32 %v2980, %v2769
  %v2982 = vadd.f32 %v2981, %v2777
  %v2983 = vadd.f32 %v2982, %v2785
  %v2984 = vadd.f32 %v2983, %v2793
  %v2985 = vadd.f32 %v2984, %v2801
  %v2986 = vadd.f32 %v2985, %v2809
  %v2987 = vadd.f32 %v2986, %v2817
  %v2988 = vadd.f32 %v2987, %v2825
  %v2989 = vadd.f32 %v2988, %v2833
  %v2990 = vadd.f32 %v2989, %v2841
  %v2991 = vadd.f32 %v2990, %v2849
  %v2992 = vrot.slane %v2991, 4
  %v2993 = vadd.f32 %v2991, %v2992
  %v2994 = vrot.slane %v2993, 2
  %v2995 = vadd.f32 %v2993, %v2994
  %v2996 = vrot.slane %v2995, 1
  %v2997 = vadd.f32 %v2995, %v2996
  %v2998 = vadd.f32 %v2730, %v2738
  %v2999 = vadd.f32 %v2998, %v2746
  %v3000 = vadd.f32 %v2999, %v2754
  %v3001 = vadd.f32 %v3000, %v2762
  %v3002 = vadd.f32 %v3001, %v2770
  %v3003 = vadd.f32 %v3002, %v2778
  %v3004 = vadd.f32 %v3003, %v2786
  %v3005 = vadd.f32 %v3004, %v2794
  %v3006 = vadd.f32 %v3005, %v2802
  %v3007 = vadd.f32 %v3006, %v2810
  %v3008 = vadd.f32 %v3007, %v2818
  %v3009 = vadd.f32 %v3008, %v2826
  %v3010 = vadd.f32 %v3009, %v2834
  %v3011 = vadd.f32 %v3010, %v2842
  %v3012 = vadd.f32 %v3011, %v2850
  %v3013 = vrot.slane %v3012, 4
  %v3014 = vadd.f32 %v3012, %v3013
  %v3015 = vrot.slane %v3014, 2
  %v3016 = vadd.f32 %v3014, %v3015
  %v3017 = vrot.slane %v3016, 1
  %v3018 = vadd.f32 %v3016, %v3017
  %3019 = vset.pattern.permute.xlu0 2
  %3020 = vperm.xlu0 %3019, %v2267
  %v3021 = vpop.permute.xlu0 %3020
  %3023 = vset.pattern.permute.xlu0 2
  %3024 = vperm.xlu0 %3023, %v2268
  %v3025 = vpop.permute.xlu0 %3024
  %3027 = vset.pattern.permute.xlu0 2
  %3028 = vperm.xlu0 %3027, %v2269
  %v3029 = vpop.permute.xlu0 %3028
  %3031 = vset.pattern.permute.xlu0 2
  %3032 = vperm.xlu0 %3031, %v2270
  %v3033 = vpop.permute.xlu0 %3032
  %3035 = vset.pattern.permute.xlu0 2
  %3036 = vperm.xlu0 %3035, %v2271
  %v3037 = vpop.permute.xlu0 %3036
  %3039 = vset.pattern.permute.xlu0 2
  %3040 = vperm.xlu0 %3039, %v2272
  %v3041 = vpop.permute.xlu0 %3040
  %3043 = vset.pattern.permute.xlu0 2
  %3044 = vperm.xlu0 %3043, %v2273
  %v3045 = vpop.permute.xlu0 %3044
  %3047 = vset.pattern.permute.xlu0 2
  %3048 = vperm.xlu0 %3047, %v2274
  %v3049 = vpop.permute.xlu0 %3048
  %3051 = vset.pattern.permute.xlu0 2
  %3052 = vperm.xlu0 %3051, %v2275
  %v3053 = vpop.permute.xlu0 %3052
  %3055 = vset.pattern.permute.xlu0 2
  %3056 = vperm.xlu0 %3055, %v2276
  %v3057 = vpop.permute.xlu0 %3056
  %3059 = vset.pattern.permute.xlu0 2
  %3060 = vperm.xlu0 %3059, %v2277
  %v3061 = vpop.permute.xlu0 %3060
  %3063 = vset.pattern.permute.xlu0 2
  %3064 = vperm.xlu0 %3063, %v2278
  %v3065 = vpop.permute.xlu0 %3064
  %3067 = vset.pattern.permute.xlu0 2
  %3068 = vperm.xlu0 %3067, %v2279
  %v3069 = vpop.permute.xlu0 %3068
  %3071 = vset.pattern.permute.xlu0 2
  %3072 = vperm.xlu0 %3071, %v2280
  %v3073 = vpop.permute.xlu0 %3072
  %3075 = vset.pattern.permute.xlu0 2
  %3076 = vperm.xlu0 %3075, %v2281
  %v3077 = vpop.permute.xlu0 %3076
  %3079 = vset.pattern.permute.xlu0 2
  %3080 = vperm.xlu0 %3079, %v2282
  %v3081 = vpop.permute.xlu0 %3080
  %v3083 = vmul.f32 %v3021, %v2139
  %v3084 = vmul.f32 %v3021, %v2140
  %v3085 = vmul.f32 %v3021, %v2141
  %v3086 = vmul.f32 %v3021, %v2142
  %v3087 = vmul.f32 %v3021, %v2143
  %v3088 = vmul.f32 %v3021, %v2144
  %v3089 = vmul.f32 %v3021, %v2145
  %v3090 = vmul.f32 %v3021, %v2146
  %v3091 = vmul.f32 %v3025, %v2147
  %v3092 = vmul.f32 %v3025, %v2148
  %v3093 = vmul.f32 %v3025, %v2149
  %v3094 = vmul.f32 %v3025, %v2150
  %v3095 = vmul.f32 %v3025, %v2151
  %v3096 = vmul.f32 %v3025, %v2152
  %v3097 = vmul.f32 %v3025, %v2153
  %v3098 = vmul.f32 %v3025, %v2154
  %v3099 = vmul.f32 %v3029, %v2155
  %v3100 = vmul.f32 %v3029, %v2156
  %v3101 = vmul.f32 %v3029, %v2157
  %v3102 = vmul.f32 %v3029, %v2158
  %v3103 = vmul.f32 %v3029, %v2159
  %v3104 = vmul.f32 %v3029, %v2160
  %v3105 = vmul.f32 %v3029, %v2161
  %v3106 = vmul.f32 %v3029, %v2162
  %v3107 = vmul.f32 %v3033, %v2163
  %v3108 = vmul.f32 %v3033, %v2164
  %v3109 = vmul.f32 %v3033, %v2165
  %v3110 = vmul.f32 %v3033, %v2166
  %v3111 = vmul.f32 %v3033, %v2167
  %v3112 = vmul.f32 %v3033, %v2168
  %v3113 = vmul.f32 %v3033, %v2169
  %v3114 = vmul.f32 %v3033, %v2170
  %v3115 = vmul.f32 %v3037, %v2171
  %v3116 = vmul.f32 %v3037, %v2172
  %v3117 = vmul.f32 %v3037, %v2173
  %v3118 = vmul.f32 %v3037, %v2174
  %v3119 = vmul.f32 %v3037, %v2175
  %v3120 = vmul.f32 %v3037, %v2176
  %v3121 = vmul.f32 %v3037, %v2177
  %v3122 = vmul.f32 %v3037, %v2178
  %v3123 = vmul.f32 %v3041, %v2179
  %v3124 = vmul.f32 %v3041, %v2180
  %v3125 = vmul.f32 %v3041, %v2181
  %v3126 = vmul.f32 %v3041, %v2182
  %v3127 = vmul.f32 %v3041, %v2183
  %v3128 = vmul.f32 %v3041, %v2184
  %v3129 = vmul.f32 %v3041, %v2185
  %v3130 = vmul.f32 %v3041, %v2186
  %v3131 = vmul.f32 %v3045, %v2187
  %v3132 = vmul.f32 %v3045, %v2188
  %v3133 = vmul.f32 %v3045, %v2189
  %v3134 = vmul.f32 %v3045, %v2190
  %v3135 = vmul.f32 %v3045, %v2191
  %v3136 = vmul.f32 %v3045, %v2192
  %v3137 = vmul.f32 %v3045, %v2193
  %v3138 = vmul.f32 %v3045, %v2194
  %v3139 = vmul.f32 %v3049, %v2195
  %v3140 = vmul.f32 %v3049, %v2196
  %v3141 = vmul.f32 %v3049, %v2197
  %v3142 = vmul.f32 %v3049, %v2198
  %v3143 = vmul.f32 %v3049, %v2199
  %v3144 = vmul.f32 %v3049, %v2200
  %v3145 = vmul.f32 %v3049, %v2201
  %v3146 = vmul.f32 %v3049, %v2202
  %v3147 = vmul.f32 %v3053, %v2203
  %v3148 = vmul.f32 %v3053, %v2204
  %v3149 = vmul.f32 %v3053, %v2205
  %v3150 = vmul.f32 %v3053, %v2206
  %v3151 = vmul.f32 %v3053, %v2207
  %v3152 = vmul.f32 %v3053, %v2208
  %v3153 = vmul.f32 %v3053, %v2209
  %v3154 = vmul.f32 %v3053, %v2210
  %v3155 = vmul.f32 %v3057, %v2211
  %v3156 = vmul.f32 %v3057, %v2212
  %v3157 = vmul.f32 %v3057, %v2213
  %v3158 = vmul.f32 %v3057, %v2214
  %v3159 = vmul.f32 %v3057, %v2215
  %v3160 = vmul.f32 %v3057, %v2216
  %v3161 = vmul.f32 %v3057, %v2217
  %v3162 = vmul.f32 %v3057, %v2218
  %v3163 = vmul.f32 %v3061, %v2219
  %v3164 = vmul.f32 %v3061, %v2220
  %v3165 = vmul.f32 %v3061, %v2221
  %v3166 = vmul.f32 %v3061, %v2222
  %v3167 = vmul.f32 %v3061, %v2223
  %v3168 = vmul.f32 %v3061, %v2224
  %v3169 = vmul.f32 %v3061, %v2225
  %v3170 = vmul.f32 %v3061, %v2226
  %v3171 = vmul.f32 %v3065, %v2227
  %v3172 = vmul.f32 %v3065, %v2228
  %v3173 = vmul.f32 %v3065, %v2229
  %v3174 = vmul.f32 %v3065, %v2230
  %v3175 = vmul.f32 %v3065, %v2231
  %v3176 = vmul.f32 %v3065, %v2232
  %v3177 = vmul.f32 %v3065, %v2233
  %v3178 = vmul.f32 %v3065, %v2234
  %v3179 = vmul.f32 %v3069, %v2235
  %v3180 = vmul.f32 %v3069, %v2236
  %v3181 = vmul.f32 %v3069, %v2237
  %v3182 = vmul.f32 %v3069, %v2238
  %v3183 = vmul.f32 %v3069, %v2239
  %v3184 = vmul.f32 %v3069, %v2240
  %v3185 = vmul.f32 %v3069, %v2241
  %v3186 = vmul.f32 %v3069, %v2242
  %v3187 = vmul.f32 %v3073, %v2243
  %v3188 = vmul.f32 %v3073, %v2244
  %v3189 = vmul.f32 %v3073, %v2245
  %v3190 = vmul.f32 %v3073, %v2246
  %v3191 = vmul.f32 %v3073, %v2247
  %v3192 = vmul.f32 %v3073, %v2248
  %v3193 = vmul.f32 %v3073, %v2249
  %v3194 = vmul.f32 %v3073, %v2250
  %v3195 = vmul.f32 %v3077, %v2251
  %v3196 = vmul.f32 %v3077, %v2252
  %v3197 = vmul.f32 %v3077, %v2253
  %v3198 = vmul.f32 %v3077, %v2254
  %v3199 = vmul.f32 %v3077, %v2255
  %v3200 = vmul.f32 %v3077, %v2256
  %v3201 = vmul.f32 %v3077, %v2257
  %v3202 = vmul.f32 %v3077, %v2258
  %v3203 = vmul.f32 %v3081, %v2259
  %v3204 = vmul.f32 %v3081, %v2260
  %v3205 = vmul.f32 %v3081, %v2261
  %v3206 = vmul.f32 %v3081, %v2262
  %v3207 = vmul.f32 %v3081, %v2263
  %v3208 = vmul.f32 %v3081, %v2264
  %v3209 = vmul.f32 %v3081, %v2265
  %v3210 = vmul.f32 %v3081, %v2266
  %v3211 = vadd.f32 %v3083, %v3091
  %v3212 = vadd.f32 %v3211, %v3099
  %v3213 = vadd.f32 %v3212, %v3107
  %v3214 = vadd.f32 %v3213, %v3115
  %v3215 = vadd.f32 %v3214, %v3123
  %v3216 = vadd.f32 %v3215, %v3131
  %v3217 = vadd.f32 %v3216, %v3139
  %v3218 = vadd.f32 %v3217, %v3147
  %v3219 = vadd.f32 %v3218, %v3155
  %v3220 = vadd.f32 %v3219, %v3163
  %v3221 = vadd.f32 %v3220, %v3171
  %v3222 = vadd.f32 %v3221, %v3179
  %v3223 = vadd.f32 %v3222, %v3187
  %v3224 = vadd.f32 %v3223, %v3195
  %v3225 = vadd.f32 %v3224, %v3203
  %v3226 = vrot.slane %v3225, 4
  %v3227 = vadd.f32 %v3225, %v3226
  %v3228 = vrot.slane %v3227, 2
  %v3229 = vadd.f32 %v3227, %v3228
  %v3230 = vrot.slane %v3229, 1
  %v3231 = vadd.f32 %v3229, %v3230
  %v3232 = vadd.f32 %v3084, %v3092
  %v3233 = vadd.f32 %v3232, %v3100
  %v3234 = vadd.f32 %v3233, %v3108
  %v3235 = vadd.f32 %v3234, %v3116
  %v3236 = vadd.f32 %v3235, %v3124
  %v3237 = vadd.f32 %v3236, %v3132
  %v3238 = vadd.f32 %v3237, %v3140
  %v3239 = vadd.f32 %v3238, %v3148
  %v3240 = vadd.f32 %v3239, %v3156
  %v3241 = vadd.f32 %v3240, %v3164
  %v3242 = vadd.f32 %v3241, %v3172
  %v3243 = vadd.f32 %v3242, %v3180
  %v3244 = vadd.f32 %v3243, %v3188
  %v3245 = vadd.f32 %v3244, %v3196
  %v3246 = vadd.f32 %v3245, %v3204
  %v3247 = vrot.slane %v3246, 4
  %v3248 = vadd.f32 %v3246, %v3247
  %v3249 = vrot.slane %v3248, 2
  %v3250 = vadd.f32 %v3248, %v3249
  %v3251 = vrot.slane %v3250, 1
  %v3252 = vadd.f32 %v3250, %v3251
  %v3253 = vadd.f32 %v3085, %v3093
  %v3254 = vadd.f32 %v3253, %v3101
  %v3255 = vadd.f32 %v3254, %v3109
  %v3256 = vadd.f32 %v3255, %v3117
  %v3257 = vadd.f32 %v3256, %v3125
  %v3258 = vadd.f32 %v3257, %v3133
  %v3259 = vadd.f32 %v3258, %v3141
  %v3260 = vadd.f32 %v3259, %v3149
  %v3261 = vadd.f32 %v3260, %v3157
  %v3262 = vadd.f32 %v3261, %v3165
  %v3263 = vadd.f32 %v3262, %v3173
  %v3264 = vadd.f32 %v3263, %v3181
  %v3265 = vadd.f32 %v3264, %v3189
  %v3266 = vadd.f32 %v3265, %v3197
  %v3267 = vadd.f32 %v3266, %v3205
  %v3268 = vrot.slane %v3267, 4
  %v3269 = vadd.f32 %v3267, %v3268
  %v3270 = vrot.slane %v3269, 2
  %v3271 = vadd.f32 %v3269, %v3270
  %v3272 = vrot.slane %v3271, 1
  %v3273 = vadd.f32 %v3271, %v3272
  %v3274 = vadd.f32 %v3086, %v3094
  %v3275 = vadd.f32 %v3274, %v3102
  %v3276 = vadd.f32 %v3275, %v3110
  %v3277 = vadd.f32 %v3276, %v3118
  %v3278 = vadd.f32 %v3277, %v3126
  %v3279 = vadd.f32 %v3278, %v3134
  %v3280 = vadd.f32 %v3279, %v3142
  %v3281 = vadd.f32 %v3280, %v3150
  %v3282 = vadd.f32 %v3281, %v3158
  %v3283 = vadd.f32 %v3282, %v3166
  %v3284 = vadd.f32 %v3283, %v3174
  %v3285 = vadd.f32 %v3284, %v3182
  %v3286 = vadd.f32 %v3285, %v3190
  %v3287 = vadd.f32 %v3286, %v3198
  %v3288 = vadd.f32 %v3287, %v3206
  %v3289 = vrot.slane %v3288, 4
  %v3290 = vadd.f32 %v3288, %v3289
  %v3291 = vrot.slane %v3290, 2
  %v3292 = vadd.f32 %v3290, %v3291
  %v3293 = vrot.slane %v3292, 1
  %v3294 = vadd.f32 %v3292, %v3293
  %v3295 = vadd.f32 %v3087, %v3095
  %v3296 = vadd.f32 %v3295, %v3103
  %v3297 = vadd.f32 %v3296, %v3111
  %v3298 = vadd.f32 %v3297, %v3119
  %v3299 = vadd.f32 %v3298, %v3127
  %v3300 = vadd.f32 %v3299, %v3135
  %v3301 = vadd.f32 %v3300, %v3143
  %v3302 = vadd.f32 %v3301, %v3151
  %v3303 = vadd.f32 %v3302, %v3159
  %v3304 = vadd.f32 %v3303, %v3167
  %v3305 = vadd.f32 %v3304, %v3175
  %v3306 = vadd.f32 %v3305, %v3183
  %v3307 = vadd.f32 %v3306, %v3191
  %v3308 = vadd.f32 %v3307, %v3199
  %v3309 = vadd.f32 %v3308, %v3207
  %v3310 = vrot.slane %v3309, 4
  %v3311 = vadd.f32 %v3309, %v3310
  %v3312 = vrot.slane %v3311, 2
  %v3313 = vadd.f32 %v3311, %v3312
  %v3314 = vrot.slane %v3313, 1
  %v3315 = vadd.f32 %v3313, %v3314
  %v3316 = vadd.f32 %v3088, %v3096
  %v3317 = vadd.f32 %v3316, %v3104
  %v3318 = vadd.f32 %v3317, %v3112
  %v3319 = vadd.f32 %v3318, %v3120
  %v3320 = vadd.f32 %v3319, %v3128
  %v3321 = vadd.f32 %v3320, %v3136
  %v3322 = vadd.f32 %v3321, %v3144
  %v3323 = vadd.f32 %v3322, %v3152
  %v3324 = vadd.f32 %v3323, %v3160
  %v3325 = vadd.f32 %v3324, %v3168
  %v3326 = vadd.f32 %v3325, %v3176
  %v3327 = vadd.f32 %v3326, %v3184
  %v3328 = vadd.f32 %v3327, %v3192
  %v3329 = vadd.f32 %v3328, %v3200
  %v3330 = vadd.f32 %v3329, %v3208
  %v3331 = vrot.slane %v3330, 4
  %v3332 = vadd.f32 %v3330, %v3331
  %v3333 = vrot.slane %v3332, 2
  %v3334 = vadd.f32 %v3332, %v3333
  %v3335 = vrot.slane %v3334, 1
  %v3336 = vadd.f32 %v3334, %v3335
  %v3337 = vadd.f32 %v3089, %v3097
  %v3338 = vadd.f32 %v3337, %v3105
  %v3339 = vadd.f32 %v3338, %v3113
  %v3340 = vadd.f32 %v3339, %v3121
  %v3341 = vadd.f32 %v3340, %v3129
  %v3342 = vadd.f32 %v3341, %v3137
  %v3343 = vadd.f32 %v3342, %v3145
  %v3344 = vadd.f32 %v3343, %v3153
  %v3345 = vadd.f32 %v3344, %v3161
  %v3346 = vadd.f32 %v3345, %v3169
  %v3347 = vadd.f32 %v3346, %v3177
  %v3348 = vadd.f32 %v3347, %v3185
  %v3349 = vadd.f32 %v3348, %v3193
  %v3350 = vadd.f32 %v3349, %v3201
  %v3351 = vadd.f32 %v3350, %v3209
  %v3352 = vrot.slane %v3351, 4
  %v3353 = vadd.f32 %v3351, %v3352
  %v3354 = vrot.slane %v3353, 2
  %v3355 = vadd.f32 %v3353, %v3354
  %v3356 = vrot.slane %v3355, 1
  %v3357 = vadd.f32 %v3355, %v3356
  %v3358 = vadd.f32 %v3090, %v3098
  %v3359 = vadd.f32 %v3358, %v3106
  %v3360 = vadd.f32 %v3359, %v3114
  %v3361 = vadd.f32 %v3360, %v3122
  %v3362 = vadd.f32 %v3361, %v3130
  %v3363 = vadd.f32 %v3362, %v3138
  %v3364 = vadd.f32 %v3363, %v3146
  %v3365 = vadd.f32 %v3364, %v3154
  %v3366 = vadd.f32 %v3365, %v3162
  %v3367 = vadd.f32 %v3366, %v3170
  %v3368 = vadd.f32 %v3367, %v3178
  %v3369 = vadd.f32 %v3368, %v3186
  %v3370 = vadd.f32 %v3369, %v3194
  %v3371 = vadd.f32 %v3370, %v3202
  %v3372 = vadd.f32 %v3371, %v3210
  %v3373 = vrot.slane %v3372, 4
  %v3374 = vadd.f32 %v3372, %v3373
  %v3375 = vrot.slane %v3374, 2
  %v3376 = vadd.f32 %v3374, %v3375
  %v3377 = vrot.slane %v3376, 1
  %v3378 = vadd.f32 %v3376, %v3377
  %vm3379 = vcmask 1040384
  %v3380 = vsel %vm3379, %v2511, %v2871
  %v3381 = vsel %vm3379, %v2532, %v2892
  %v3382 = vsel %vm3379, %v2553, %v2913
  %v3383 = vsel %vm3379, %v2574, %v2934
  %v3384 = vsel %vm3379, %v2595, %v2955
  %v3385 = vsel %vm3379, %v2616, %v2976
  %v3386 = vsel %vm3379, %v2637, %v2997
  %v3387 = vsel %vm3379, %v2658, %v3018
  %vm3388 = vcmask 1041408
  %v3389 = vsel %vm3388, %v3380, %v3231
  %v3390 = vsel %vm3388, %v3381, %v3252
  %v3391 = vsel %vm3388, %v3382, %v3273
  %v3392 = vsel %vm3388, %v3383, %v3294
  %v3393 = vsel %vm3388, %v3384, %v3315
  %v3394 = vsel %vm3388, %v3385, %v3336
  %v3395 = vsel %vm3388, %v3386, %v3357
  %v3396 = vsel %vm3388, %v3387, %v3378
  %v3397 = vld [vmem:[%s8] sm:$0x7]
  %3399 = vset.pattern.permute.xlu0 0
  %3400 = vperm.xlu0 %3399, %v3397
  %v3401 = vpop.permute.xlu0 %3400
  %v3403 = vadd.f32 %v3389, %v3401
  %v3404 = vadd.f32 %v3390, %v3401
  %v3405 = vadd.f32 %v3391, %v3401
  %v3406 = vadd.f32 %v3392, %v3401
  %v3407 = vadd.f32 %v3393, %v3401
  %v3408 = vadd.f32 %v3394, %v3401
  %v3409 = vadd.f32 %v3395, %v3401
  %v3410 = vadd.f32 %v3396, %v3401
  %v3419 = vrot.slane %v3404, 4
  %v3420 = vrot.slane %v3406, 4
  %v3421 = vrot.slane %v3408, 4
  %v3422 = vrot.slane %v3410, 4
  %vm3423 = vcmask 1043456
  %v3424 = vsel %vm3423, %v3403, %v3419
  %v3425 = vsel %vm3423, %v3405, %v3420
  %v3426 = vsel %vm3423, %v3407, %v3421
  %v3427 = vsel %vm3423, %v3409, %v3422
  %3432 = vst [vmem:[%s9] sm:$0x77] %v3424
  %3433 = vst [vmem:[%s9 + $0x8] sm:$0x77] %v3425
  %3434 = vst [vmem:[%s9 + $0x10] sm:$0x77] %v3426
  %3435 = vst [vmem:[%s9 + $0x18] sm:$0x77] %v3427
  // Predicated region
  $region38: #{mixer_forward.1} parent=0 // pred_check
    _
  $region39: #{mixer_forward.1} parent=0 // pred_check_branch
    %3437 = sbr.rel (0) target = $region41
  $region40: #{mixer_forward.1} parent=0 // pred_region
    _
  $region41: #{mixer_forward.1} parent=0 // pred_fallthru
    _
  // Predicated region
  $region42: #{mixer_forward.1} parent=0 // pred_check
    _
  $region43: #{mixer_forward.1} parent=0 // pred_check_branch
    %3439 = sbr.rel (0) target = $region45
  $region44: #{mixer_forward.1} parent=0 // pred_region
    _
  $region45: #{mixer_forward.1} parent=0 // pred_fallthru
    _

</llo_original>
